<compile_context>
chip_gen: v7x
topology: tpu7x:2x2x1
jax: 0.10.0
libtpu: 0.0.40
codegen_flags: <defaults>
</compile_context>

<pallas_src>
import math
import functools

import jax
import jax.numpy as jnp
from jax import lax
from jax.experimental import pallas as pl
from jax.experimental.pallas import tpu as pltpu

NP_PAD = 128                # padded Cout -> lane-dense GEMM output tiles (= v5e MXU N)
K_ALIGN = 16                # K padded to a bf16-sublane multiple (done once, at init)
M_ALIGN = 16                # M padded to a bf16-sublane multiple (NOT 128)
MXU_DTYPE = jnp.bfloat16    # MXU input dtype; accumulation + epilogue stay f32


def _round_up(x, m):
    return (x + m - 1) // m * m


def _pad_m(m):
    mp = _round_up(m, M_ALIGN)
    if mp >= 256:
        mp = _round_up(mp, 32)      # so mp//2 stays a multiple of 16 (bf16 tiles)
    return mp


def _choose_tm(mp):
    # >= 2 M-blocks when large enough so v7x's two TensorCores both take work;
    # a single full-extent block otherwise (overhead-bound regime).
    if mp >= 256:
        return mp // 2
    return mp


# ---------------------------- Pallas kernels (one GEMM per fused conv group) ----------------------------

def _gemm_bias_kernel(a_ref, w_ref, b_ref, o_ref):
    """ConvLayer2D group: (bf16) GEMM with fused conv-bias epilogue (f32 math)."""
    acc = jnp.dot(a_ref[...], w_ref[...], preferred_element_type=jnp.float32)
    o_ref[...] = (acc + b_ref[...]).astype(o_ref.dtype)


def _gemm_bnrelu_kernel(a_ref, w_ref, s_ref, t_ref, o_ref):
    """Residual conv1: GEMM (bias=False) with fused BN1 + ReLU epilogue."""
    acc = jnp.dot(a_ref[...], w_ref[...], preferred_element_type=jnp.float32)
    o_ref[...] = jnp.maximum(acc * s_ref[...] + t_ref[...], 0.0).astype(o_ref.dtype)


def _gemm_bnaddrelu_kernel(a_ref, r_ref, w_ref, s_ref, t_ref, o_ref):
    """Residual conv2: GEMM (bias=False) with fused BN2 + residual-add + ReLU epilogue."""
    acc = jnp.dot(a_ref[...], w_ref[...], preferred_element_type=jnp.float32)
    acc = acc * s_ref[...] + t_ref[...] + r_ref[...].astype(jnp.float32)
    o_ref[...] = jnp.maximum(acc, 0.0).astype(o_ref.dtype)


# ---------------------------- pallas_call wrapper ----------------------------

def _pallas_gemm(kernel, operands, kp, out_dtype):
    """Single-K-step tiled GEMM, grid over M only.

    operands: list of (array, kind); kind 'A' = (Mp, Kp) bf16 im2col matrix (tiled over
    M), 'R' = (Mp, NP_PAD) residual tiled like the output, 'V' = small full-extent
    operand (weights / per-channel row vectors). First operand must be the 'A' matrix."""
    arrays = [arr for arr, _ in operands]
    mp = arrays[0].shape[0]
    tm = _choose_tm(mp)
    grid = (mp // tm,)

    in_specs = []
    for arr, kind in operands:
        if kind == "A":
            in_specs.append(pl.BlockSpec((tm, kp), lambda i: (i, 0)))
        elif kind == "R":
            in_specs.append(pl.BlockSpec((tm, NP_PAD), lambda i: (i, 0)))
        else:  # "V"
            in_specs.append(pl.BlockSpec(arr.shape, lambda i: (0, 0)))

    in_bytes = sum(int(a.size) * a.dtype.itemsize for a in arrays)
    out_bytes = mp * NP_PAD * jnp.dtype(out_dtype).itemsize
    return pl.pallas_call(
        kernel,
        out_shape=jax.ShapeDtypeStruct((mp, NP_PAD), out_dtype),
        grid=grid,
        in_specs=in_specs,
        out_specs=pl.BlockSpec((tm, NP_PAD), lambda i: (i, 0)),
        compiler_params=pltpu.CompilerParams(
            dimension_semantics=("parallel",)),
        cost_estimate=pl.CostEstimate(flops=2 * mp * kp * NP_PAD,
                                      transcendentals=0,
                                      bytes_accessed=in_bytes + out_bytes),
    )(*arrays)


# ---------------------------- conv glue (NHWC im2col, bf16) ----------------------------

def _im2col_nhwc(x, kh, kw, stride, dilation):
    """x: (N, H, W, C), already spatially padded -> unpadded (M, K) GEMM A-matrix.
    K ordering is (kh, kw, cin), matching the GEMM-ready weight layout."""
    n, h, w, c = x.shape
    sh, sw = stride
    dh, dw = dilation
    ho = (h - (dh * (kh - 1) + 1)) // sh + 1
    wo = (w - (dw * (kw - 1) + 1)) // sw + 1
    taps = []
    for i in range(kh):
        for j in range(kw):
            taps.append(lax.slice(
                x,
                (0, i * dh, j * dw, 0),
                (n, i * dh + (ho - 1) * sh + 1, j * dw + (wo - 1) * sw + 1, c),
                (1, sh, sw, 1)))                          # (N, ho, wo, C)
    a = jnp.stack(taps, axis=3).reshape(n * ho * wo, kh * kw * c)
    return a, ho, wo


def _pad_a(a, kp):
    m, k = a.shape
    mp = _pad_m(m)
    if mp == m and kp == k:
        return a
    return jnp.pad(a, ((0, mp - m), (0, kp - k)))


# ---------------------------- module building blocks ----------------------------

def conv_branch(x, w_mat, bias, bn_list, geoms, out_dtype=MXU_DTYPE):
    """One or more ConvLayer2D (BN(eval) -> ReLU -> Conv2d) sharing the same input,
    fused into a SINGLE Pallas GEMM: per-layer BN+ReLU runs in the XLA im2col producer
    fusion (so zero-padding after BN+ReLU matches PyTorch exactly), the per-layer im2col
    matrices are concatenated along K, and the pre-packed block-diagonal weight places
    each layer's Cout in adjacent output columns (== torch.cat channel order).

    Returns the padded (Mp, 128) GEMM output plus (m, ho, wo) for slicing / reuse."""
    n = x.shape[0]
    a_parts, ho, wo = [], None, None
    for (scale, shift), (kh, kw, stride, padding, dil) in zip(bn_list, geoms):
        xb = jnp.maximum(x.astype(jnp.float32) * scale + shift, 0.0).astype(MXU_DTYPE)
        ph, pw = padding
        if ph or pw:
            xb = jnp.pad(xb, ((0, 0), (ph, ph), (pw, pw), (0, 0)))
        a, ho, wo = _im2col_nhwc(xb, kh, kw, stride, dil)
        a_parts.append(a)
    assert len({p.shape[0] for p in a_parts}) == 1, "fused layers must share output M"
    a = a_parts[0] if len(a_parts) == 1 else jnp.concatenate(a_parts, axis=1)
    kp = w_mat.shape[0]
    m = a.shape[0]
    ap = _pad_a(a, kp)
    outp = _pallas_gemm(_gemm_bias_kernel,
                        [(ap, "A"), (w_mat, "V"), (bias, "V")], kp, out_dtype)
    return outp, (m, ho, wo)


def residual_block(x, p, r_padded=None):
    """ResidualBlock = conv3x3 -> BN -> ReLU -> conv3x3 -> BN -> (+x) -> ReLU.
    Both BNs, the residual add and both ReLUs are fused into the two conv GEMM epilogues.
    If r_padded (the producer's live (Mp,128) padded GEMM output for x) is given, it is
    fed directly as the residual operand — no fresh HBM materialization."""
    n, h, w, c = x.shape
    kp = p["conv1_w"].shape[0]
    x_b = x.astype(MXU_DTYPE)

    a1, ho, wo = _im2col_nhwc(jnp.pad(x_b, ((0, 0), (1, 1), (1, 1), (0, 0))),
                              3, 3, (1, 1), (1, 1))
    m = n * ho * wo
    a1p = _pad_a(a1, kp)
    h1p = _pallas_gemm(
        _gemm_bnrelu_kernel,
        [(a1p, "A"), (p["conv1_w"], "V"), (p["bn1_scale"], "V"), (p["bn1_shift"], "V")],
        kp, MXU_DTYPE)
    h1 = h1p[:m, :c].reshape(n, ho, wo, c)

    a2, _, _ = _im2col_nhwc(jnp.pad(h1, ((0, 0), (1, 1), (1, 1), (0, 0))),
                            3, 3, (1, 1), (1, 1))
    a2p = _pad_a(a2, kp)
    mp = a2p.shape[0]
    if r_padded is not None and r_padded.shape[0] == mp:
        r = r_padded.astype(MXU_DTYPE)
    else:
        r = jnp.pad(x_b.reshape(n * h * w, c), ((0, mp - n * h * w), (0, NP_PAD - c)))
    outp = _pallas_gemm(
        _gemm_bnaddrelu_kernel,
        [(a2p, "A"), (r, "R"), (p["conv2_w"], "V"),
         (p["bn2_scale"], "V"), (p["bn2_shift"], "V")],
        kp, MXU_DTYPE)
    return outp[:n * h * w, :c].reshape(n, h, w, c)


# ---------------------------- config & params ----------------------------

class Config:
    in_channels = 1
    temp_channels = 4
    num_temp_layers = 2
    temporal_kernel = (1, 5)
    temporal_stride = (1, 2)
    temporal_dilation_list = [(1, 1), (1, 2)]
    input_width = 32
    input_height = 16
    out_channels = 8
    num_spatial_layers = 2
    spatial_stride = (2, 1)
    num_residual_blocks = 1
    down_kernel = 3
    down_stride = 2


def _init_conv(key, cout, cin, kh, kw, use_bias=True):
    k_w, k_b = jax.random.split(key)
    fan_in = cin * kh * kw
    w = jax.random.normal(k_w, (cout, cin, kh, kw), jnp.float32) / math.sqrt(fan_in)
    b = (0.01 * jax.random.normal(k_b, (cout,), jnp.float32)) if use_bias \
        else jnp.zeros((cout,), jnp.float32)
    return w, b


def _init_bn(key, c, eps=1e-5):
    k1, k2, k3, k4 = jax.random.split(key, 4)
    gamma = 1.0 + 0.1 * jax.random.normal(k1, (c,), jnp.float32)
    beta = 0.1 * jax.random.normal(k2, (c,), jnp.float32)
    mean = 0.1 * jax.random.normal(k3, (c,), jnp.float32)
    var = 0.5 + jax.random.uniform(k4, (c,), jnp.float32)
    scale = gamma / jnp.sqrt(var + eps)     # eval-mode BN folded into affine
    shift = beta - mean * scale
    return scale, shift


def _prep_conv_weight(w):
    """(Cout,Cin,kh,kw) torch conv weight -> GEMM-ready (Kp, 128) bf16."""
    cout, cin, kh, kw = w.shape
    k = kh * kw * cin
    kp = _round_up(k, K_ALIGN)
    wm = w.transpose(2, 3, 1, 0).reshape(k, cout)            # (kh,kw,cin)-major K order
    return jnp.pad(wm, ((0, kp - k), (0, NP_PAD - cout))).astype(MXU_DTYPE)


def _prep_fused_conv_weights(ws, bs):
    """List of torch conv weights/biases -> ONE block-diagonal (Kp, 128) bf16 weight
    (layer l occupies its own K rows and Cout columns) + ONE (1, 128) f32 bias row.
    Output column order == torch.cat([layer outputs], dim=channel)."""
    blocks, ks, couts = [], [], []
    for w in ws:
        cout, cin, kh, kw = w.shape
        k = kh * kw * cin
        blocks.append(w.transpose(2, 3, 1, 0).reshape(k, cout))
        ks.append(k)
        couts.append(cout)
    kp = _round_up(sum(ks), K_ALIGN)
    wm = jnp.zeros((kp, NP_PAD), jnp.float32)
    bias = jnp.zeros((1, NP_PAD), jnp.float32)
    koff = coff = 0
    for blk, b, k, cout in zip(blocks, bs, ks, couts):
        wm = wm.at[koff:koff + k, coff:coff + cout].set(blk)
        bias = bias.at[0, coff:coff + cout].set(b)
        koff += k
        coff += cout
    return wm.astype(MXU_DTYPE), bias


def _prep_bn_epilogue(scale, shift):
    c = scale.shape[0]
    s = jnp.pad(scale.reshape(1, c), ((0, 0), (0, NP_PAD - c)))
    t = jnp.pad(shift.reshape(1, c), ((0, 0), (0, NP_PAD - c)))
    return s, t


def init_params(key, cfg):
    keys = iter(jax.random.split(key, 64))
    params = {}

    def branch_params(layer_defs):
        """layer_defs: list of (cin, cout, kh, kw) -> fused GEMM weights + per-layer BN."""
        ws, bs, bns = [], [], []
        for (cin, cout, kh, kw) in layer_defs:
            w, b = _init_conv(next(keys), cout, cin, kh, kw)
            s, t = _init_bn(next(keys), cin)
            ws.append(w)
            bs.append(b)
            bns.append((s, t))
        wm, bias = _prep_fused_conv_weights(ws, bs)
        return dict(w_mat=wm, bias=bias, bn=bns)

    # TemporalBlock: all ConvLayer2D(in_channels -> temp_channels) fused
    tkh, tkw = cfg.temporal_kernel
    params["temporal"] = branch_params(
        [(cfg.in_channels, cfg.temp_channels, tkh, tkw)] * cfg.num_temp_layers)

    # SpatialBlock: all ConvLayer2D(temp_channels*num_temp_layers -> out_channels) fused
    spatial_in = cfg.temp_channels * cfg.num_temp_layers
    params["spatial"] = branch_params(
        [(spatial_in, cfg.out_channels, cfg.input_height // (i + 1), 1)
         for i in range(cfg.num_spatial_layers)])

    # Residual blocks: ResidualBlock + downsampling ConvLayer2D
    res_ch = cfg.out_channels * cfg.num_spatial_layers
    params["res_blocks"] = []
    for _ in range(cfg.num_residual_blocks):
        c1w, _ = _init_conv(next(keys), res_ch, res_ch, 3, 3, use_bias=False)
        b1s, b1t = _init_bn(next(keys), res_ch)
        c2w, _ = _init_conv(next(keys), res_ch, res_ch, 3, 3, use_bias=False)
        b2s, b2t = _init_bn(next(keys), res_ch)
        s1, t1 = _prep_bn_epilogue(b1s, b1t)
        s2, t2 = _prep_bn_epilogue(b2s, b2t)
        params["res_blocks"].append(dict(
            res=dict(conv1_w=_prep_conv_weight(c1w), bn1_scale=s1, bn1_shift=t1,
                     conv2_w=_prep_conv_weight(c2w), bn2_scale=s2, bn2_shift=t2),
            down=branch_params([(res_ch, res_ch, cfg.down_kernel, cfg.down_kernel)])))

    # final ConvLayer2D(res_ch -> out_channels)
    params["final"] = branch_params(
        [(res_ch, cfg.out_channels, cfg.down_kernel, cfg.down_kernel)])
    return params


# ---------------------------- full forward ----------------------------

def features_extractor_forward(params, x, cfg):
    """x: (N, in_channels, H, W) NCHW like the PyTorch module; NHWC + bf16 internally."""
    n = x.shape[0]
    out = x.transpose(0, 2, 3, 1)                                # NHWC

    # ---- TemporalBlock: one fused GEMM for all dilation branches ----
    dilations = list(cfg.temporal_dilation_list)
    if len(dilations) < cfg.num_temp_layers:
        dilations += [dilations[-1]] * (cfg.num_temp_layers - len(dilations))
    tkh, tkw = cfg.temporal_kernel
    t_geoms = []
    for i in range(cfg.num_temp_layers):
        d = dilations[i]
        filter_size = tkw * d[1] - 1
        temp_pad = math.floor((filter_size - 1) / 2) - 1 * (d[1] // 2 - 1)
        t_geoms.append((tkh, tkw, cfg.temporal_stride, (0, temp_pad), d))
    pt = params["temporal"]
    outp, (m, ho, wo) = conv_branch(out, pt["w_mat"], pt["bias"], pt["bn"], t_geoms)
    tc = cfg.temp_channels * cfg.num_temp_layers
    out = outp[:m, :tc].reshape(n, ho, wo, tc)

    # ---- SpatialBlock: one fused GEMM for all spatial-kernel branches ----
    s_geoms = []
    for i in range(cfg.num_spatial_layers):
        skh = cfg.input_height // (i + 1)
        s_geoms.append((skh, 1, cfg.spatial_stride, (math.floor((skh - 1) / 2), 0), (1, 1)))
    ps = params["spatial"]
    outp, (m, ho, wo) = conv_branch(out, ps["w_mat"], ps["bias"], ps["bn"], s_geoms)
    sc = cfg.out_channels * cfg.num_spatial_layers
    out_padded = outp                                            # reused as residual operand
    out = outp[:m, :sc].reshape(n, ho, wo, sc)

    # ---- Residual blocks (ResidualBlock + down ConvLayer2D) ----
    down_geom = [(cfg.down_kernel, cfg.down_kernel,
                  (cfg.down_stride, cfg.down_stride), (0, 0), (1, 1))]
    for rb in params["res_blocks"]:
        out = residual_block(out, rb["res"], r_padded=out_padded)
        pd = rb["down"]
        outp, (m, ho, wo) = conv_branch(out, pd["w_mat"], pd["bias"], pd["bn"], down_geom)
        out_padded = outp
        out = outp[:m, :sc].reshape(n, ho, wo, sc)

    # ---- final ConvLayer2D (f32 output) ----
    pf = params["final"]
    f_geom = [(cfg.down_kernel, cfg.down_kernel, (1, 1), (0, 0), (1, 1))]
    outp, (m, ho, wo) = conv_branch(out, pf["w_mat"], pf["bias"], pf["bn"], f_geom,
                                    out_dtype=jnp.float32)
    out = outp[:m, :cfg.out_channels].reshape(n, ho, wo, cfg.out_channels)
    return out.transpose(0, 3, 1, 2)                             # back to NCHW


if __name__ == "__main__":
    cfg = Config()
    key = jax.random.PRNGKey(0)
    k_params, k_x = jax.random.split(key)
    params = init_params(k_params, cfg)

    # EEG-style input: (batch, in_channels, input_height, input_width)
    x = jax.random.normal(
        k_x, (2, cfg.in_channels, cfg.input_height, cfg.input_width), jnp.float32)

    fwd = jax.jit(functools.partial(features_extractor_forward, cfg=cfg))
    out = fwd(params, x)
    jax.block_until_ready(out)

    # (2,1,16,32) -> temporal (2,8,16,16) -> spatial (2,16,8,16)
    #             -> res+down (2,16,3,7) -> final (2,8,1,5)
    assert out.shape == (2, cfg.out_channels, 1, 5), out.shape
    assert out.dtype == jnp.float32
    print("KERNEL_OK")
</pallas_src>

<mosaic_0001>
module attributes {stable_mosaic.version = 11 : i64} {
  func.func @_gemm_bias_kernel(%arg0: i32, %arg1: memref<256x16xbf16, #tpu.memory_space<vmem>>, %arg2: memref<16x128xbf16, #tpu.memory_space<vmem>>, %arg3: memref<1x128xf32, #tpu.memory_space<vmem>>, %arg4: memref<256x128xbf16, #tpu.memory_space<vmem>>) attributes {dimension_semantics = [#tpu.dimension_semantics<parallel>], iteration_bounds = array<i64: 2>, scalar_prefetch = 0 : i64, scratch_operands = 0 : i64, tpu.core_type = #tpu.core_type<tc>, window_params = [{transform_indices = @transform_0, window_bounds = array<i64: 256, 16>}, {pipeline_mode = #tpu.pipeline_mode<synchronous>, transform_indices = @transform_1, window_bounds = array<i64: 16, 128>}, {pipeline_mode = #tpu.pipeline_mode<synchronous>, transform_indices = @transform_2, window_bounds = array<i64: 1, 128>}, {transform_indices = @transform_3, window_bounds = array<i64: 256, 128>}]} {
    %c0 = arith.constant 0 : index
    %c0_0 = arith.constant 0 : index
    %0 = vector.load %arg1[%c0, %c0_0] : memref<256x16xbf16, #tpu.memory_space<vmem>>, vector<256x16xbf16>
    %c0_1 = arith.constant 0 : index
    %c0_2 = arith.constant 0 : index
    %1 = vector.load %arg2[%c0_1, %c0_2] : memref<16x128xbf16, #tpu.memory_space<vmem>>, vector<16x128xbf16>
    %cst = arith.constant dense<0.000000e+00> : vector<256x128xf32>
    %2 = tpu.matmul %0, %1, %cst {dimension_numbers = #tpu.dot_dimension_numbers<[1], [0], [0], [1], [0, 0, 1, 1], [], []>} : vector<256x16xbf16>, vector<16x128xbf16>, vector<256x128xf32> -> vector<256x128xf32>
    %c0_3 = arith.constant 0 : index
    %c0_4 = arith.constant 0 : index
    %3 = vector.load %arg3[%c0_3, %c0_4] : memref<1x128xf32, #tpu.memory_space<vmem>>, vector<1x128xf32>
    %4 = vector.broadcast %3 : vector<1x128xf32> to vector<256x128xf32>
    %5 = arith.addf %2, %4 : vector<256x128xf32>
    %6 = arith.truncf %5 : vector<256x128xf32> to vector<256x128xbf16>
    %c0_5 = arith.constant 0 : index
    %c0_6 = arith.constant 0 : index
    %7 = vector.load %arg4[%c0_5, %c0_6] : memref<256x128xbf16, #tpu.memory_space<vmem>>, vector<256x128xbf16>
    tpu.vector_store %arg4[%c0_5, %c0_6], %6 {strides = array<i32>} : memref<256x128xbf16, #tpu.memory_space<vmem>>, vector<256x128xbf16>,
    return
  }
  func.func @transform_0(%arg0: i32) -> (i32, i32) {
    %c0_i32 = arith.constant 0 : i32
    %c0_i32_0 = arith.constant 0 : i32
    return %arg0, %c0_i32 : i32, i32
  }
  func.func @transform_1(%arg0: i32) -> (i32, i32) {
    %c0_i32 = arith.constant 0 : i32
    %c0_i32_0 = arith.constant 0 : i32
    %c0_i32_1 = arith.constant 0 : i32
    return %c0_i32, %c0_i32_0 : i32, i32
  }
  func.func @transform_2(%arg0: i32) -> (i32, i32) {
    %c0_i32 = arith.constant 0 : i32
    %c0_i32_0 = arith.constant 0 : i32
    %c0_i32_1 = arith.constant 0 : i32
    return %c0_i32, %c0_i32_0 : i32, i32
  }
  func.func @transform_3(%arg0: i32) -> (i32, i32) {
    %c0_i32 = arith.constant 0 : i32
    %c0_i32_0 = arith.constant 0 : i32
    return %arg0, %c0_i32 : i32, i32
  }
}

module attributes {stable_mosaic.version = 11 : i64} {
  func.func @_gemm_bias_kernel(%arg0: i32, %arg1: memref<128x192xbf16, #tpu.memory_space<vmem>>, %arg2: memref<192x128xbf16, #tpu.memory_space<vmem>>, %arg3: memref<1x128xf32, #tpu.memory_space<vmem>>, %arg4: memref<128x128xbf16, #tpu.memory_space<vmem>>) attributes {dimension_semantics = [#tpu.dimension_semantics<parallel>], iteration_bounds = array<i64: 2>, scalar_prefetch = 0 : i64, scratch_operands = 0 : i64, tpu.core_type = #tpu.core_type<tc>, window_params = [{transform_indices = @transform_0, window_bounds = array<i64: 128, 192>}, {pipeline_mode = #tpu.pipeline_mode<synchronous>, transform_indices = @transform_1, window_bounds = array<i64: 192, 128>}, {pipeline_mode = #tpu.pipeline_mode<synchronous>, transform_indices = @transform_2, window_bounds = array<i64: 1, 128>}, {transform_indices = @transform_3, window_bounds = array<i64: 128, 128>}]} {
    %c0 = arith.constant 0 : index
    %c0_0 = arith.constant 0 : index
    %0 = vector.load %arg1[%c0, %c0_0] : memref<128x192xbf16, #tpu.memory_space<vmem>>, vector<128x192xbf16>
    %c0_1 = arith.constant 0 : index
    %c0_2 = arith.constant 0 : index
    %1 = vector.load %arg2[%c0_1, %c0_2] : memref<192x128xbf16, #tpu.memory_space<vmem>>, vector<192x128xbf16>
    %cst = arith.constant dense<0.000000e+00> : vector<128x128xf32>
    %2 = tpu.matmul %0, %1, %cst {dimension_numbers = #tpu.dot_dimension_numbers<[1], [0], [0], [1], [0, 0, 1, 1], [], []>} : vector<128x192xbf16>, vector<192x128xbf16>, vector<128x128xf32> -> vector<128x128xf32>
    %c0_3 = arith.constant 0 : index
    %c0_4 = arith.constant 0 : index
    %3 = vector.load %arg3[%c0_3, %c0_4] : memref<1x128xf32, #tpu.memory_space<vmem>>, vector<1x128xf32>
    %4 = vector.broadcast %3 : vector<1x128xf32> to vector<128x128xf32>
    %5 = arith.addf %2, %4 : vector<128x128xf32>
    %6 = arith.truncf %5 : vector<128x128xf32> to vector<128x128xbf16>
    %c0_5 = arith.constant 0 : index
    %c0_6 = arith.constant 0 : index
    %7 = vector.load %arg4[%c0_5, %c0_6] : memref<128x128xbf16, #tpu.memory_space<vmem>>, vector<128x128xbf16>
    tpu.vector_store %arg4[%c0_5, %c0_6], %6 {strides = array<i32>} : memref<128x128xbf16, #tpu.memory_space<vmem>>, vector<128x128xbf16>,
    return
  }
  func.func @transform_0(%arg0: i32) -> (i32, i32) {
    %c0_i32 = arith.constant 0 : i32
    %c0_i32_0 = arith.constant 0 : i32
    return %arg0, %c0_i32 : i32, i32
  }
  func.func @transform_1(%arg0: i32) -> (i32, i32) {
    %c0_i32 = arith.constant 0 : i32
    %c0_i32_0 = arith.constant 0 : i32
    %c0_i32_1 = arith.constant 0 : i32
    return %c0_i32, %c0_i32_0 : i32, i32
  }
  func.func @transform_2(%arg0: i32) -> (i32, i32) {
    %c0_i32 = arith.constant 0 : i32
    %c0_i32_0 = arith.constant 0 : i32
    %c0_i32_1 = arith.constant 0 : i32
    return %c0_i32, %c0_i32_0 : i32, i32
  }
  func.func @transform_3(%arg0: i32) -> (i32, i32) {
    %c0_i32 = arith.constant 0 : i32
    %c0_i32_0 = arith.constant 0 : i32
    return %arg0, %c0_i32 : i32, i32
  }
}

module attributes {stable_mosaic.version = 11 : i64} {
  func.func @_gemm_bnrelu_kernel(%arg0: i32, %arg1: memref<128x144xbf16, #tpu.memory_space<vmem>>, %arg2: memref<144x128xbf16, #tpu.memory_space<vmem>>, %arg3: memref<1x128xf32, #tpu.memory_space<vmem>>, %arg4: memref<1x128xf32, #tpu.memory_space<vmem>>, %arg5: memref<128x128xbf16, #tpu.memory_space<vmem>>) attributes {dimension_semantics = [#tpu.dimension_semantics<parallel>], iteration_bounds = array<i64: 2>, scalar_prefetch = 0 : i64, scratch_operands = 0 : i64, tpu.core_type = #tpu.core_type<tc>, window_params = [{transform_indices = @transform_0, window_bounds = array<i64: 128, 144>}, {pipeline_mode = #tpu.pipeline_mode<synchronous>, transform_indices = @transform_1, window_bounds = array<i64: 144, 128>}, {pipeline_mode = #tpu.pipeline_mode<synchronous>, transform_indices = @transform_2, window_bounds = array<i64: 1, 128>}, {pipeline_mode = #tpu.pipeline_mode<synchronous>, transform_indices = @transform_3, window_bounds = array<i64: 1, 128>}, {transform_indices = @transform_4, window_bounds = array<i64: 128, 128>}]} {
    %c0 = arith.constant 0 : index
    %c0_0 = arith.constant 0 : index
    %0 = vector.load %arg1[%c0, %c0_0] : memref<128x144xbf16, #tpu.memory_space<vmem>>, vector<128x144xbf16>
    %c0_1 = arith.constant 0 : index
    %c0_2 = arith.constant 0 : index
    %1 = vector.load %arg2[%c0_1, %c0_2] : memref<144x128xbf16, #tpu.memory_space<vmem>>, vector<144x128xbf16>
    %cst = arith.constant dense<0.000000e+00> : vector<128x128xf32>
    %2 = tpu.matmul %0, %1, %cst {dimension_numbers = #tpu.dot_dimension_numbers<[1], [0], [0], [1], [0, 0, 1, 1], [], []>} : vector<128x144xbf16>, vector<144x128xbf16>, vector<128x128xf32> -> vector<128x128xf32>
    %c0_3 = arith.constant 0 : index
    %c0_4 = arith.constant 0 : index
    %3 = vector.load %arg3[%c0_3, %c0_4] : memref<1x128xf32, #tpu.memory_space<vmem>>, vector<1x128xf32>
    %4 = vector.broadcast %3 : vector<1x128xf32> to vector<128x128xf32>
    %5 = arith.mulf %2, %4 : vector<128x128xf32>
    %c0_5 = arith.constant 0 : index
    %c0_6 = arith.constant 0 : index
    %6 = vector.load %arg4[%c0_5, %c0_6] : memref<1x128xf32, #tpu.memory_space<vmem>>, vector<1x128xf32>
    %7 = vector.broadcast %6 : vector<1x128xf32> to vector<128x128xf32>
    %8 = arith.addf %5, %7 : vector<128x128xf32>
    %cst_7 = arith.constant 0.000000e+00 : f32
    %9 = vector.broadcast %cst_7 : f32 to vector<128x128xf32>
    %10 = arith.maximumf %8, %9 : vector<128x128xf32>
    %11 = arith.truncf %10 : vector<128x128xf32> to vector<128x128xbf16>
    %c0_8 = arith.constant 0 : index
    %c0_9 = arith.constant 0 : index
    %12 = vector.load %arg5[%c0_8, %c0_9] : memref<128x128xbf16, #tpu.memory_space<vmem>>, vector<128x128xbf16>
    tpu.vector_store %arg5[%c0_8, %c0_9], %11 {strides = array<i32>} : memref<128x128xbf16, #tpu.memory_space<vmem>>, vector<128x128xbf16>,
    return
  }
  func.func @transform_0(%arg0: i32) -> (i32, i32) {
    %c0_i32 = arith.constant 0 : i32
    %c0_i32_0 = arith.constant 0 : i32
    return %arg0, %c0_i32 : i32, i32
  }
  func.func @transform_1(%arg0: i32) -> (i32, i32) {
    %c0_i32 = arith.constant 0 : i32
    %c0_i32_0 = arith.constant 0 : i32
    %c0_i32_1 = arith.constant 0 : i32
    return %c0_i32, %c0_i32_0 : i32, i32
  }
  func.func @transform_2(%arg0: i32) -> (i32, i32) {
    %c0_i32 = arith.constant 0 : i32
    %c0_i32_0 = arith.constant 0 : i32
    %c0_i32_1 = arith.constant 0 : i32
    return %c0_i32, %c0_i32_0 : i32, i32
  }
  func.func @transform_3(%arg0: i32) -> (i32, i32) {
    %c0_i32 = arith.constant 0 : i32
    %c0_i32_0 = arith.constant 0 : i32
    %c0_i32_1 = arith.constant 0 : i32
    return %c0_i32, %c0_i32_0 : i32, i32
  }
  func.func @transform_4(%arg0: i32) -> (i32, i32) {
    %c0_i32 = arith.constant 0 : i32
    %c0_i32_0 = arith.constant 0 : i32
    return %arg0, %c0_i32 : i32, i32
  }
}

module attributes {stable_mosaic.version = 11 : i64} {
  func.func @_gemm_bnaddrelu_kernel(%arg0: i32, %arg1: memref<128x144xbf16, #tpu.memory_space<vmem>>, %arg2: memref<128x128xbf16, #tpu.memory_space<vmem>>, %arg3: memref<144x128xbf16, #tpu.memory_space<vmem>>, %arg4: memref<1x128xf32, #tpu.memory_space<vmem>>, %arg5: memref<1x128xf32, #tpu.memory_space<vmem>>, %arg6: memref<128x128xbf16, #tpu.memory_space<vmem>>) attributes {dimension_semantics = [#tpu.dimension_semantics<parallel>], iteration_bounds = array<i64: 2>, scalar_prefetch = 0 : i64, scratch_operands = 0 : i64, tpu.core_type = #tpu.core_type<tc>, window_params = [{transform_indices = @transform_0, window_bounds = array<i64: 128, 144>}, {transform_indices = @transform_1, window_bounds = array<i64: 128, 128>}, {pipeline_mode = #tpu.pipeline_mode<synchronous>, transform_indices = @transform_2, window_bounds = array<i64: 144, 128>}, {pipeline_mode = #tpu.pipeline_mode<synchronous>, transform_indices = @transform_3, window_bounds = array<i64: 1, 128>}, {pipeline_mode = #tpu.pipeline_mode<synchronous>, transform_indices = @transform_4, window_bounds = array<i64: 1, 128>}, {transform_indices = @transform_5, window_bounds = array<i64: 128, 128>}]} {
    %c0 = arith.constant 0 : index
    %c0_0 = arith.constant 0 : index
    %0 = vector.load %arg1[%c0, %c0_0] : memref<128x144xbf16, #tpu.memory_space<vmem>>, vector<128x144xbf16>
    %c0_1 = arith.constant 0 : index
    %c0_2 = arith.constant 0 : index
    %1 = vector.load %arg3[%c0_1, %c0_2] : memref<144x128xbf16, #tpu.memory_space<vmem>>, vector<144x128xbf16>
    %cst = arith.constant dense<0.000000e+00> : vector<128x128xf32>
    %2 = tpu.matmul %0, %1, %cst {dimension_numbers = #tpu.dot_dimension_numbers<[1], [0], [0], [1], [0, 0, 1, 1], [], []>} : vector<128x144xbf16>, vector<144x128xbf16>, vector<128x128xf32> -> vector<128x128xf32>
    %c0_3 = arith.constant 0 : index
    %c0_4 = arith.constant 0 : index
    %3 = vector.load %arg4[%c0_3, %c0_4] : memref<1x128xf32, #tpu.memory_space<vmem>>, vector<1x128xf32>
    %4 = vector.broadcast %3 : vector<1x128xf32> to vector<128x128xf32>
    %5 = arith.mulf %2, %4 : vector<128x128xf32>
    %c0_5 = arith.constant 0 : index
    %c0_6 = arith.constant 0 : index
    %6 = vector.load %arg5[%c0_5, %c0_6] : memref<1x128xf32, #tpu.memory_space<vmem>>, vector<1x128xf32>
    %7 = vector.broadcast %6 : vector<1x128xf32> to vector<128x128xf32>
    %8 = arith.addf %5, %7 : vector<128x128xf32>
    %c0_7 = arith.constant 0 : index
    %c0_8 = arith.constant 0 : index
    %9 = vector.load %arg2[%c0_7, %c0_8] : memref<128x128xbf16, #tpu.memory_space<vmem>>, vector<128x128xbf16>
    %10 = arith.extf %9 : vector<128x128xbf16> to vector<128x128xf32>
    %11 = arith.addf %8, %10 : vector<128x128xf32>
    %cst_9 = arith.constant 0.000000e+00 : f32
    %12 = vector.broadcast %cst_9 : f32 to vector<128x128xf32>
    %13 = arith.maximumf %11, %12 : vector<128x128xf32>
    %14 = arith.truncf %13 : vector<128x128xf32> to vector<128x128xbf16>
    %c0_10 = arith.constant 0 : index
    %c0_11 = arith.constant 0 : index
    %15 = vector.load %arg6[%c0_10, %c0_11] : memref<128x128xbf16, #tpu.memory_space<vmem>>, vector<128x128xbf16>
    tpu.vector_store %arg6[%c0_10, %c0_11], %14 {strides = array<i32>} : memref<128x128xbf16, #tpu.memory_space<vmem>>, vector<128x128xbf16>,
    return
  }
  func.func @transform_0(%arg0: i32) -> (i32, i32) {
    %c0_i32 = arith.constant 0 : i32
    %c0_i32_0 = arith.constant 0 : i32
    return %arg0, %c0_i32 : i32, i32
  }
  func.func @transform_1(%arg0: i32) -> (i32, i32) {
    %c0_i32 = arith.constant 0 : i32
    %c0_i32_0 = arith.constant 0 : i32
    return %arg0, %c0_i32 : i32, i32
  }
  func.func @transform_2(%arg0: i32) -> (i32, i32) {
    %c0_i32 = arith.constant 0 : i32
    %c0_i32_0 = arith.constant 0 : i32
    %c0_i32_1 = arith.constant 0 : i32
    return %c0_i32, %c0_i32_0 : i32, i32
  }
  func.func @transform_3(%arg0: i32) -> (i32, i32) {
    %c0_i32 = arith.constant 0 : i32
    %c0_i32_0 = arith.constant 0 : i32
    %c0_i32_1 = arith.constant 0 : i32
    return %c0_i32, %c0_i32_0 : i32, i32
  }
  func.func @transform_4(%arg0: i32) -> (i32, i32) {
    %c0_i32 = arith.constant 0 : i32
    %c0_i32_0 = arith.constant 0 : i32
    %c0_i32_1 = arith.constant 0 : i32
    return %c0_i32, %c0_i32_0 : i32, i32
  }
  func.func @transform_5(%arg0: i32) -> (i32, i32) {
    %c0_i32 = arith.constant 0 : i32
    %c0_i32_0 = arith.constant 0 : i32
    return %arg0, %c0_i32 : i32, i32
  }
}

module attributes {stable_mosaic.version = 11 : i64} {
  func.func @_gemm_bias_kernel(%arg0: i32, %arg1: memref<48x144xbf16, #tpu.memory_space<vmem>>, %arg2: memref<144x128xbf16, #tpu.memory_space<vmem>>, %arg3: memref<1x128xf32, #tpu.memory_space<vmem>>, %arg4: memref<48x128xbf16, #tpu.memory_space<vmem>>) attributes {dimension_semantics = [#tpu.dimension_semantics<parallel>], iteration_bounds = array<i64: 1>, scalar_prefetch = 0 : i64, scratch_operands = 0 : i64, tpu.core_type = #tpu.core_type<tc>, window_params = [{transform_indices = @transform_0, window_bounds = array<i64: 48, 144>}, {pipeline_mode = #tpu.pipeline_mode<synchronous>, transform_indices = @transform_1, window_bounds = array<i64: 144, 128>}, {pipeline_mode = #tpu.pipeline_mode<synchronous>, transform_indices = @transform_2, window_bounds = array<i64: 1, 128>}, {transform_indices = @transform_3, window_bounds = array<i64: 48, 128>}]} {
    %c0 = arith.constant 0 : index
    %c0_0 = arith.constant 0 : index
    %0 = vector.load %arg1[%c0, %c0_0] : memref<48x144xbf16, #tpu.memory_space<vmem>>, vector<48x144xbf16>
    %c0_1 = arith.constant 0 : index
    %c0_2 = arith.constant 0 : index
    %1 = vector.load %arg2[%c0_1, %c0_2] : memref<144x128xbf16, #tpu.memory_space<vmem>>, vector<144x128xbf16>
    %cst = arith.constant dense<0.000000e+00> : vector<48x128xf32>
    %2 = tpu.matmul %0, %1, %cst {dimension_numbers = #tpu.dot_dimension_numbers<[1], [0], [0], [1], [0, 0, 1, 1], [], []>} : vector<48x144xbf16>, vector<144x128xbf16>, vector<48x128xf32> -> vector<48x128xf32>
    %c0_3 = arith.constant 0 : index
    %c0_4 = arith.constant 0 : index
    %3 = vector.load %arg3[%c0_3, %c0_4] : memref<1x128xf32, #tpu.memory_space<vmem>>, vector<1x128xf32>
    %4 = vector.broadcast %3 : vector<1x128xf32> to vector<48x128xf32>
    %5 = arith.addf %2, %4 : vector<48x128xf32>
    %6 = arith.truncf %5 : vector<48x128xf32> to vector<48x128xbf16>
    %c0_5 = arith.constant 0 : index
    %c0_6 = arith.constant 0 : index
    %7 = vector.load %arg4[%c0_5, %c0_6] : memref<48x128xbf16, #tpu.memory_space<vmem>>, vector<48x128xbf16>
    tpu.vector_store %arg4[%c0_5, %c0_6], %6 {strides = array<i32>} : memref<48x128xbf16, #tpu.memory_space<vmem>>, vector<48x128xbf16>,
    return
  }
  func.func @transform_0(%arg0: i32) -> (i32, i32) {
    %c0_i32 = arith.constant 0 : i32
    %c0_i32_0 = arith.constant 0 : i32
    return %arg0, %c0_i32 : i32, i32
  }
  func.func @transform_1(%arg0: i32) -> (i32, i32) {
    %c0_i32 = arith.constant 0 : i32
    %c0_i32_0 = arith.constant 0 : i32
    %c0_i32_1 = arith.constant 0 : i32
    return %c0_i32, %c0_i32_0 : i32, i32
  }
  func.func @transform_2(%arg0: i32) -> (i32, i32) {
    %c0_i32 = arith.constant 0 : i32
    %c0_i32_0 = arith.constant 0 : i32
    %c0_i32_1 = arith.constant 0 : i32
    return %c0_i32, %c0_i32_0 : i32, i32
  }
  func.func @transform_3(%arg0: i32) -> (i32, i32) {
    %c0_i32 = arith.constant 0 : i32
    %c0_i32_0 = arith.constant 0 : i32
    return %arg0, %c0_i32 : i32, i32
  }
}

module attributes {stable_mosaic.version = 11 : i64} {
  func.func @_gemm_bias_kernel(%arg0: i32, %arg1: memref<16x144xbf16, #tpu.memory_space<vmem>>, %arg2: memref<144x128xbf16, #tpu.memory_space<vmem>>, %arg3: memref<1x128xf32, #tpu.memory_space<vmem>>, %arg4: memref<16x128xf32, #tpu.memory_space<vmem>>) attributes {dimension_semantics = [#tpu.dimension_semantics<parallel>], iteration_bounds = array<i64: 1>, scalar_prefetch = 0 : i64, scratch_operands = 0 : i64, tpu.core_type = #tpu.core_type<tc>, window_params = [{transform_indices = @transform_0, window_bounds = array<i64: 16, 144>}, {pipeline_mode = #tpu.pipeline_mode<synchronous>, transform_indices = @transform_1, window_bounds = array<i64: 144, 128>}, {pipeline_mode = #tpu.pipeline_mode<synchronous>, transform_indices = @transform_2, window_bounds = array<i64: 1, 128>}, {transform_indices = @transform_3, window_bounds = array<i64: 16, 128>}]} {
    %c0 = arith.constant 0 : index
    %c0_0 = arith.constant 0 : index
    %0 = vector.load %arg1[%c0, %c0_0] : memref<16x144xbf16, #tpu.memory_space<vmem>>, vector<16x144xbf16>
    %c0_1 = arith.constant 0 : index
    %c0_2 = arith.constant 0 : index
    %1 = vector.load %arg2[%c0_1, %c0_2] : memref<144x128xbf16, #tpu.memory_space<vmem>>, vector<144x128xbf16>
    %cst = arith.constant dense<0.000000e+00> : vector<16x128xf32>
    %2 = tpu.matmul %0, %1, %cst {dimension_numbers = #tpu.dot_dimension_numbers<[1], [0], [0], [1], [0, 0, 1, 1], [], []>} : vector<16x144xbf16>, vector<144x128xbf16>, vector<16x128xf32> -> vector<16x128xf32>
    %c0_3 = arith.constant 0 : index
    %c0_4 = arith.constant 0 : index
    %3 = vector.load %arg3[%c0_3, %c0_4] : memref<1x128xf32, #tpu.memory_space<vmem>>, vector<1x128xf32>
    %4 = vector.broadcast %3 : vector<1x128xf32> to vector<16x128xf32>
    %5 = arith.addf %2, %4 : vector<16x128xf32>
    %c0_5 = arith.constant 0 : index
    %c0_6 = arith.constant 0 : index
    %6 = vector.load %arg4[%c0_5, %c0_6] : memref<16x128xf32, #tpu.memory_space<vmem>>, vector<16x128xf32>
    tpu.vector_store %arg4[%c0_5, %c0_6], %5 {strides = array<i32>} : memref<16x128xf32, #tpu.memory_space<vmem>>, vector<16x128xf32>,
    return
  }
  func.func @transform_0(%arg0: i32) -> (i32, i32) {
    %c0_i32 = arith.constant 0 : i32
    %c0_i32_0 = arith.constant 0 : i32
    return %arg0, %c0_i32 : i32, i32
  }
  func.func @transform_1(%arg0: i32) -> (i32, i32) {
    %c0_i32 = arith.constant 0 : i32
    %c0_i32_0 = arith.constant 0 : i32
    %c0_i32_1 = arith.constant 0 : i32
    return %c0_i32, %c0_i32_0 : i32, i32
  }
  func.func @transform_2(%arg0: i32) -> (i32, i32) {
    %c0_i32 = arith.constant 0 : i32
    %c0_i32_0 = arith.constant 0 : i32
    %c0_i32_1 = arith.constant 0 : i32
    return %c0_i32, %c0_i32_0 : i32, i32
  }
  func.func @transform_3(%arg0: i32) -> (i32, i32) {
    %c0_i32 = arith.constant 0 : i32
    %c0_i32_0 = arith.constant 0 : i32
    return %arg0, %c0_i32 : i32, i32
  }
}

</mosaic_0001>

<llo_original>
// kernel: features_extractor_forward.6
$region0: #{features_extractor_forward.6}
  #allocation0 [shape = 'u32[]', space=smem, size = 0x4, offset = 0x4, fixed_abs, tag = 'smem constant byte address 0x4 - core index']
  #allocation1 [shape = 'u32[144,128]{1,0:T(1,128)}', space=vmem, size = 0x12000, scoped, tag = 'internal scratch']
  %s0 = inlined_call_operand.vmem [shape: bf16[512,16], index: 0, kind: input, shape index: {}]
  %s1 = inlined_call_operand.vmem [shape: bf16[16,128], index: 1, kind: input, shape index: {}]
  %s2 = inlined_call_operand.vmem [shape: f32[1,128], index: 2, kind: input, shape index: {}]
  %s3 = inlined_call_operand.vmem [shape: bf16[512,128], index: 3, kind: output, shape index: {}]
  %s4 = sld [smem:[#allocation0]]
  $region45: #{features_extractor_forward.6} parent=0
    _
  %s6 = ssub.s32 1, %s4
  %s7 = scalar_select 0, %s6, %s4
  loop: start=0, step=1, limit=4
  $region2: #{features_extractor_forward.6} parent=0 // loop_pre_header
    _
  $region3: #{features_extractor_forward.6} parent=0 // loop_header
    %s9 = sphi 0, %s13
    %p10 = scmp.ge.s32.totalorder %s9, 4
    %s19 = sphi 0, %s21
    %s22 = sphi 0, %s19
    %s23 = sphi 0, %s22
    %s39 = sphi 0, %s23
    %s43 = sphi 0, %s43
    %s45 = sphi 0, %s43
    %s46 = sphi 0, %s45
    %s60 = sphi 0, %s46
    %s64 = sphi 0, %s64
    %s66 = sphi 0, %s64
    %s67 = sphi 0, %s66
    %s81 = sphi 0, %s67
    %s87 = sphi 0, %s89
    %s90 = sphi 0, %s87
    %s91 = sphi 0, %s90
    %s107 = sphi 0, %s91
  $region4: #{features_extractor_forward.6} parent=0 // loop_header_branch
    %12 = sbr.rel (%p10) target = $region8
  $region5: #{features_extractor_forward.6} parent=0 // loop_body
    %s14 = ssub.s32 %s9, 1
    %s15 = ssub.s32 %s9, 2
    %s16 = sadd.s32 %s9, 1
    %s17 = ssub.s32 %s9, %s16
    %p18 = scmp.eq.s32.totalorder %s17, 0
    %s20 = sadd.s32 %s19, 1
    %s21 = scalar_select %p18, %s19, %s20
    %p24 = pneg %p18
    %p25 = scmp.eq.s32.totalorder %s9, 1
    %p26 = por %p24, %p25
    %p27 = scmp.ne.s32.totalorder %s19, %s22
    %p28 = scmp.eq.s32.totalorder %s9, 0
    %p29 = por %p27, %p28
    %p30 = scmp.ne.s32.totalorder %s19, %s22
    %p31 = scmp.eq.s32.totalorder %s14, 1
    %p32 = por %p30, %p31
    %p33 = scmp.ne.s32.totalorder %s22, %s23
    %p34 = scmp.eq.s32.totalorder %s14, 0
    %p35 = por %p33, %p34
    %p36 = scmp.ne.s32.totalorder %s22, %s23
    %p37 = scmp.eq.s32.totalorder %s15, 1
    %p38 = por %p36, %p37
    %p40 = scmp.ne.s32.totalorder %s23, %s39
    %p41 = scmp.eq.s32.totalorder %s15, 0
    %p42 = por %p40, %p41
    %s44 = sadd.s32 %s43, 1
    %p47 = scmp.eq.s32.totalorder %s9, 1
    %p48 = scmp.ne.s32.totalorder %s43, %s45
    %p49 = scmp.eq.s32.totalorder %s9, 0
    %p50 = por %p48, %p49
    %p51 = scmp.ne.s32.totalorder %s43, %s45
    %p52 = scmp.eq.s32.totalorder %s14, 1
    %p53 = por %p51, %p52
    %p54 = scmp.ne.s32.totalorder %s45, %s46
    %p55 = scmp.eq.s32.totalorder %s14, 0
    %p56 = por %p54, %p55
    %p57 = scmp.ne.s32.totalorder %s45, %s46
    %p58 = scmp.eq.s32.totalorder %s15, 1
    %p59 = por %p57, %p58
    %p61 = scmp.ne.s32.totalorder %s46, %s60
    %p62 = scmp.eq.s32.totalorder %s15, 0
    %p63 = por %p61, %p62
    %s65 = sadd.s32 %s64, 1
    %p68 = scmp.eq.s32.totalorder %s9, 1
    %p69 = scmp.ne.s32.totalorder %s64, %s66
    %p70 = scmp.eq.s32.totalorder %s9, 0
    %p71 = por %p69, %p70
    %p72 = scmp.ne.s32.totalorder %s64, %s66
    %p73 = scmp.eq.s32.totalorder %s14, 1
    %p74 = por %p72, %p73
    %p75 = scmp.ne.s32.totalorder %s66, %s67
    %p76 = scmp.eq.s32.totalorder %s14, 0
    %p77 = por %p75, %p76
    %p78 = scmp.ne.s32.totalorder %s66, %s67
    %p79 = scmp.eq.s32.totalorder %s15, 1
    %p80 = por %p78, %p79
    %p82 = scmp.ne.s32.totalorder %s67, %s81
    %p83 = scmp.eq.s32.totalorder %s15, 0
    %p84 = por %p82, %p83
    %s85 = ssub.s32 %s9, %s16
    %p86 = scmp.eq.s32.totalorder %s85, 0
    %s88 = sadd.s32 %s87, 1
    %s89 = scalar_select %p86, %s87, %s88
    %p92 = pneg %p86
    %p93 = scmp.eq.s32.totalorder %s9, 1
    %p94 = por %p92, %p93
    %p95 = scmp.ne.s32.totalorder %s87, %s90
    %p96 = scmp.eq.s32.totalorder %s9, 0
    %p97 = por %p95, %p96
    %p98 = scmp.ne.s32.totalorder %s87, %s90
    %p99 = scmp.eq.s32.totalorder %s14, 1
    %p100 = por %p98, %p99
    %p101 = scmp.ne.s32.totalorder %s90, %s91
    %p102 = scmp.eq.s32.totalorder %s14, 0
    %p103 = por %p101, %p102
    %p104 = scmp.ne.s32.totalorder %s90, %s91
    %p105 = scmp.eq.s32.totalorder %s15, 1
    %p106 = por %p104, %p105
    %p108 = scmp.ne.s32.totalorder %s91, %s107
    %p109 = scmp.eq.s32.totalorder %s15, 0
    %p110 = por %p108, %p109
    %p111 = scmp.le.s32.totalorder 1, %s9
    %p112 = scmp.lt.s32.totalorder %s9, 3
    %p113 = pnand %p111, %p112
    %p114 = pneg %p113
    // Predicated region
    $region9: #{features_extractor_forward.6} parent=5 // pred_check
      _
    $region10: #{features_extractor_forward.6} parent=5 // pred_check_branch
      %116 = sbr.rel (%p113) target = $region12
    $region11: #{features_extractor_forward.6} parent=5 // pred_region
      %s117 = ssub.s32 %s9, 1
      // Predicated region
      $region13: #{features_extractor_forward.6} parent=11 // pred_check
        %p118 = pneg %p56
      $region14: #{features_extractor_forward.6} parent=11 // pred_check_branch
        %120 = sbr.rel (%p118) target = $region16
      $region15: #{features_extractor_forward.6} parent=11 // pred_region
        _
      $region16: #{features_extractor_forward.6} parent=11 // pred_fallthru
        _
      // Predicated region
      $region17: #{features_extractor_forward.6} parent=11 // pred_check
        %p121 = pneg %p77
      $region18: #{features_extractor_forward.6} parent=11 // pred_check_branch
        %123 = sbr.rel (%p121) target = $region20
      $region19: #{features_extractor_forward.6} parent=11 // pred_region
        _
      $region20: #{features_extractor_forward.6} parent=11 // pred_fallthru
        _
    $region12: #{features_extractor_forward.6} parent=5 // pred_fallthru
      _
    %p124 = scmp.lt.s32.totalorder %s9, 2
    // Predicated region
    $region21: #{features_extractor_forward.6} parent=5 // pred_check
      %p125 = pneg %p124
    $region22: #{features_extractor_forward.6} parent=5 // pred_check_branch
      %127 = sbr.rel (%p125) target = $region24
    $region23: #{features_extractor_forward.6} parent=5 // pred_region
      // Predicated region
      $region25: #{features_extractor_forward.6} parent=23 // pred_check
        %p128 = pneg %p29
      $region26: #{features_extractor_forward.6} parent=23 // pred_check_branch
        %130 = sbr.rel (%p128) target = $region28
      $region27: #{features_extractor_forward.6} parent=23 // pred_region
        %s131 = smul.u32 32, %s9
        %p132 = scmp.lt.s32.totalorder %s131, 63
        %s133 = scalar_select %p132, %s131, 63
        %s134 = smul.addr %s133, 4
        %s135 = scalar_lea.vmem %s0, %s134
        %s136 = smul.u32 32, %s9
      $region28: #{features_extractor_forward.6} parent=23 // pred_fallthru
        _
    $region24: #{features_extractor_forward.6} parent=5 // pred_fallthru
      _
    %p137 = scmp.le.s32.totalorder 1, %s9
    %p138 = scmp.lt.s32.totalorder %s9, 3
    %p139 = pnand %p137, %p138
    %p140 = pneg %p139
    // Predicated region
    $region29: #{features_extractor_forward.6} parent=5 // pred_check
      _
    $region30: #{features_extractor_forward.6} parent=5 // pred_check_branch
      %142 = sbr.rel (%p139) target = $region32
    $region31: #{features_extractor_forward.6} parent=5 // pred_region
      %s143 = ssub.s32 %s9, 1
      %s144 = smul.u32 32, %s14
      %p145 = scmp.lt.s32.totalorder %s144, 63
      %s146 = scalar_select %p145, %s144, 63
      %s147 = smul.addr %s146, 4
      %s148 = scalar_lea.vmem %s0, %s147
      %p149 = pneg %p35
      %p150 = pneg %p32
      %p151 = pneg %p56
      %p152 = pneg %p53
      %p153 = pneg %p77
      %p154 = pneg %p74
      %p155 = pneg %p103
      %p156 = pneg %p100
      %s157 = smul.u32 32, %s14
      %p158 = scmp.lt.s32.totalorder %s157, 63
      %s159 = scalar_select %p158, %s157, 63
      %s160 = smul.addr %s159, 4
      %s161 = scalar_lea.vmem %s3, %s160
      %s162 = smul.u32 32, %s14
      %p163 = scmp.lt.s32.totalorder %s162, 63
      %s164 = scalar_select %p163, %s162, 63
      %s165 = smul.addr %s164, 4
      %s166 = scalar_lea.vmem %s0, %s165
      %s167 = smul.u32 32, %s14
      %s168 = smul.u32 32, %s14
      %p169 = scmp.lt.s32.totalorder %s168, 63
      %s170 = scalar_select %p169, %s168, 63
      %s171 = smul.addr %s170, 4
      %s172 = scalar_lea.vmem %s3, %s171
      %s173 = smul.u32 32, %s14
      %v175 = vld [vmem:[%s166] sm:$0xf]
      %v176 = vld [vmem:[%s166 + $0x4] sm:$0xf]
      %v177 = vld [vmem:[%s166 + $0x8] sm:$0xf]
      %v178 = vld [vmem:[%s166 + $0xc] sm:$0xf]
      %v179 = vld [vmem:[%s166 + $0x10] sm:$0xf]
      %v180 = vld [vmem:[%s166 + $0x14] sm:$0xf]
      %v181 = vld [vmem:[%s166 + $0x18] sm:$0xf]
      %v182 = vld [vmem:[%s166 + $0x1c] sm:$0xf]
      %v183 = vld [vmem:[%s166 + $0x20] sm:$0xf]
      %v184 = vld [vmem:[%s166 + $0x24] sm:$0xf]
      %v185 = vld [vmem:[%s166 + $0x28] sm:$0xf]
      %v186 = vld [vmem:[%s166 + $0x2c] sm:$0xf]
      %v187 = vld [vmem:[%s166 + $0x30] sm:$0xf]
      %v188 = vld [vmem:[%s166 + $0x34] sm:$0xf]
      %v189 = vld [vmem:[%s166 + $0x38] sm:$0xf]
      %v190 = vld [vmem:[%s166 + $0x3c] sm:$0xf]
      %v191 = vld [vmem:[%s166 + $0x40] sm:$0xf]
      %v192 = vld [vmem:[%s166 + $0x44] sm:$0xf]
      %v193 = vld [vmem:[%s166 + $0x48] sm:$0xf]
      %v194 = vld [vmem:[%s166 + $0x4c] sm:$0xf]
      %v195 = vld [vmem:[%s166 + $0x50] sm:$0xf]
      %v196 = vld [vmem:[%s166 + $0x54] sm:$0xf]
      %v197 = vld [vmem:[%s166 + $0x58] sm:$0xf]
      %v198 = vld [vmem:[%s166 + $0x5c] sm:$0xf]
      %v199 = vld [vmem:[%s166 + $0x60] sm:$0xf]
      %v200 = vld [vmem:[%s166 + $0x64] sm:$0xf]
      %v201 = vld [vmem:[%s166 + $0x68] sm:$0xf]
      %v202 = vld [vmem:[%s166 + $0x6c] sm:$0xf]
      %v203 = vld [vmem:[%s166 + $0x70] sm:$0xf]
      %v204 = vld [vmem:[%s166 + $0x74] sm:$0xf]
      %v205 = vld [vmem:[%s166 + $0x78] sm:$0xf]
      %v206 = vld [vmem:[%s166 + $0x7c] sm:$0xf]
      %v207 = vld [vmem:[%s1] sm:$0xf]
      %v208 = vld [vmem:[%s1 + $0x4] sm:$0xf]
      %v209 = vld [vmem:[%s2] sm:$0x1]
      %v211 = vlaneseq
      %v212 = vshrl.u32 %v211, 7
      %v213 = vsub.s32 0, %v212
      %v214 = vrot.slane %v209, %v213
      %v248 = vunpack.c.l.b16 %v175
      %v249 = vunpack.c.l.b16 %v176
      %v250 = vunpack.c.l.b16 %v177
      %v251 = vunpack.c.l.b16 %v178
      %v252 = vunpack.c.l.b16 %v179
      %v253 = vunpack.c.l.b16 %v180
      %v254 = vunpack.c.l.b16 %v181
      %v255 = vunpack.c.l.b16 %v182
      %v256 = vunpack.c.l.b16 %v183
      %v257 = vunpack.c.l.b16 %v184
      %v258 = vunpack.c.l.b16 %v185
      %v259 = vunpack.c.l.b16 %v186
      %v260 = vunpack.c.l.b16 %v187
      %v261 = vunpack.c.l.b16 %v188
      %v262 = vunpack.c.l.b16 %v189
      %v263 = vunpack.c.l.b16 %v190
      %v264 = vunpack.c.l.b16 %v191
      %v265 = vunpack.c.l.b16 %v192
      %v266 = vunpack.c.l.b16 %v193
      %v267 = vunpack.c.l.b16 %v194
      %v268 = vunpack.c.l.b16 %v195
      %v269 = vunpack.c.l.b16 %v196
      %v270 = vunpack.c.l.b16 %v197
      %v271 = vunpack.c.l.b16 %v198
      %v272 = vunpack.c.l.b16 %v199
      %v273 = vunpack.c.l.b16 %v200
      %v274 = vunpack.c.l.b16 %v201
      %v275 = vunpack.c.l.b16 %v202
      %v276 = vunpack.c.l.b16 %v203
      %v277 = vunpack.c.l.b16 %v204
      %v278 = vunpack.c.l.b16 %v205
      %v279 = vunpack.c.l.b16 %v206
      %v280 = vpack.c.b16 %v249, %v248
      %v281 = vpack.c.b16 %v251, %v250
      %v282 = vpack.c.b16 %v253, %v252
      %v283 = vpack.c.b16 %v255, %v254
      %v284 = vpack.c.b16 %v257, %v256
      %v285 = vpack.c.b16 %v259, %v258
      %v286 = vpack.c.b16 %v261, %v260
      %v287 = vpack.c.b16 %v263, %v262
      %v288 = vpack.c.b16 %v265, %v264
      %v289 = vpack.c.b16 %v267, %v266
      %v290 = vpack.c.b16 %v269, %v268
      %v291 = vpack.c.b16 %v271, %v270
      %v292 = vpack.c.b16 %v273, %v272
      %v293 = vpack.c.b16 %v275, %v274
      %v294 = vpack.c.b16 %v277, %v276
      %v295 = vpack.c.b16 %v279, %v278
      %v298 = vunpack.c.l.b16 %v207
      %v299 = vunpack.c.l.b16 %v208
      %v300 = vpack.c.b16 %v299, %v298
      %vm302 = vcmask 130048
      %v304 = vsel %vm302, %v280, 0
      %v307 = vsel %vm302, %v281, 0
      %v310 = vsel %vm302, %v282, 0
      %v313 = vsel %vm302, %v283, 0
      %v316 = vsel %vm302, %v284, 0
      %v319 = vsel %vm302, %v285, 0
      %v322 = vsel %vm302, %v286, 0
      %v325 = vsel %vm302, %v287, 0
      %v328 = vsel %vm302, %v288, 0
      %v331 = vsel %vm302, %v289, 0
      %v334 = vsel %vm302, %v290, 0
      %v337 = vsel %vm302, %v291, 0
      %v340 = vsel %vm302, %v292, 0
      %v343 = vsel %vm302, %v293, 0
      %v346 = vsel %vm302, %v294, 0
      %v349 = vsel %vm302, %v295, 0
      %351 = vmatprep.subr.bf16.mxu0 0
      %352 = vmatpush1.bf16.msra.mxu0 %v300
      %353 = vmatprep.subr.bf16.mxu0 0
      %354 = vmatpush1.bf16.msra.mxu0 0
      %355 = vmatprep.subr.bf16.mxu0 0
      %356 = vmatpush1.bf16.msra.mxu0 0
      %357 = vmatprep.subr.bf16.mxu0 0
      %358 = vmatpush1.bf16.msra.mxu0 0
      %359 = vmatprep.subr.bf16.mxu0 0
      %360 = vmatpush1.bf16.msra.mxu0 0
      %361 = vmatprep.subr.bf16.mxu0 0
      %362 = vmatpush1.bf16.msra.mxu0 0
      %363 = vmatprep.subr.bf16.mxu0 0
      %364 = vmatpush1.bf16.msra.mxu0 0
      %365 = vmatprep.subr.bf16.mxu0 0
      %366 = vmatpush1.bf16.msra.mxu0 0
      %367 = vmatprep.subr.bf16.mxu0 0
      %368 = vmatpush1.bf16.msra.mxu0 0
      %369 = vmatprep.subr.bf16.mxu0 0
      %370 = vmatpush1.bf16.msra.mxu0 0
      %371 = vmatprep.subr.bf16.mxu0 0
      %372 = vmatpush1.bf16.msra.mxu0 0
      %373 = vmatprep.subr.bf16.mxu0 0
      %374 = vmatpush1.bf16.msra.mxu0 0
      %375 = vmatprep.subr.bf16.mxu0 0
      %376 = vmatpush1.bf16.msra.mxu0 0
      %377 = vmatprep.subr.bf16.mxu0 0
      %378 = vmatpush1.bf16.msra.mxu0 0
      %379 = vmatprep.subr.bf16.mxu0 0
      %380 = vmatpush1.bf16.msra.mxu0 0
      %381 = vmatprep.subr.bf16.mxu0 0
      %382 = vmatpush1.bf16.msra.mxu0 0
      %383 = vmatprep.mubr.bf16.mxu0 0
      %384 = vmatmul.mubr.bf16.gmra.mrb[0].mxu0 %v304
      %v385 = vpop.f32.mrb[0].mxu0
      %v386 = vadd.f32 %v214, %v385
      %v387 = vpop.f32.mrb[0].mxu0
      %v388 = vpop.f32.mrb[0].mxu0
      %v389 = vadd.f32 %v214, %v388
      %v390 = vpop.f32.mrb[0].mxu0
      %391 = vmatprep.mubr.bf16.mxu0 0
      %392 = vmatmul.mubr.bf16.gmra.mrb[0].mxu0 %v307
      %v393 = vpop.f32.mrb[0].mxu0
      %v394 = vadd.f32 %v214, %v393
      %v395 = vpop.f32.mrb[0].mxu0
      %v396 = vpop.f32.mrb[0].mxu0
      %v397 = vadd.f32 %v214, %v396
      %v398 = vpop.f32.mrb[0].mxu0
      %399 = vmatprep.mubr.bf16.mxu0 0
      %400 = vmatmul.mubr.bf16.gmra.mrb[0].mxu0 %v310
      %v401 = vpop.f32.mrb[0].mxu0
      %v402 = vadd.f32 %v214, %v401
      %v403 = vpop.f32.mrb[0].mxu0
      %v404 = vpop.f32.mrb[0].mxu0
      %v405 = vadd.f32 %v214, %v404
      %v406 = vpop.f32.mrb[0].mxu0
      %407 = vmatprep.mubr.bf16.mxu0 0
      %408 = vmatmul.mubr.bf16.gmra.mrb[0].mxu0 %v313
      %v409 = vpop.f32.mrb[0].mxu0
      %v410 = vadd.f32 %v214, %v409
      %v411 = vpop.f32.mrb[0].mxu0
      %v412 = vpop.f32.mrb[0].mxu0
      %v413 = vadd.f32 %v214, %v412
      %v414 = vpop.f32.mrb[0].mxu0
      %415 = vmatprep.mubr.bf16.mxu0 0
      %416 = vmatmul.mubr.bf16.gmra.mrb[0].mxu0 %v316
      %v417 = vpop.f32.mrb[0].mxu0
      %v418 = vadd.f32 %v214, %v417
      %v419 = vpop.f32.mrb[0].mxu0
      %v420 = vpop.f32.mrb[0].mxu0
      %v421 = vadd.f32 %v214, %v420
      %v422 = vpop.f32.mrb[0].mxu0
      %423 = vmatprep.mubr.bf16.mxu0 0
      %424 = vmatmul.mubr.bf16.gmra.mrb[0].mxu0 %v319
      %v425 = vpop.f32.mrb[0].mxu0
      %v426 = vadd.f32 %v214, %v425
      %v427 = vpop.f32.mrb[0].mxu0
      %v428 = vpop.f32.mrb[0].mxu0
      %v429 = vadd.f32 %v214, %v428
      %v430 = vpop.f32.mrb[0].mxu0
      %431 = vmatprep.mubr.bf16.mxu0 0
      %432 = vmatmul.mubr.bf16.gmra.mrb[0].mxu0 %v322
      %v433 = vpop.f32.mrb[0].mxu0
      %v434 = vadd.f32 %v214, %v433
      %v435 = vpop.f32.mrb[0].mxu0
      %v436 = vpop.f32.mrb[0].mxu0
      %v437 = vadd.f32 %v214, %v436
      %v438 = vpop.f32.mrb[0].mxu0
      %439 = vmatprep.mubr.bf16.mxu0 0
      %440 = vmatmul.mubr.bf16.gmra.mrb[0].mxu0 %v325
      %v441 = vpop.f32.mrb[0].mxu0
      %v442 = vadd.f32 %v214, %v441
      %v443 = vpop.f32.mrb[0].mxu0
      %v444 = vpop.f32.mrb[0].mxu0
      %v445 = vadd.f32 %v214, %v444
      %v446 = vpop.f32.mrb[0].mxu0
      %447 = vmatprep.mubr.bf16.mxu0 0
      %448 = vmatmul.mubr.bf16.gmra.mrb[0].mxu0 %v328
      %v449 = vpop.f32.mrb[0].mxu0
      %v450 = vadd.f32 %v214, %v449
      %v451 = vpop.f32.mrb[0].mxu0
      %v452 = vpop.f32.mrb[0].mxu0
      %v453 = vadd.f32 %v214, %v452
      %v454 = vpop.f32.mrb[0].mxu0
      %455 = vmatprep.mubr.bf16.mxu0 0
      %456 = vmatmul.mubr.bf16.gmra.mrb[0].mxu0 %v331
      %v457 = vpop.f32.mrb[0].mxu0
      %v458 = vadd.f32 %v214, %v457
      %v459 = vpop.f32.mrb[0].mxu0
      %v460 = vpop.f32.mrb[0].mxu0
      %v461 = vadd.f32 %v214, %v460
      %v462 = vpop.f32.mrb[0].mxu0
      %463 = vmatprep.mubr.bf16.mxu0 0
      %464 = vmatmul.mubr.bf16.gmra.mrb[0].mxu0 %v334
      %v465 = vpop.f32.mrb[0].mxu0
      %v466 = vadd.f32 %v214, %v465
      %v467 = vpop.f32.mrb[0].mxu0
      %v468 = vpop.f32.mrb[0].mxu0
      %v469 = vadd.f32 %v214, %v468
      %v470 = vpop.f32.mrb[0].mxu0
      %471 = vmatprep.mubr.bf16.mxu0 0
      %472 = vmatmul.mubr.bf16.gmra.mrb[0].mxu0 %v337
      %v473 = vpop.f32.mrb[0].mxu0
      %v474 = vadd.f32 %v214, %v473
      %v475 = vpop.f32.mrb[0].mxu0
      %v476 = vpop.f32.mrb[0].mxu0
      %v477 = vadd.f32 %v214, %v476
      %v478 = vpop.f32.mrb[0].mxu0
      %479 = vmatprep.mubr.bf16.mxu0 0
      %480 = vmatmul.mubr.bf16.gmra.mrb[0].mxu0 %v340
      %v481 = vpop.f32.mrb[0].mxu0
      %v482 = vadd.f32 %v214, %v481
      %v483 = vpop.f32.mrb[0].mxu0
      %v484 = vpop.f32.mrb[0].mxu0
      %v485 = vadd.f32 %v214, %v484
      %v486 = vpop.f32.mrb[0].mxu0
      %487 = vmatprep.mubr.bf16.mxu0 0
      %488 = vmatmul.mubr.bf16.gmra.mrb[0].mxu0 %v343
      %v489 = vpop.f32.mrb[0].mxu0
      %v490 = vadd.f32 %v214, %v489
      %v491 = vpop.f32.mrb[0].mxu0
      %v492 = vpop.f32.mrb[0].mxu0
      %v493 = vadd.f32 %v214, %v492
      %v494 = vpop.f32.mrb[0].mxu0
      %495 = vmatprep.mubr.bf16.mxu0 0
      %496 = vmatmul.mubr.bf16.gmra.mrb[0].mxu0 %v346
      %v497 = vpop.f32.mrb[0].mxu0
      %v498 = vadd.f32 %v214, %v497
      %v499 = vpop.f32.mrb[0].mxu0
      %v500 = vpop.f32.mrb[0].mxu0
      %v501 = vadd.f32 %v214, %v500
      %v502 = vpop.f32.mrb[0].mxu0
      %503 = vmatprep.mubr.bf16.mxu0 0
      %504 = vmatmul.mubr.bf16.gmra.mrb[0].mxu0 %v349
      %v505 = vpop.f32.mrb[0].mxu0
      %v506 = vadd.f32 %v214, %v505
      %v507 = vpop.f32.mrb[0].mxu0
      %v508 = vpop.f32.mrb[0].mxu0
      %v509 = vadd.f32 %v214, %v508
      %v510 = vpop.f32.mrb[0].mxu0
      %511 = vdwg.mxu0
      %v512 = vpack.c.bf16 %v389, %v386
      %v513 = vpack.c.bf16 %v397, %v394
      %v514 = vpack.c.bf16 %v405, %v402
      %v515 = vpack.c.bf16 %v413, %v410
      %v516 = vpack.c.bf16 %v421, %v418
      %v517 = vpack.c.bf16 %v429, %v426
      %v518 = vpack.c.bf16 %v437, %v434
      %v519 = vpack.c.bf16 %v445, %v442
      %v520 = vpack.c.bf16 %v453, %v450
      %v521 = vpack.c.bf16 %v461, %v458
      %v522 = vpack.c.bf16 %v469, %v466
      %v523 = vpack.c.bf16 %v477, %v474
      %v524 = vpack.c.bf16 %v485, %v482
      %v525 = vpack.c.bf16 %v493, %v490
      %v526 = vpack.c.bf16 %v501, %v498
      %v527 = vpack.c.bf16 %v509, %v506
      %v544 = vunpack.c.l.b16 %v512
      %v545 = vunpack.c.h.b16 %v512
      %v546 = vunpack.c.l.b16 %v513
      %v547 = vunpack.c.h.b16 %v513
      %v548 = vunpack.c.l.b16 %v514
      %v549 = vunpack.c.h.b16 %v514
      %v550 = vunpack.c.l.b16 %v515
      %v551 = vunpack.c.h.b16 %v515
      %v552 = vunpack.c.l.b16 %v516
      %v553 = vunpack.c.h.b16 %v516
      %v554 = vunpack.c.l.b16 %v517
      %v555 = vunpack.c.h.b16 %v517
      %v556 = vunpack.c.l.b16 %v518
      %v557 = vunpack.c.h.b16 %v518
      %v558 = vunpack.c.l.b16 %v519
      %v559 = vunpack.c.h.b16 %v519
      %v560 = vunpack.c.l.b16 %v520
      %v561 = vunpack.c.h.b16 %v520
      %v562 = vunpack.c.l.b16 %v521
      %v563 = vunpack.c.h.b16 %v521
      %v564 = vunpack.c.l.b16 %v522
      %v565 = vunpack.c.h.b16 %v522
      %v566 = vunpack.c.l.b16 %v523
      %v567 = vunpack.c.h.b16 %v523
      %v568 = vunpack.c.l.b16 %v524
      %v569 = vunpack.c.h.b16 %v524
      %v570 = vunpack.c.l.b16 %v525
      %v571 = vunpack.c.h.b16 %v525
      %v572 = vunpack.c.l.b16 %v526
      %v573 = vunpack.c.h.b16 %v526
      %v574 = vunpack.c.l.b16 %v527
      %v575 = vunpack.c.h.b16 %v527
      %v576 = vpack.c.b16 %v544, %v544
      %v577 = vpack.c.b16 %v545, %v545
      %v578 = vpack.c.b16 %v546, %v546
      %v579 = vpack.c.b16 %v547, %v547
      %v580 = vpack.c.b16 %v548, %v548
      %v581 = vpack.c.b16 %v549, %v549
      %v582 = vpack.c.b16 %v550, %v550
      %v583 = vpack.c.b16 %v551, %v551
      %v584 = vpack.c.b16 %v552, %v552
      %v585 = vpack.c.b16 %v553, %v553
      %v586 = vpack.c.b16 %v554, %v554
      %v587 = vpack.c.b16 %v555, %v555
      %v588 = vpack.c.b16 %v556, %v556
      %v589 = vpack.c.b16 %v557, %v557
      %v590 = vpack.c.b16 %v558, %v558
      %v591 = vpack.c.b16 %v559, %v559
      %v592 = vpack.c.b16 %v560, %v560
      %v593 = vpack.c.b16 %v561, %v561
      %v594 = vpack.c.b16 %v562, %v562
      %v595 = vpack.c.b16 %v563, %v563
      %v596 = vpack.c.b16 %v564, %v564
      %v597 = vpack.c.b16 %v565, %v565
      %v598 = vpack.c.b16 %v566, %v566
      %v599 = vpack.c.b16 %v567, %v567
      %v600 = vpack.c.b16 %v568, %v568
      %v601 = vpack.c.b16 %v569, %v569
      %v602 = vpack.c.b16 %v570, %v570
      %v603 = vpack.c.b16 %v571, %v571
      %v604 = vpack.c.b16 %v572, %v572
      %v605 = vpack.c.b16 %v573, %v573
      %v606 = vpack.c.b16 %v574, %v574
      %v607 = vpack.c.b16 %v575, %v575
      %640 = vst [vmem:[%s172] sm:$0xf] %v576
      %641 = vst [vmem:[%s172 + $0x4] sm:$0xf] %v577
      %642 = vst [vmem:[%s172 + $0x8] sm:$0xf] %v578
      %643 = vst [vmem:[%s172 + $0xc] sm:$0xf] %v579
      %644 = vst [vmem:[%s172 + $0x10] sm:$0xf] %v580
      %645 = vst [vmem:[%s172 + $0x14] sm:$0xf] %v581
      %646 = vst [vmem:[%s172 + $0x18] sm:$0xf] %v582
      %647 = vst [vmem:[%s172 + $0x1c] sm:$0xf] %v583
      %648 = vst [vmem:[%s172 + $0x20] sm:$0xf] %v584
      %649 = vst [vmem:[%s172 + $0x24] sm:$0xf] %v585
      %650 = vst [vmem:[%s172 + $0x28] sm:$0xf] %v586
      %651 = vst [vmem:[%s172 + $0x2c] sm:$0xf] %v587
      %652 = vst [vmem:[%s172 + $0x30] sm:$0xf] %v588
      %653 = vst [vmem:[%s172 + $0x34] sm:$0xf] %v589
      %654 = vst [vmem:[%s172 + $0x38] sm:$0xf] %v590
      %655 = vst [vmem:[%s172 + $0x3c] sm:$0xf] %v591
      %656 = vst [vmem:[%s172 + $0x40] sm:$0xf] %v592
      %657 = vst [vmem:[%s172 + $0x44] sm:$0xf] %v593
      %658 = vst [vmem:[%s172 + $0x48] sm:$0xf] %v594
      %659 = vst [vmem:[%s172 + $0x4c] sm:$0xf] %v595
      %660 = vst [vmem:[%s172 + $0x50] sm:$0xf] %v596
      %661 = vst [vmem:[%s172 + $0x54] sm:$0xf] %v597
      %662 = vst [vmem:[%s172 + $0x58] sm:$0xf] %v598
      %663 = vst [vmem:[%s172 + $0x5c] sm:$0xf] %v599
      %664 = vst [vmem:[%s172 + $0x60] sm:$0xf] %v600
      %665 = vst [vmem:[%s172 + $0x64] sm:$0xf] %v601
      %666 = vst [vmem:[%s172 + $0x68] sm:$0xf] %v602
      %667 = vst [vmem:[%s172 + $0x6c] sm:$0xf] %v603
      %668 = vst [vmem:[%s172 + $0x70] sm:$0xf] %v604
      %669 = vst [vmem:[%s172 + $0x74] sm:$0xf] %v605
      %670 = vst [vmem:[%s172 + $0x78] sm:$0xf] %v606
      %671 = vst [vmem:[%s172 + $0x7c] sm:$0xf] %v607
      %s672 = smul.u32 32, %s14
      %p673 = scmp.lt.s32.totalorder %s672, 63
      %s674 = scalar_select %p673, %s672, 63
      %s675 = smul.addr %s674, 4
      %s676 = scalar_lea.vmem %s3, %s675
      // Predicated region
      $region33: #{features_extractor_forward.6} parent=31 // pred_check
        %p677 = pneg %p100
      $region34: #{features_extractor_forward.6} parent=31 // pred_check_branch
        %679 = sbr.rel (%p677) target = $region36
      $region35: #{features_extractor_forward.6} parent=31 // pred_region
        %s680 = smul.u32 32, %s14
      $region36: #{features_extractor_forward.6} parent=31 // pred_fallthru
        _
    $region32: #{features_extractor_forward.6} parent=5 // pred_fallthru
      _
    %p681 = scmp.le.s32.totalorder 2, %s9
    // Predicated region
    $region37: #{features_extractor_forward.6} parent=5 // pred_check
      %p682 = pneg %p681
    $region38: #{features_extractor_forward.6} parent=5 // pred_check_branch
      %684 = sbr.rel (%p682) target = $region40
    $region39: #{features_extractor_forward.6} parent=5 // pred_region
      %s685 = ssub.s32 %s9, 2
      // Predicated region
      $region41: #{features_extractor_forward.6} parent=39 // pred_check
        %p686 = pneg %p106
      $region42: #{features_extractor_forward.6} parent=39 // pred_check_branch
        %688 = sbr.rel (%p686) target = $region44
      $region43: #{features_extractor_forward.6} parent=39 // pred_region
        %s689 = smul.u32 32, %s15
        %p690 = scmp.lt.s32.totalorder %s689, 63
        %s691 = scalar_select %p690, %s689, 63
        %s692 = smul.addr %s691, 4
        %s693 = scalar_lea.vmem %s3, %s692
      $region44: #{features_extractor_forward.6} parent=39 // pred_fallthru
        _
    $region40: #{features_extractor_forward.6} parent=5 // pred_fallthru
      _
  $region6: #{features_extractor_forward.6} parent=0 // loop_footer
    %s13 = sadd.s32 1, %s9
  $region7: #{features_extractor_forward.6} parent=0 // loop_footer_branch
    %8 = sbr.rel target = $region3
  $region8: #{features_extractor_forward.6} parent=0 // loop_exit
    _

// kernel: features_extractor_forward.7
$region0: #{features_extractor_forward.7}
  #allocation0 [shape = 'u32[]', space=smem, size = 0x4, offset = 0x4, fixed_abs, tag = 'smem constant byte address 0x4 - core index']
  #allocation1 [shape = 'u32[144,128]{1,0:T(1,128)}', space=vmem, size = 0x12000, scoped, tag = 'internal scratch']
  %s0 = inlined_call_operand.vmem [shape: bf16[256,192], index: 0, kind: input, shape index: {}]
  %s1 = inlined_call_operand.vmem [shape: bf16[192,128], index: 1, kind: input, shape index: {}]
  %s2 = inlined_call_operand.vmem [shape: f32[1,128], index: 2, kind: input, shape index: {}]
  %s3 = inlined_call_operand.vmem [shape: bf16[256,128], index: 3, kind: output, shape index: {}]
  %s4 = sld [smem:[#allocation0]]
  $region45: #{features_extractor_forward.7} parent=0
    _
  %s6 = ssub.s32 1, %s4
  %s7 = scalar_select 0, %s6, %s4
  loop: start=0, step=1, limit=4
  $region2: #{features_extractor_forward.7} parent=0 // loop_pre_header
    _
  $region3: #{features_extractor_forward.7} parent=0 // loop_header
    %s9 = sphi 0, %s13
    %p10 = scmp.ge.s32.totalorder %s9, 4
    %s19 = sphi 0, %s21
    %s22 = sphi 0, %s19
    %s23 = sphi 0, %s22
    %s39 = sphi 0, %s23
    %s43 = sphi 0, %s43
    %s45 = sphi 0, %s43
    %s46 = sphi 0, %s45
    %s60 = sphi 0, %s46
    %s64 = sphi 0, %s64
    %s66 = sphi 0, %s64
    %s67 = sphi 0, %s66
    %s81 = sphi 0, %s67
    %s87 = sphi 0, %s89
    %s90 = sphi 0, %s87
    %s91 = sphi 0, %s90
    %s107 = sphi 0, %s91
  $region4: #{features_extractor_forward.7} parent=0 // loop_header_branch
    %12 = sbr.rel (%p10) target = $region8
  $region5: #{features_extractor_forward.7} parent=0 // loop_body
    %s14 = ssub.s32 %s9, 1
    %s15 = ssub.s32 %s9, 2
    %s16 = sadd.s32 %s9, 1
    %s17 = ssub.s32 %s9, %s16
    %p18 = scmp.eq.s32.totalorder %s17, 0
    %s20 = sadd.s32 %s19, 1
    %s21 = scalar_select %p18, %s19, %s20
    %p24 = pneg %p18
    %p25 = scmp.eq.s32.totalorder %s9, 1
    %p26 = por %p24, %p25
    %p27 = scmp.ne.s32.totalorder %s19, %s22
    %p28 = scmp.eq.s32.totalorder %s9, 0
    %p29 = por %p27, %p28
    %p30 = scmp.ne.s32.totalorder %s19, %s22
    %p31 = scmp.eq.s32.totalorder %s14, 1
    %p32 = por %p30, %p31
    %p33 = scmp.ne.s32.totalorder %s22, %s23
    %p34 = scmp.eq.s32.totalorder %s14, 0
    %p35 = por %p33, %p34
    %p36 = scmp.ne.s32.totalorder %s22, %s23
    %p37 = scmp.eq.s32.totalorder %s15, 1
    %p38 = por %p36, %p37
    %p40 = scmp.ne.s32.totalorder %s23, %s39
    %p41 = scmp.eq.s32.totalorder %s15, 0
    %p42 = por %p40, %p41
    %s44 = sadd.s32 %s43, 1
    %p47 = scmp.eq.s32.totalorder %s9, 1
    %p48 = scmp.ne.s32.totalorder %s43, %s45
    %p49 = scmp.eq.s32.totalorder %s9, 0
    %p50 = por %p48, %p49
    %p51 = scmp.ne.s32.totalorder %s43, %s45
    %p52 = scmp.eq.s32.totalorder %s14, 1
    %p53 = por %p51, %p52
    %p54 = scmp.ne.s32.totalorder %s45, %s46
    %p55 = scmp.eq.s32.totalorder %s14, 0
    %p56 = por %p54, %p55
    %p57 = scmp.ne.s32.totalorder %s45, %s46
    %p58 = scmp.eq.s32.totalorder %s15, 1
    %p59 = por %p57, %p58
    %p61 = scmp.ne.s32.totalorder %s46, %s60
    %p62 = scmp.eq.s32.totalorder %s15, 0
    %p63 = por %p61, %p62
    %s65 = sadd.s32 %s64, 1
    %p68 = scmp.eq.s32.totalorder %s9, 1
    %p69 = scmp.ne.s32.totalorder %s64, %s66
    %p70 = scmp.eq.s32.totalorder %s9, 0
    %p71 = por %p69, %p70
    %p72 = scmp.ne.s32.totalorder %s64, %s66
    %p73 = scmp.eq.s32.totalorder %s14, 1
    %p74 = por %p72, %p73
    %p75 = scmp.ne.s32.totalorder %s66, %s67
    %p76 = scmp.eq.s32.totalorder %s14, 0
    %p77 = por %p75, %p76
    %p78 = scmp.ne.s32.totalorder %s66, %s67
    %p79 = scmp.eq.s32.totalorder %s15, 1
    %p80 = por %p78, %p79
    %p82 = scmp.ne.s32.totalorder %s67, %s81
    %p83 = scmp.eq.s32.totalorder %s15, 0
    %p84 = por %p82, %p83
    %s85 = ssub.s32 %s9, %s16
    %p86 = scmp.eq.s32.totalorder %s85, 0
    %s88 = sadd.s32 %s87, 1
    %s89 = scalar_select %p86, %s87, %s88
    %p92 = pneg %p86
    %p93 = scmp.eq.s32.totalorder %s9, 1
    %p94 = por %p92, %p93
    %p95 = scmp.ne.s32.totalorder %s87, %s90
    %p96 = scmp.eq.s32.totalorder %s9, 0
    %p97 = por %p95, %p96
    %p98 = scmp.ne.s32.totalorder %s87, %s90
    %p99 = scmp.eq.s32.totalorder %s14, 1
    %p100 = por %p98, %p99
    %p101 = scmp.ne.s32.totalorder %s90, %s91
    %p102 = scmp.eq.s32.totalorder %s14, 0
    %p103 = por %p101, %p102
    %p104 = scmp.ne.s32.totalorder %s90, %s91
    %p105 = scmp.eq.s32.totalorder %s15, 1
    %p106 = por %p104, %p105
    %p108 = scmp.ne.s32.totalorder %s91, %s107
    %p109 = scmp.eq.s32.totalorder %s15, 0
    %p110 = por %p108, %p109
    %p111 = scmp.le.s32.totalorder 1, %s9
    %p112 = scmp.lt.s32.totalorder %s9, 3
    %p113 = pnand %p111, %p112
    %p114 = pneg %p113
    // Predicated region
    $region9: #{features_extractor_forward.7} parent=5 // pred_check
      _
    $region10: #{features_extractor_forward.7} parent=5 // pred_check_branch
      %116 = sbr.rel (%p113) target = $region12
    $region11: #{features_extractor_forward.7} parent=5 // pred_region
      %s117 = ssub.s32 %s9, 1
      // Predicated region
      $region13: #{features_extractor_forward.7} parent=11 // pred_check
        %p118 = pneg %p56
      $region14: #{features_extractor_forward.7} parent=11 // pred_check_branch
        %120 = sbr.rel (%p118) target = $region16
      $region15: #{features_extractor_forward.7} parent=11 // pred_region
        _
      $region16: #{features_extractor_forward.7} parent=11 // pred_fallthru
        _
      // Predicated region
      $region17: #{features_extractor_forward.7} parent=11 // pred_check
        %p121 = pneg %p77
      $region18: #{features_extractor_forward.7} parent=11 // pred_check_branch
        %123 = sbr.rel (%p121) target = $region20
      $region19: #{features_extractor_forward.7} parent=11 // pred_region
        _
      $region20: #{features_extractor_forward.7} parent=11 // pred_fallthru
        _
    $region12: #{features_extractor_forward.7} parent=5 // pred_fallthru
      _
    %p124 = scmp.lt.s32.totalorder %s9, 2
    // Predicated region
    $region21: #{features_extractor_forward.7} parent=5 // pred_check
      %p125 = pneg %p124
    $region22: #{features_extractor_forward.7} parent=5 // pred_check_branch
      %127 = sbr.rel (%p125) target = $region24
    $region23: #{features_extractor_forward.7} parent=5 // pred_region
      // Predicated region
      $region25: #{features_extractor_forward.7} parent=23 // pred_check
        %p128 = pneg %p29
      $region26: #{features_extractor_forward.7} parent=23 // pred_check_branch
        %130 = sbr.rel (%p128) target = $region28
      $region27: #{features_extractor_forward.7} parent=23 // pred_region
        %s131 = smul.u32 16, %s9
        %p132 = scmp.lt.s32.totalorder %s131, 31
        %s133 = scalar_select %p132, %s131, 31
        %s134 = smul.addr %s133, 2
        %s135 = smul.addr %s134, 4
        %s136 = scalar_lea.vmem %s0, %s135
        %s137 = smul.u32 16, %s9
      $region28: #{features_extractor_forward.7} parent=23 // pred_fallthru
        _
    $region24: #{features_extractor_forward.7} parent=5 // pred_fallthru
      _
    %p138 = scmp.le.s32.totalorder 1, %s9
    %p139 = scmp.lt.s32.totalorder %s9, 3
    %p140 = pnand %p138, %p139
    %p141 = pneg %p140
    // Predicated region
    $region29: #{features_extractor_forward.7} parent=5 // pred_check
      _
    $region30: #{features_extractor_forward.7} parent=5 // pred_check_branch
      %143 = sbr.rel (%p140) target = $region32
    $region31: #{features_extractor_forward.7} parent=5 // pred_region
      %s144 = ssub.s32 %s9, 1
      %s145 = smul.u32 16, %s14
      %p146 = scmp.lt.s32.totalorder %s145, 31
      %s147 = scalar_select %p146, %s145, 31
      %s148 = smul.addr %s147, 2
      %s149 = smul.addr %s148, 4
      %s150 = scalar_lea.vmem %s0, %s149
      %p151 = pneg %p35
      %p152 = pneg %p32
      %p153 = pneg %p56
      %p154 = pneg %p53
      %p155 = pneg %p77
      %p156 = pneg %p74
      %p157 = pneg %p103
      %p158 = pneg %p100
      %s159 = smul.u32 16, %s14
      %p160 = scmp.lt.s32.totalorder %s159, 31
      %s161 = scalar_select %p160, %s159, 31
      %s162 = smul.addr %s161, 4
      %s163 = scalar_lea.vmem %s3, %s162
      %s164 = smul.u32 16, %s14
      %p165 = scmp.lt.s32.totalorder %s164, 31
      %s166 = scalar_select %p165, %s164, 31
      %s167 = smul.addr %s166, 2
      %s168 = smul.addr %s167, 4
      %s169 = scalar_lea.vmem %s0, %s168
      %s170 = smul.u32 16, %s14
      %s171 = smul.u32 16, %s14
      %p172 = scmp.lt.s32.totalorder %s171, 31
      %s173 = scalar_select %p172, %s171, 31
      %s174 = smul.addr %s173, 4
      %s175 = scalar_lea.vmem %s3, %s174
      %s176 = smul.u32 16, %s14
      %v178 = vld [vmem:[%s169] sm:$0xff]
      %v179 = vld [vmem:[%s169 + $0x8] sm:$0xff]
      %v180 = vld [vmem:[%s169 + $0x10] sm:$0xff]
      %v181 = vld [vmem:[%s169 + $0x18] sm:$0xff]
      %v182 = vld [vmem:[%s169 + $0x20] sm:$0xff]
      %v183 = vld [vmem:[%s169 + $0x28] sm:$0xff]
      %v184 = vld [vmem:[%s169 + $0x30] sm:$0xff]
      %v185 = vld [vmem:[%s169 + $0x38] sm:$0xff]
      %v186 = vld [vmem:[%s169 + $0x40] sm:$0xff]
      %v187 = vld [vmem:[%s169 + $0x48] sm:$0xff]
      %v188 = vld [vmem:[%s169 + $0x50] sm:$0xff]
      %v189 = vld [vmem:[%s169 + $0x58] sm:$0xff]
      %v190 = vld [vmem:[%s169 + $0x60] sm:$0xff]
      %v191 = vld [vmem:[%s169 + $0x68] sm:$0xff]
      %v192 = vld [vmem:[%s169 + $0x70] sm:$0xff]
      %v193 = vld [vmem:[%s169 + $0x78] sm:$0xff]
      %v194 = vld [vmem:[%s1] sm:$0xf]
      %v195 = vld [vmem:[%s1 + $0x4] sm:$0xf]
      %v196 = vld [vmem:[%s1 + $0x8] sm:$0xf]
      %v197 = vld [vmem:[%s1 + $0xc] sm:$0xf]
      %v198 = vld [vmem:[%s1 + $0x10] sm:$0xf]
      %v199 = vld [vmem:[%s1 + $0x14] sm:$0xf]
      %v200 = vld [vmem:[%s1 + $0x18] sm:$0xf]
      %v201 = vld [vmem:[%s1 + $0x1c] sm:$0xf]
      %v202 = vld [vmem:[%s1 + $0x20] sm:$0xf]
      %v203 = vld [vmem:[%s1 + $0x24] sm:$0xf]
      %v204 = vld [vmem:[%s1 + $0x28] sm:$0xf]
      %v205 = vld [vmem:[%s1 + $0x2c] sm:$0xf]
      %v206 = vld [vmem:[%s1 + $0x30] sm:$0xf]
      %v207 = vld [vmem:[%s1 + $0x34] sm:$0xf]
      %v208 = vld [vmem:[%s1 + $0x38] sm:$0xf]
      %v209 = vld [vmem:[%s1 + $0x3c] sm:$0xf]
      %v210 = vld [vmem:[%s1 + $0x40] sm:$0xf]
      %v211 = vld [vmem:[%s1 + $0x44] sm:$0xf]
      %v212 = vld [vmem:[%s1 + $0x48] sm:$0xf]
      %v213 = vld [vmem:[%s1 + $0x4c] sm:$0xf]
      %v214 = vld [vmem:[%s1 + $0x50] sm:$0xf]
      %v215 = vld [vmem:[%s1 + $0x54] sm:$0xf]
      %v216 = vld [vmem:[%s1 + $0x58] sm:$0xf]
      %v217 = vld [vmem:[%s1 + $0x5c] sm:$0xf]
      %v218 = vld [vmem:[%s2] sm:$0x1]
      %v220 = vlaneseq
      %v221 = vshrl.u32 %v220, 7
      %v222 = vsub.s32 0, %v221
      %v223 = vrot.slane %v218, %v222
      %v241 = vunpack.c.l.b16 %v178
      %v242 = vunpack.c.h.b16 %v178
      %v243 = vunpack.c.l.b16 %v179
      %v244 = vunpack.c.h.b16 %v179
      %v245 = vunpack.c.l.b16 %v180
      %v246 = vunpack.c.h.b16 %v180
      %v247 = vunpack.c.l.b16 %v181
      %v248 = vunpack.c.h.b16 %v181
      %v249 = vunpack.c.l.b16 %v182
      %v250 = vunpack.c.h.b16 %v182
      %v251 = vunpack.c.l.b16 %v183
      %v252 = vunpack.c.h.b16 %v183
      %v253 = vunpack.c.l.b16 %v184
      %v254 = vunpack.c.h.b16 %v184
      %v255 = vunpack.c.l.b16 %v185
      %v256 = vunpack.c.h.b16 %v185
      %v257 = vunpack.c.l.b16 %v186
      %v258 = vunpack.c.h.b16 %v186
      %v259 = vunpack.c.l.b16 %v187
      %v260 = vunpack.c.h.b16 %v187
      %v261 = vunpack.c.l.b16 %v188
      %v262 = vunpack.c.h.b16 %v188
      %v263 = vunpack.c.l.b16 %v189
      %v264 = vunpack.c.h.b16 %v189
      %v265 = vunpack.c.l.b16 %v190
      %v266 = vunpack.c.h.b16 %v190
      %v267 = vunpack.c.l.b16 %v191
      %v268 = vunpack.c.h.b16 %v191
      %v269 = vunpack.c.l.b16 %v192
      %v270 = vunpack.c.h.b16 %v192
      %v271 = vunpack.c.l.b16 %v193
      %v272 = vunpack.c.h.b16 %v193
      %v273 = vpack.c.b16 %v243, %v241
      %v274 = vpack.c.b16 %v244, %v242
      %v275 = vpack.c.b16 %v247, %v245
      %v276 = vpack.c.b16 %v248, %v246
      %v277 = vpack.c.b16 %v251, %v249
      %v278 = vpack.c.b16 %v252, %v250
      %v279 = vpack.c.b16 %v255, %v253
      %v280 = vpack.c.b16 %v256, %v254
      %v281 = vpack.c.b16 %v259, %v257
      %v282 = vpack.c.b16 %v260, %v258
      %v283 = vpack.c.b16 %v263, %v261
      %v284 = vpack.c.b16 %v264, %v262
      %v285 = vpack.c.b16 %v267, %v265
      %v286 = vpack.c.b16 %v268, %v266
      %v287 = vpack.c.b16 %v271, %v269
      %v288 = vpack.c.b16 %v272, %v270
      %v321 = vunpack.c.l.b16 %v194
      %v322 = vunpack.c.l.b16 %v195
      %v323 = vunpack.c.l.b16 %v196
      %v324 = vunpack.c.l.b16 %v197
      %v325 = vunpack.c.l.b16 %v198
      %v326 = vunpack.c.l.b16 %v199
      %v327 = vunpack.c.l.b16 %v200
      %v328 = vunpack.c.l.b16 %v201
      %v329 = vunpack.c.l.b16 %v202
      %v330 = vunpack.c.l.b16 %v203
      %v331 = vunpack.c.l.b16 %v204
      %v332 = vunpack.c.l.b16 %v205
      %v333 = vunpack.c.l.b16 %v206
      %v334 = vunpack.c.l.b16 %v207
      %v335 = vunpack.c.l.b16 %v208
      %v336 = vunpack.c.l.b16 %v209
      %v337 = vunpack.c.l.b16 %v210
      %v338 = vunpack.c.l.b16 %v211
      %v339 = vunpack.c.l.b16 %v212
      %v340 = vunpack.c.l.b16 %v213
      %v341 = vunpack.c.l.b16 %v214
      %v342 = vunpack.c.l.b16 %v215
      %v343 = vunpack.c.l.b16 %v216
      %v344 = vunpack.c.l.b16 %v217
      %v345 = vpack.c.b16 %v322, %v321
      %v346 = vpack.c.b16 %v324, %v323
      %v347 = vpack.c.b16 %v326, %v325
      %v348 = vpack.c.b16 %v328, %v327
      %v349 = vpack.c.b16 %v330, %v329
      %v350 = vpack.c.b16 %v332, %v331
      %v351 = vpack.c.b16 %v334, %v333
      %v352 = vpack.c.b16 %v336, %v335
      %v353 = vpack.c.b16 %v338, %v337
      %v354 = vpack.c.b16 %v340, %v339
      %v355 = vpack.c.b16 %v342, %v341
      %v356 = vpack.c.b16 %v344, %v343
      %vm369 = vcmask 523264
      %v371 = vsel %vm369, %v274, 0
      %v374 = vsel %vm369, %v276, 0
      %v377 = vsel %vm369, %v278, 0
      %v380 = vsel %vm369, %v280, 0
      %v383 = vsel %vm369, %v282, 0
      %v386 = vsel %vm369, %v284, 0
      %v389 = vsel %vm369, %v286, 0
      %v392 = vsel %vm369, %v288, 0
      %394 = vmatprep.subr.bf16.mxu0 0
      %395 = vmatpush1.bf16.msra.mxu0 %v345
      %396 = vmatprep.subr.bf16.mxu0 0
      %397 = vmatpush1.bf16.msra.mxu0 %v346
      %398 = vmatprep.subr.bf16.mxu0 0
      %399 = vmatpush1.bf16.msra.mxu0 %v347
      %400 = vmatprep.subr.bf16.mxu0 0
      %401 = vmatpush1.bf16.msra.mxu0 %v348
      %402 = vmatprep.subr.bf16.mxu0 0
      %403 = vmatpush1.bf16.msra.mxu0 %v349
      %404 = vmatprep.subr.bf16.mxu0 0
      %405 = vmatpush1.bf16.msra.mxu0 %v350
      %406 = vmatprep.subr.bf16.mxu0 0
      %407 = vmatpush1.bf16.msra.mxu0 %v351
      %408 = vmatprep.subr.bf16.mxu0 0
      %409 = vmatpush1.bf16.msra.mxu0 %v352
      %410 = vmatprep.subr.bf16.mxu0 0
      %411 = vmatpush1.bf16.msra.mxu0 %v353
      %412 = vmatprep.subr.bf16.mxu0 0
      %413 = vmatpush1.bf16.msra.mxu0 %v354
      %414 = vmatprep.subr.bf16.mxu0 0
      %415 = vmatpush1.bf16.msra.mxu0 %v355
      %416 = vmatprep.subr.bf16.mxu0 0
      %417 = vmatpush1.bf16.msra.mxu0 %v356
      %418 = vmatprep.subr.bf16.mxu0 0
      %419 = vmatpush1.bf16.msra.mxu0 0
      %420 = vmatprep.subr.bf16.mxu0 0
      %421 = vmatpush1.bf16.msra.mxu0 0
      %422 = vmatprep.subr.bf16.mxu0 0
      %423 = vmatpush1.bf16.msra.mxu0 0
      %424 = vmatprep.subr.bf16.mxu0 0
      %425 = vmatpush1.bf16.msra.mxu0 0
      %426 = vmatprep.mubr.bf16.mxu0 %v371
      %427 = vmatmul.mubr.bf16.gmra.mrb[0].mxu0 %v273
      %v428 = vpop.f32.mrb[0].mxu0
      %v429 = vadd.f32 %v223, %v428
      %v430 = vpop.f32.mrb[0].mxu0
      %v431 = vpop.f32.mrb[0].mxu0
      %v432 = vadd.f32 %v223, %v431
      %v433 = vpop.f32.mrb[0].mxu0
      %434 = vmatprep.mubr.bf16.mxu0 %v374
      %435 = vmatmul.mubr.bf16.gmra.mrb[0].mxu0 %v275
      %v436 = vpop.f32.mrb[0].mxu0
      %v437 = vadd.f32 %v223, %v436
      %v438 = vpop.f32.mrb[0].mxu0
      %v439 = vpop.f32.mrb[0].mxu0
      %v440 = vadd.f32 %v223, %v439
      %v441 = vpop.f32.mrb[0].mxu0
      %442 = vmatprep.mubr.bf16.mxu0 %v377
      %443 = vmatmul.mubr.bf16.gmra.mrb[0].mxu0 %v277
      %v444 = vpop.f32.mrb[0].mxu0
      %v445 = vadd.f32 %v223, %v444
      %v446 = vpop.f32.mrb[0].mxu0
      %v447 = vpop.f32.mrb[0].mxu0
      %v448 = vadd.f32 %v223, %v447
      %v449 = vpop.f32.mrb[0].mxu0
      %450 = vmatprep.mubr.bf16.mxu0 %v380
      %451 = vmatmul.mubr.bf16.gmra.mrb[0].mxu0 %v279
      %v452 = vpop.f32.mrb[0].mxu0
      %v453 = vadd.f32 %v223, %v452
      %v454 = vpop.f32.mrb[0].mxu0
      %v455 = vpop.f32.mrb[0].mxu0
      %v456 = vadd.f32 %v223, %v455
      %v457 = vpop.f32.mrb[0].mxu0
      %458 = vmatprep.mubr.bf16.mxu0 %v383
      %459 = vmatmul.mubr.bf16.gmra.mrb[0].mxu0 %v281
      %v460 = vpop.f32.mrb[0].mxu0
      %v461 = vadd.f32 %v223, %v460
      %v462 = vpop.f32.mrb[0].mxu0
      %v463 = vpop.f32.mrb[0].mxu0
      %v464 = vadd.f32 %v223, %v463
      %v465 = vpop.f32.mrb[0].mxu0
      %466 = vmatprep.mubr.bf16.mxu0 %v386
      %467 = vmatmul.mubr.bf16.gmra.mrb[0].mxu0 %v283
      %v468 = vpop.f32.mrb[0].mxu0
      %v469 = vadd.f32 %v223, %v468
      %v470 = vpop.f32.mrb[0].mxu0
      %v471 = vpop.f32.mrb[0].mxu0
      %v472 = vadd.f32 %v223, %v471
      %v473 = vpop.f32.mrb[0].mxu0
      %474 = vmatprep.mubr.bf16.mxu0 %v389
      %475 = vmatmul.mubr.bf16.gmra.mrb[0].mxu0 %v285
      %v476 = vpop.f32.mrb[0].mxu0
      %v477 = vadd.f32 %v223, %v476
      %v478 = vpop.f32.mrb[0].mxu0
      %v479 = vpop.f32.mrb[0].mxu0
      %v480 = vadd.f32 %v223, %v479
      %v481 = vpop.f32.mrb[0].mxu0
      %482 = vmatprep.mubr.bf16.mxu0 %v392
      %483 = vmatmul.mubr.bf16.gmra.mrb[0].mxu0 %v287
      %v484 = vpop.f32.mrb[0].mxu0
      %v485 = vadd.f32 %v223, %v484
      %v486 = vpop.f32.mrb[0].mxu0
      %v487 = vpop.f32.mrb[0].mxu0
      %v488 = vadd.f32 %v223, %v487
      %v489 = vpop.f32.mrb[0].mxu0
      %490 = vdwg.mxu0
      %v491 = vpack.c.bf16 %v432, %v429
      %v492 = vpack.c.bf16 %v440, %v437
      %v493 = vpack.c.bf16 %v448, %v445
      %v494 = vpack.c.bf16 %v456, %v453
      %v495 = vpack.c.bf16 %v464, %v461
      %v496 = vpack.c.bf16 %v472, %v469
      %v497 = vpack.c.bf16 %v480, %v477
      %v498 = vpack.c.bf16 %v488, %v485
      %v507 = vunpack.c.l.b16 %v491
      %v508 = vunpack.c.h.b16 %v491
      %v509 = vunpack.c.l.b16 %v492
      %v510 = vunpack.c.h.b16 %v492
      %v511 = vunpack.c.l.b16 %v493
      %v512 = vunpack.c.h.b16 %v493
      %v513 = vunpack.c.l.b16 %v494
      %v514 = vunpack.c.h.b16 %v494
      %v515 = vunpack.c.l.b16 %v495
      %v516 = vunpack.c.h.b16 %v495
      %v517 = vunpack.c.l.b16 %v496
      %v518 = vunpack.c.h.b16 %v496
      %v519 = vunpack.c.l.b16 %v497
      %v520 = vunpack.c.h.b16 %v497
      %v521 = vunpack.c.l.b16 %v498
      %v522 = vunpack.c.h.b16 %v498
      %v523 = vpack.c.b16 %v507, %v507
      %v524 = vpack.c.b16 %v508, %v508
      %v525 = vpack.c.b16 %v509, %v509
      %v526 = vpack.c.b16 %v510, %v510
      %v527 = vpack.c.b16 %v511, %v511
      %v528 = vpack.c.b16 %v512, %v512
      %v529 = vpack.c.b16 %v513, %v513
      %v530 = vpack.c.b16 %v514, %v514
      %v531 = vpack.c.b16 %v515, %v515
      %v532 = vpack.c.b16 %v516, %v516
      %v533 = vpack.c.b16 %v517, %v517
      %v534 = vpack.c.b16 %v518, %v518
      %v535 = vpack.c.b16 %v519, %v519
      %v536 = vpack.c.b16 %v520, %v520
      %v537 = vpack.c.b16 %v521, %v521
      %v538 = vpack.c.b16 %v522, %v522
      %555 = vst [vmem:[%s175] sm:$0xf] %v523
      %556 = vst [vmem:[%s175 + $0x4] sm:$0xf] %v524
      %557 = vst [vmem:[%s175 + $0x8] sm:$0xf] %v525
      %558 = vst [vmem:[%s175 + $0xc] sm:$0xf] %v526
      %559 = vst [vmem:[%s175 + $0x10] sm:$0xf] %v527
      %560 = vst [vmem:[%s175 + $0x14] sm:$0xf] %v528
      %561 = vst [vmem:[%s175 + $0x18] sm:$0xf] %v529
      %562 = vst [vmem:[%s175 + $0x1c] sm:$0xf] %v530
      %563 = vst [vmem:[%s175 + $0x20] sm:$0xf] %v531
      %564 = vst [vmem:[%s175 + $0x24] sm:$0xf] %v532
      %565 = vst [vmem:[%s175 + $0x28] sm:$0xf] %v533
      %566 = vst [vmem:[%s175 + $0x2c] sm:$0xf] %v534
      %567 = vst [vmem:[%s175 + $0x30] sm:$0xf] %v535
      %568 = vst [vmem:[%s175 + $0x34] sm:$0xf] %v536
      %569 = vst [vmem:[%s175 + $0x38] sm:$0xf] %v537
      %570 = vst [vmem:[%s175 + $0x3c] sm:$0xf] %v538
      %s571 = smul.u32 16, %s14
      %p572 = scmp.lt.s32.totalorder %s571, 31
      %s573 = scalar_select %p572, %s571, 31
      %s574 = smul.addr %s573, 4
      %s575 = scalar_lea.vmem %s3, %s574
      // Predicated region
      $region33: #{features_extractor_forward.7} parent=31 // pred_check
        %p576 = pneg %p100
      $region34: #{features_extractor_forward.7} parent=31 // pred_check_branch
        %578 = sbr.rel (%p576) target = $region36
      $region35: #{features_extractor_forward.7} parent=31 // pred_region
        %s579 = smul.u32 16, %s14
      $region36: #{features_extractor_forward.7} parent=31 // pred_fallthru
        _
    $region32: #{features_extractor_forward.7} parent=5 // pred_fallthru
      _
    %p580 = scmp.le.s32.totalorder 2, %s9
    // Predicated region
    $region37: #{features_extractor_forward.7} parent=5 // pred_check
      %p581 = pneg %p580
    $region38: #{features_extractor_forward.7} parent=5 // pred_check_branch
      %583 = sbr.rel (%p581) target = $region40
    $region39: #{features_extractor_forward.7} parent=5 // pred_region
      %s584 = ssub.s32 %s9, 2
      // Predicated region
      $region41: #{features_extractor_forward.7} parent=39 // pred_check
        %p585 = pneg %p106
      $region42: #{features_extractor_forward.7} parent=39 // pred_check_branch
        %587 = sbr.rel (%p585) target = $region44
      $region43: #{features_extractor_forward.7} parent=39 // pred_region
        %s588 = smul.u32 16, %s15
        %p589 = scmp.lt.s32.totalorder %s588, 31
        %s590 = scalar_select %p589, %s588, 31
        %s591 = smul.addr %s590, 4
        %s592 = scalar_lea.vmem %s3, %s591
      $region44: #{features_extractor_forward.7} parent=39 // pred_fallthru
        _
    $region40: #{features_extractor_forward.7} parent=5 // pred_fallthru
      _
  $region6: #{features_extractor_forward.7} parent=0 // loop_footer
    %s13 = sadd.s32 1, %s9
  $region7: #{features_extractor_forward.7} parent=0 // loop_footer_branch
    %8 = sbr.rel target = $region3
  $region8: #{features_extractor_forward.7} parent=0 // loop_exit
    _

// kernel: features_extractor_forward.8
$region0: #{features_extractor_forward.8}
  #allocation0 [shape = 'u32[]', space=smem, size = 0x4, offset = 0x4, fixed_abs, tag = 'smem constant byte address 0x4 - core index']
  #allocation1 [shape = 'u32[144,128]{1,0:T(1,128)}', space=vmem, size = 0x12000, scoped, tag = 'internal scratch']
  %s0 = inlined_call_operand.vmem [shape: bf16[256,144], index: 0, kind: input, shape index: {}]
  %s1 = inlined_call_operand.vmem [shape: bf16[144,128], index: 1, kind: input, shape index: {}]
  %s2 = inlined_call_operand.vmem [shape: f32[1,128], index: 2, kind: input, shape index: {}]
  %s3 = inlined_call_operand.vmem [shape: f32[1,128], index: 3, kind: input, shape index: {}]
  %s4 = inlined_call_operand.vmem [shape: bf16[256,128], index: 4, kind: output, shape index: {}]
  %s5 = sld [smem:[#allocation0]]
  $region49: #{features_extractor_forward.8} parent=0
    _
  %s7 = ssub.s32 1, %s5
  %s8 = scalar_select 0, %s7, %s5
  loop: start=0, step=1, limit=4
  $region2: #{features_extractor_forward.8} parent=0 // loop_pre_header
    _
  $region3: #{features_extractor_forward.8} parent=0 // loop_header
    %s10 = sphi 0, %s14
    %p11 = scmp.ge.s32.totalorder %s10, 4
    %s20 = sphi 0, %s22
    %s23 = sphi 0, %s20
    %s24 = sphi 0, %s23
    %s40 = sphi 0, %s24
    %s44 = sphi 0, %s44
    %s46 = sphi 0, %s44
    %s47 = sphi 0, %s46
    %s61 = sphi 0, %s47
    %s65 = sphi 0, %s65
    %s67 = sphi 0, %s65
    %s68 = sphi 0, %s67
    %s82 = sphi 0, %s68
    %s86 = sphi 0, %s86
    %s88 = sphi 0, %s86
    %s89 = sphi 0, %s88
    %s103 = sphi 0, %s89
    %s109 = sphi 0, %s111
    %s112 = sphi 0, %s109
    %s113 = sphi 0, %s112
    %s129 = sphi 0, %s113
  $region4: #{features_extractor_forward.8} parent=0 // loop_header_branch
    %13 = sbr.rel (%p11) target = $region8
  $region5: #{features_extractor_forward.8} parent=0 // loop_body
    %s15 = ssub.s32 %s10, 1
    %s16 = ssub.s32 %s10, 2
    %s17 = sadd.s32 %s10, 1
    %s18 = ssub.s32 %s10, %s17
    %p19 = scmp.eq.s32.totalorder %s18, 0
    %s21 = sadd.s32 %s20, 1
    %s22 = scalar_select %p19, %s20, %s21
    %p25 = pneg %p19
    %p26 = scmp.eq.s32.totalorder %s10, 1
    %p27 = por %p25, %p26
    %p28 = scmp.ne.s32.totalorder %s20, %s23
    %p29 = scmp.eq.s32.totalorder %s10, 0
    %p30 = por %p28, %p29
    %p31 = scmp.ne.s32.totalorder %s20, %s23
    %p32 = scmp.eq.s32.totalorder %s15, 1
    %p33 = por %p31, %p32
    %p34 = scmp.ne.s32.totalorder %s23, %s24
    %p35 = scmp.eq.s32.totalorder %s15, 0
    %p36 = por %p34, %p35
    %p37 = scmp.ne.s32.totalorder %s23, %s24
    %p38 = scmp.eq.s32.totalorder %s16, 1
    %p39 = por %p37, %p38
    %p41 = scmp.ne.s32.totalorder %s24, %s40
    %p42 = scmp.eq.s32.totalorder %s16, 0
    %p43 = por %p41, %p42
    %s45 = sadd.s32 %s44, 1
    %p48 = scmp.eq.s32.totalorder %s10, 1
    %p49 = scmp.ne.s32.totalorder %s44, %s46
    %p50 = scmp.eq.s32.totalorder %s10, 0
    %p51 = por %p49, %p50
    %p52 = scmp.ne.s32.totalorder %s44, %s46
    %p53 = scmp.eq.s32.totalorder %s15, 1
    %p54 = por %p52, %p53
    %p55 = scmp.ne.s32.totalorder %s46, %s47
    %p56 = scmp.eq.s32.totalorder %s15, 0
    %p57 = por %p55, %p56
    %p58 = scmp.ne.s32.totalorder %s46, %s47
    %p59 = scmp.eq.s32.totalorder %s16, 1
    %p60 = por %p58, %p59
    %p62 = scmp.ne.s32.totalorder %s47, %s61
    %p63 = scmp.eq.s32.totalorder %s16, 0
    %p64 = por %p62, %p63
    %s66 = sadd.s32 %s65, 1
    %p69 = scmp.eq.s32.totalorder %s10, 1
    %p70 = scmp.ne.s32.totalorder %s65, %s67
    %p71 = scmp.eq.s32.totalorder %s10, 0
    %p72 = por %p70, %p71
    %p73 = scmp.ne.s32.totalorder %s65, %s67
    %p74 = scmp.eq.s32.totalorder %s15, 1
    %p75 = por %p73, %p74
    %p76 = scmp.ne.s32.totalorder %s67, %s68
    %p77 = scmp.eq.s32.totalorder %s15, 0
    %p78 = por %p76, %p77
    %p79 = scmp.ne.s32.totalorder %s67, %s68
    %p80 = scmp.eq.s32.totalorder %s16, 1
    %p81 = por %p79, %p80
    %p83 = scmp.ne.s32.totalorder %s68, %s82
    %p84 = scmp.eq.s32.totalorder %s16, 0
    %p85 = por %p83, %p84
    %s87 = sadd.s32 %s86, 1
    %p90 = scmp.eq.s32.totalorder %s10, 1
    %p91 = scmp.ne.s32.totalorder %s86, %s88
    %p92 = scmp.eq.s32.totalorder %s10, 0
    %p93 = por %p91, %p92
    %p94 = scmp.ne.s32.totalorder %s86, %s88
    %p95 = scmp.eq.s32.totalorder %s15, 1
    %p96 = por %p94, %p95
    %p97 = scmp.ne.s32.totalorder %s88, %s89
    %p98 = scmp.eq.s32.totalorder %s15, 0
    %p99 = por %p97, %p98
    %p100 = scmp.ne.s32.totalorder %s88, %s89
    %p101 = scmp.eq.s32.totalorder %s16, 1
    %p102 = por %p100, %p101
    %p104 = scmp.ne.s32.totalorder %s89, %s103
    %p105 = scmp.eq.s32.totalorder %s16, 0
    %p106 = por %p104, %p105
    %s107 = ssub.s32 %s10, %s17
    %p108 = scmp.eq.s32.totalorder %s107, 0
    %s110 = sadd.s32 %s109, 1
    %s111 = scalar_select %p108, %s109, %s110
    %p114 = pneg %p108
    %p115 = scmp.eq.s32.totalorder %s10, 1
    %p116 = por %p114, %p115
    %p117 = scmp.ne.s32.totalorder %s109, %s112
    %p118 = scmp.eq.s32.totalorder %s10, 0
    %p119 = por %p117, %p118
    %p120 = scmp.ne.s32.totalorder %s109, %s112
    %p121 = scmp.eq.s32.totalorder %s15, 1
    %p122 = por %p120, %p121
    %p123 = scmp.ne.s32.totalorder %s112, %s113
    %p124 = scmp.eq.s32.totalorder %s15, 0
    %p125 = por %p123, %p124
    %p126 = scmp.ne.s32.totalorder %s112, %s113
    %p127 = scmp.eq.s32.totalorder %s16, 1
    %p128 = por %p126, %p127
    %p130 = scmp.ne.s32.totalorder %s113, %s129
    %p131 = scmp.eq.s32.totalorder %s16, 0
    %p132 = por %p130, %p131
    %p133 = scmp.le.s32.totalorder 1, %s10
    %p134 = scmp.lt.s32.totalorder %s10, 3
    %p135 = pnand %p133, %p134
    %p136 = pneg %p135
    // Predicated region
    $region9: #{features_extractor_forward.8} parent=5 // pred_check
      _
    $region10: #{features_extractor_forward.8} parent=5 // pred_check_branch
      %138 = sbr.rel (%p135) target = $region12
    $region11: #{features_extractor_forward.8} parent=5 // pred_region
      %s139 = ssub.s32 %s10, 1
      // Predicated region
      $region13: #{features_extractor_forward.8} parent=11 // pred_check
        %p140 = pneg %p57
      $region14: #{features_extractor_forward.8} parent=11 // pred_check_branch
        %142 = sbr.rel (%p140) target = $region16
      $region15: #{features_extractor_forward.8} parent=11 // pred_region
        _
      $region16: #{features_extractor_forward.8} parent=11 // pred_fallthru
        _
      // Predicated region
      $region17: #{features_extractor_forward.8} parent=11 // pred_check
        %p143 = pneg %p78
      $region18: #{features_extractor_forward.8} parent=11 // pred_check_branch
        %145 = sbr.rel (%p143) target = $region20
      $region19: #{features_extractor_forward.8} parent=11 // pred_region
        _
      $region20: #{features_extractor_forward.8} parent=11 // pred_fallthru
        _
      // Predicated region
      $region21: #{features_extractor_forward.8} parent=11 // pred_check
        %p146 = pneg %p99
      $region22: #{features_extractor_forward.8} parent=11 // pred_check_branch
        %148 = sbr.rel (%p146) target = $region24
      $region23: #{features_extractor_forward.8} parent=11 // pred_region
        _
      $region24: #{features_extractor_forward.8} parent=11 // pred_fallthru
        _
    $region12: #{features_extractor_forward.8} parent=5 // pred_fallthru
      _
    %p149 = scmp.lt.s32.totalorder %s10, 2
    // Predicated region
    $region25: #{features_extractor_forward.8} parent=5 // pred_check
      %p150 = pneg %p149
    $region26: #{features_extractor_forward.8} parent=5 // pred_check_branch
      %152 = sbr.rel (%p150) target = $region28
    $region27: #{features_extractor_forward.8} parent=5 // pred_region
      // Predicated region
      $region29: #{features_extractor_forward.8} parent=27 // pred_check
        %p153 = pneg %p30
      $region30: #{features_extractor_forward.8} parent=27 // pred_check_branch
        %155 = sbr.rel (%p153) target = $region32
      $region31: #{features_extractor_forward.8} parent=27 // pred_region
        %s156 = smul.u32 16, %s10
        %p157 = scmp.lt.s32.totalorder %s156, 31
        %s158 = scalar_select %p157, %s156, 31
        %s159 = smul.addr %s158, 2
        %s160 = smul.addr %s159, 4
        %s161 = scalar_lea.vmem %s0, %s160
        %s162 = smul.u32 16, %s10
      $region32: #{features_extractor_forward.8} parent=27 // pred_fallthru
        _
    $region28: #{features_extractor_forward.8} parent=5 // pred_fallthru
      _
    %p163 = scmp.le.s32.totalorder 1, %s10
    %p164 = scmp.lt.s32.totalorder %s10, 3
    %p165 = pnand %p163, %p164
    %p166 = pneg %p165
    // Predicated region
    $region33: #{features_extractor_forward.8} parent=5 // pred_check
      _
    $region34: #{features_extractor_forward.8} parent=5 // pred_check_branch
      %168 = sbr.rel (%p165) target = $region36
    $region35: #{features_extractor_forward.8} parent=5 // pred_region
      %s169 = ssub.s32 %s10, 1
      %s170 = smul.u32 16, %s15
      %p171 = scmp.lt.s32.totalorder %s170, 31
      %s172 = scalar_select %p171, %s170, 31
      %s173 = smul.addr %s172, 2
      %s174 = smul.addr %s173, 4
      %s175 = scalar_lea.vmem %s0, %s174
      %p176 = pneg %p36
      %p177 = pneg %p33
      %p178 = pneg %p57
      %p179 = pneg %p54
      %p180 = pneg %p78
      %p181 = pneg %p75
      %p182 = pneg %p99
      %p183 = pneg %p96
      %p184 = pneg %p125
      %p185 = pneg %p122
      %s186 = smul.u32 16, %s15
      %p187 = scmp.lt.s32.totalorder %s186, 31
      %s188 = scalar_select %p187, %s186, 31
      %s189 = smul.addr %s188, 4
      %s190 = scalar_lea.vmem %s4, %s189
      %s191 = smul.u32 16, %s15
      %p192 = scmp.lt.s32.totalorder %s191, 31
      %s193 = scalar_select %p192, %s191, 31
      %s194 = smul.addr %s193, 2
      %s195 = smul.addr %s194, 4
      %s196 = scalar_lea.vmem %s0, %s195
      %s197 = smul.u32 16, %s15
      %s198 = smul.u32 16, %s15
      %p199 = scmp.lt.s32.totalorder %s198, 31
      %s200 = scalar_select %p199, %s198, 31
      %s201 = smul.addr %s200, 4
      %s202 = scalar_lea.vmem %s4, %s201
      %s203 = smul.u32 16, %s15
      %v205 = vld [vmem:[%s196] sm:$0xff]
      %v206 = vld [vmem:[%s196 + $0x8] sm:$0xff]
      %v207 = vld [vmem:[%s196 + $0x10] sm:$0xff]
      %v208 = vld [vmem:[%s196 + $0x18] sm:$0xff]
      %v209 = vld [vmem:[%s196 + $0x20] sm:$0xff]
      %v210 = vld [vmem:[%s196 + $0x28] sm:$0xff]
      %v211 = vld [vmem:[%s196 + $0x30] sm:$0xff]
      %v212 = vld [vmem:[%s196 + $0x38] sm:$0xff]
      %v213 = vld [vmem:[%s196 + $0x40] sm:$0xff]
      %v214 = vld [vmem:[%s196 + $0x48] sm:$0xff]
      %v215 = vld [vmem:[%s196 + $0x50] sm:$0xff]
      %v216 = vld [vmem:[%s196 + $0x58] sm:$0xff]
      %v217 = vld [vmem:[%s196 + $0x60] sm:$0xff]
      %v218 = vld [vmem:[%s196 + $0x68] sm:$0xff]
      %v219 = vld [vmem:[%s196 + $0x70] sm:$0xff]
      %v220 = vld [vmem:[%s196 + $0x78] sm:$0xff]
      %v221 = vld [vmem:[%s1] sm:$0xf]
      %v222 = vld [vmem:[%s1 + $0x4] sm:$0xf]
      %v223 = vld [vmem:[%s1 + $0x8] sm:$0xf]
      %v224 = vld [vmem:[%s1 + $0xc] sm:$0xf]
      %v225 = vld [vmem:[%s1 + $0x10] sm:$0xf]
      %v226 = vld [vmem:[%s1 + $0x14] sm:$0xf]
      %v227 = vld [vmem:[%s1 + $0x18] sm:$0xf]
      %v228 = vld [vmem:[%s1 + $0x1c] sm:$0xf]
      %v229 = vld [vmem:[%s1 + $0x20] sm:$0xf]
      %v230 = vld [vmem:[%s1 + $0x24] sm:$0xf]
      %v231 = vld [vmem:[%s1 + $0x28] sm:$0xf]
      %v232 = vld [vmem:[%s1 + $0x2c] sm:$0xf]
      %v233 = vld [vmem:[%s1 + $0x30] sm:$0xf]
      %v234 = vld [vmem:[%s1 + $0x34] sm:$0xf]
      %v235 = vld [vmem:[%s1 + $0x38] sm:$0xf]
      %v236 = vld [vmem:[%s1 + $0x3c] sm:$0xf]
      %v237 = vld [vmem:[%s1 + $0x40] sm:$0xf]
      %v238 = vld [vmem:[%s1 + $0x44] sm:$0xf]
      %v255 = vunpack.c.l.b16 %v205
      %v256 = vunpack.c.h.b16 %v205
      %v257 = vunpack.c.l.b16 %v206
      %v258 = vunpack.c.h.b16 %v206
      %v259 = vunpack.c.l.b16 %v207
      %v260 = vunpack.c.h.b16 %v207
      %v261 = vunpack.c.l.b16 %v208
      %v262 = vunpack.c.h.b16 %v208
      %v263 = vunpack.c.l.b16 %v209
      %v264 = vunpack.c.h.b16 %v209
      %v265 = vunpack.c.l.b16 %v210
      %v266 = vunpack.c.h.b16 %v210
      %v267 = vunpack.c.l.b16 %v211
      %v268 = vunpack.c.h.b16 %v211
      %v269 = vunpack.c.l.b16 %v212
      %v270 = vunpack.c.h.b16 %v212
      %v271 = vunpack.c.l.b16 %v213
      %v272 = vunpack.c.h.b16 %v213
      %v273 = vunpack.c.l.b16 %v214
      %v274 = vunpack.c.h.b16 %v214
      %v275 = vunpack.c.l.b16 %v215
      %v276 = vunpack.c.h.b16 %v215
      %v277 = vunpack.c.l.b16 %v216
      %v278 = vunpack.c.h.b16 %v216
      %v279 = vunpack.c.l.b16 %v217
      %v280 = vunpack.c.h.b16 %v217
      %v281 = vunpack.c.l.b16 %v218
      %v282 = vunpack.c.h.b16 %v218
      %v283 = vunpack.c.l.b16 %v219
      %v284 = vunpack.c.h.b16 %v219
      %v285 = vunpack.c.l.b16 %v220
      %v286 = vunpack.c.h.b16 %v220
      %v287 = vpack.c.b16 %v257, %v255
      %v288 = vpack.c.b16 %v258, %v256
      %v289 = vpack.c.b16 %v261, %v259
      %v290 = vpack.c.b16 %v262, %v260
      %v291 = vpack.c.b16 %v265, %v263
      %v292 = vpack.c.b16 %v266, %v264
      %v293 = vpack.c.b16 %v269, %v267
      %v294 = vpack.c.b16 %v270, %v268
      %v295 = vpack.c.b16 %v273, %v271
      %v296 = vpack.c.b16 %v274, %v272
      %v297 = vpack.c.b16 %v277, %v275
      %v298 = vpack.c.b16 %v278, %v276
      %v299 = vpack.c.b16 %v281, %v279
      %v300 = vpack.c.b16 %v282, %v280
      %v301 = vpack.c.b16 %v285, %v283
      %v302 = vpack.c.b16 %v286, %v284
      %v329 = vunpack.c.l.b16 %v221
      %v330 = vunpack.c.l.b16 %v222
      %v331 = vunpack.c.l.b16 %v223
      %v332 = vunpack.c.l.b16 %v224
      %v333 = vunpack.c.l.b16 %v225
      %v334 = vunpack.c.l.b16 %v226
      %v335 = vunpack.c.l.b16 %v227
      %v336 = vunpack.c.l.b16 %v228
      %v337 = vunpack.c.l.b16 %v229
      %v338 = vunpack.c.l.b16 %v230
      %v339 = vunpack.c.l.b16 %v231
      %v340 = vunpack.c.l.b16 %v232
      %v341 = vunpack.c.l.b16 %v233
      %v342 = vunpack.c.l.b16 %v234
      %v343 = vunpack.c.l.b16 %v235
      %v344 = vunpack.c.l.b16 %v236
      %v345 = vunpack.c.l.b16 %v237
      %v346 = vunpack.c.l.b16 %v238
      %v347 = vpack.c.b16 %v330, %v329
      %v348 = vpack.c.b16 %v332, %v331
      %v349 = vpack.c.b16 %v334, %v333
      %v350 = vpack.c.b16 %v336, %v335
      %v351 = vpack.c.b16 %v338, %v337
      %v352 = vpack.c.b16 %v340, %v339
      %v353 = vpack.c.b16 %v342, %v341
      %v354 = vpack.c.b16 %v344, %v343
      %v355 = vpack.c.b16 %v346, %v345
      %vm365 = vcmask 130048
      %v367 = vsel %vm365, %v288, 0
      %v370 = vsel %vm365, %v290, 0
      %v373 = vsel %vm365, %v292, 0
      %v376 = vsel %vm365, %v294, 0
      %v379 = vsel %vm365, %v296, 0
      %v382 = vsel %vm365, %v298, 0
      %v385 = vsel %vm365, %v300, 0
      %v388 = vsel %vm365, %v302, 0
      %390 = vmatprep.subr.bf16.mxu0 0
      %391 = vmatpush1.bf16.msra.mxu0 %v347
      %392 = vmatprep.subr.bf16.mxu0 0
      %393 = vmatpush1.bf16.msra.mxu0 %v348
      %394 = vmatprep.subr.bf16.mxu0 0
      %395 = vmatpush1.bf16.msra.mxu0 %v349
      %396 = vmatprep.subr.bf16.mxu0 0
      %397 = vmatpush1.bf16.msra.mxu0 %v350
      %398 = vmatprep.subr.bf16.mxu0 0
      %399 = vmatpush1.bf16.msra.mxu0 %v351
      %400 = vmatprep.subr.bf16.mxu0 0
      %401 = vmatpush1.bf16.msra.mxu0 %v352
      %402 = vmatprep.subr.bf16.mxu0 0
      %403 = vmatpush1.bf16.msra.mxu0 %v353
      %404 = vmatprep.subr.bf16.mxu0 0
      %405 = vmatpush1.bf16.msra.mxu0 %v354
      %406 = vmatprep.subr.bf16.mxu0 0
      %407 = vmatpush1.bf16.msra.mxu0 %v355
      %408 = vmatprep.subr.bf16.mxu0 0
      %409 = vmatpush1.bf16.msra.mxu0 0
      %410 = vmatprep.subr.bf16.mxu0 0
      %411 = vmatpush1.bf16.msra.mxu0 0
      %412 = vmatprep.subr.bf16.mxu0 0
      %413 = vmatpush1.bf16.msra.mxu0 0
      %414 = vmatprep.subr.bf16.mxu0 0
      %415 = vmatpush1.bf16.msra.mxu0 0
      %416 = vmatprep.subr.bf16.mxu0 0
      %417 = vmatpush1.bf16.msra.mxu0 0
      %418 = vmatprep.subr.bf16.mxu0 0
      %419 = vmatpush1.bf16.msra.mxu0 0
      %420 = vmatprep.subr.bf16.mxu0 0
      %421 = vmatpush1.bf16.msra.mxu0 0
      %422 = vmatprep.mubr.bf16.mxu0 %v367
      %423 = vmatmul.mubr.bf16.gmra.mrb[0].mxu0 %v287
      %v424 = vpop.f32.mrb[0].mxu0
      %v425 = vadd.f32 0.0, %v424
      %v426 = vpop.f32.mrb[0].mxu0
      %v427 = vpop.f32.mrb[0].mxu0
      %v428 = vadd.f32 0.0, %v427
      %v429 = vpop.f32.mrb[0].mxu0
      %430 = vmatprep.mubr.bf16.mxu0 %v370
      %431 = vmatmul.mubr.bf16.gmra.mrb[0].mxu0 %v289
      %v432 = vpop.f32.mrb[0].mxu0
      %v433 = vadd.f32 0.0, %v432
      %v434 = vpop.f32.mrb[0].mxu0
      %v435 = vpop.f32.mrb[0].mxu0
      %v436 = vadd.f32 0.0, %v435
      %v437 = vpop.f32.mrb[0].mxu0
      %438 = vmatprep.mubr.bf16.mxu0 %v373
      %439 = vmatmul.mubr.bf16.gmra.mrb[0].mxu0 %v291
      %v440 = vpop.f32.mrb[0].mxu0
      %v441 = vadd.f32 0.0, %v440
      %v442 = vpop.f32.mrb[0].mxu0
      %v443 = vpop.f32.mrb[0].mxu0
      %v444 = vadd.f32 0.0, %v443
      %v445 = vpop.f32.mrb[0].mxu0
      %446 = vmatprep.mubr.bf16.mxu0 %v376
      %447 = vmatmul.mubr.bf16.gmra.mrb[0].mxu0 %v293
      %v448 = vpop.f32.mrb[0].mxu0
      %v449 = vadd.f32 0.0, %v448
      %v450 = vpop.f32.mrb[0].mxu0
      %v451 = vpop.f32.mrb[0].mxu0
      %v452 = vadd.f32 0.0, %v451
      %v453 = vpop.f32.mrb[0].mxu0
      %454 = vmatprep.mubr.bf16.mxu0 %v379
      %455 = vmatmul.mubr.bf16.gmra.mrb[0].mxu0 %v295
      %v456 = vpop.f32.mrb[0].mxu0
      %v457 = vadd.f32 0.0, %v456
      %v458 = vpop.f32.mrb[0].mxu0
      %v459 = vpop.f32.mrb[0].mxu0
      %v460 = vadd.f32 0.0, %v459
      %v461 = vpop.f32.mrb[0].mxu0
      %462 = vmatprep.mubr.bf16.mxu0 %v382
      %463 = vmatmul.mubr.bf16.gmra.mrb[0].mxu0 %v297
      %v464 = vpop.f32.mrb[0].mxu0
      %v465 = vadd.f32 0.0, %v464
      %v466 = vpop.f32.mrb[0].mxu0
      %v467 = vpop.f32.mrb[0].mxu0
      %v468 = vadd.f32 0.0, %v467
      %v469 = vpop.f32.mrb[0].mxu0
      %470 = vmatprep.mubr.bf16.mxu0 %v385
      %471 = vmatmul.mubr.bf16.gmra.mrb[0].mxu0 %v299
      %v472 = vpop.f32.mrb[0].mxu0
      %v473 = vadd.f32 0.0, %v472
      %v474 = vpop.f32.mrb[0].mxu0
      %v475 = vpop.f32.mrb[0].mxu0
      %v476 = vadd.f32 0.0, %v475
      %v477 = vpop.f32.mrb[0].mxu0
      %478 = vmatprep.mubr.bf16.mxu0 %v388
      %479 = vmatmul.mubr.bf16.gmra.mrb[0].mxu0 %v301
      %v480 = vpop.f32.mrb[0].mxu0
      %v481 = vadd.f32 0.0, %v480
      %v482 = vpop.f32.mrb[0].mxu0
      %v483 = vpop.f32.mrb[0].mxu0
      %v484 = vadd.f32 0.0, %v483
      %v485 = vpop.f32.mrb[0].mxu0
      %486 = vdwg.mxu0
      %v487 = vld [vmem:[%s2] sm:$0x1]
      %v489 = vlaneseq
      %v490 = vshrl.u32 %v489, 7
      %v491 = vsub.s32 0, %v490
      %v492 = vrot.slane %v487, %v491
      %v494 = vmul.f32 %v425, %v492
      %v495 = vmul.f32 %v428, %v492
      %v496 = vmul.f32 %v433, %v492
      %v497 = vmul.f32 %v436, %v492
      %v498 = vmul.f32 %v441, %v492
      %v499 = vmul.f32 %v444, %v492
      %v500 = vmul.f32 %v449, %v492
      %v501 = vmul.f32 %v452, %v492
      %v502 = vmul.f32 %v457, %v492
      %v503 = vmul.f32 %v460, %v492
      %v504 = vmul.f32 %v465, %v492
      %v505 = vmul.f32 %v468, %v492
      %v506 = vmul.f32 %v473, %v492
      %v507 = vmul.f32 %v476, %v492
      %v508 = vmul.f32 %v481, %v492
      %v509 = vmul.f32 %v484, %v492
      %v510 = vld [vmem:[%s3] sm:$0x1]
      %v512 = vlaneseq
      %v513 = vshrl.u32 %v512, 7
      %v514 = vsub.s32 0, %v513
      %v515 = vrot.slane %v510, %v514
      %v517 = vadd.f32 %v494, %v515
      %v518 = vadd.f32 %v495, %v515
      %v519 = vadd.f32 %v496, %v515
      %v520 = vadd.f32 %v497, %v515
      %v521 = vadd.f32 %v498, %v515
      %v522 = vadd.f32 %v499, %v515
      %v523 = vadd.f32 %v500, %v515
      %v524 = vadd.f32 %v501, %v515
      %v525 = vadd.f32 %v502, %v515
      %v526 = vadd.f32 %v503, %v515
      %v527 = vadd.f32 %v504, %v515
      %v528 = vadd.f32 %v505, %v515
      %v529 = vadd.f32 %v506, %v515
      %v530 = vadd.f32 %v507, %v515
      %v531 = vadd.f32 %v508, %v515
      %v532 = vadd.f32 %v509, %v515
      %v533 = vmax.f32 %v517, 0.0
      %v534 = vmax.f32 %v518, 0.0
      %v535 = vmax.f32 %v519, 0.0
      %v536 = vmax.f32 %v520, 0.0
      %v537 = vmax.f32 %v521, 0.0
      %v538 = vmax.f32 %v522, 0.0
      %v539 = vmax.f32 %v523, 0.0
      %v540 = vmax.f32 %v524, 0.0
      %v541 = vmax.f32 %v525, 0.0
      %v542 = vmax.f32 %v526, 0.0
      %v543 = vmax.f32 %v527, 0.0
      %v544 = vmax.f32 %v528, 0.0
      %v545 = vmax.f32 %v529, 0.0
      %v546 = vmax.f32 %v530, 0.0
      %v547 = vmax.f32 %v531, 0.0
      %v548 = vmax.f32 %v532, 0.0
      %v549 = vpack.c.bf16 %v534, %v533
      %v550 = vpack.c.bf16 %v536, %v535
      %v551 = vpack.c.bf16 %v538, %v537
      %v552 = vpack.c.bf16 %v540, %v539
      %v553 = vpack.c.bf16 %v542, %v541
      %v554 = vpack.c.bf16 %v544, %v543
      %v555 = vpack.c.bf16 %v546, %v545
      %v556 = vpack.c.bf16 %v548, %v547
      %v565 = vunpack.c.l.b16 %v549
      %v566 = vunpack.c.h.b16 %v549
      %v567 = vunpack.c.l.b16 %v550
      %v568 = vunpack.c.h.b16 %v550
      %v569 = vunpack.c.l.b16 %v551
      %v570 = vunpack.c.h.b16 %v551
      %v571 = vunpack.c.l.b16 %v552
      %v572 = vunpack.c.h.b16 %v552
      %v573 = vunpack.c.l.b16 %v553
      %v574 = vunpack.c.h.b16 %v553
      %v575 = vunpack.c.l.b16 %v554
      %v576 = vunpack.c.h.b16 %v554
      %v577 = vunpack.c.l.b16 %v555
      %v578 = vunpack.c.h.b16 %v555
      %v579 = vunpack.c.l.b16 %v556
      %v580 = vunpack.c.h.b16 %v556
      %v581 = vpack.c.b16 %v565, %v565
      %v582 = vpack.c.b16 %v566, %v566
      %v583 = vpack.c.b16 %v567, %v567
      %v584 = vpack.c.b16 %v568, %v568
      %v585 = vpack.c.b16 %v569, %v569
      %v586 = vpack.c.b16 %v570, %v570
      %v587 = vpack.c.b16 %v571, %v571
      %v588 = vpack.c.b16 %v572, %v572
      %v589 = vpack.c.b16 %v573, %v573
      %v590 = vpack.c.b16 %v574, %v574
      %v591 = vpack.c.b16 %v575, %v575
      %v592 = vpack.c.b16 %v576, %v576
      %v593 = vpack.c.b16 %v577, %v577
      %v594 = vpack.c.b16 %v578, %v578
      %v595 = vpack.c.b16 %v579, %v579
      %v596 = vpack.c.b16 %v580, %v580
      %613 = vst [vmem:[%s202] sm:$0xf] %v581
      %614 = vst [vmem:[%s202 + $0x4] sm:$0xf] %v582
      %615 = vst [vmem:[%s202 + $0x8] sm:$0xf] %v583
      %616 = vst [vmem:[%s202 + $0xc] sm:$0xf] %v584
      %617 = vst [vmem:[%s202 + $0x10] sm:$0xf] %v585
      %618 = vst [vmem:[%s202 + $0x14] sm:$0xf] %v586
      %619 = vst [vmem:[%s202 + $0x18] sm:$0xf] %v587
      %620 = vst [vmem:[%s202 + $0x1c] sm:$0xf] %v588
      %621 = vst [vmem:[%s202 + $0x20] sm:$0xf] %v589
      %622 = vst [vmem:[%s202 + $0x24] sm:$0xf] %v590
      %623 = vst [vmem:[%s202 + $0x28] sm:$0xf] %v591
      %624 = vst [vmem:[%s202 + $0x2c] sm:$0xf] %v592
      %625 = vst [vmem:[%s202 + $0x30] sm:$0xf] %v593
      %626 = vst [vmem:[%s202 + $0x34] sm:$0xf] %v594
      %627 = vst [vmem:[%s202 + $0x38] sm:$0xf] %v595
      %628 = vst [vmem:[%s202 + $0x3c] sm:$0xf] %v596
      %s629 = smul.u32 16, %s15
      %p630 = scmp.lt.s32.totalorder %s629, 31
      %s631 = scalar_select %p630, %s629, 31
      %s632 = smul.addr %s631, 4
      %s633 = scalar_lea.vmem %s4, %s632
      // Predicated region
      $region37: #{features_extractor_forward.8} parent=35 // pred_check
        %p634 = pneg %p122
      $region38: #{features_extractor_forward.8} parent=35 // pred_check_branch
        %636 = sbr.rel (%p634) target = $region40
      $region39: #{features_extractor_forward.8} parent=35 // pred_region
        %s637 = smul.u32 16, %s15
      $region40: #{features_extractor_forward.8} parent=35 // pred_fallthru
        _
    $region36: #{features_extractor_forward.8} parent=5 // pred_fallthru
      _
    %p638 = scmp.le.s32.totalorder 2, %s10
    // Predicated region
    $region41: #{features_extractor_forward.8} parent=5 // pred_check
      %p639 = pneg %p638
    $region42: #{features_extractor_forward.8} parent=5 // pred_check_branch
      %641 = sbr.rel (%p639) target = $region44
    $region43: #{features_extractor_forward.8} parent=5 // pred_region
      %s642 = ssub.s32 %s10, 2
      // Predicated region
      $region45: #{features_extractor_forward.8} parent=43 // pred_check
        %p643 = pneg %p128
      $region46: #{features_extractor_forward.8} parent=43 // pred_check_branch
        %645 = sbr.rel (%p643) target = $region48
      $region47: #{features_extractor_forward.8} parent=43 // pred_region
        %s646 = smul.u32 16, %s16
        %p647 = scmp.lt.s32.totalorder %s646, 31
        %s648 = scalar_select %p647, %s646, 31
        %s649 = smul.addr %s648, 4
        %s650 = scalar_lea.vmem %s4, %s649
      $region48: #{features_extractor_forward.8} parent=43 // pred_fallthru
        _
    $region44: #{features_extractor_forward.8} parent=5 // pred_fallthru
      _
  $region6: #{features_extractor_forward.8} parent=0 // loop_footer
    %s14 = sadd.s32 1, %s10
  $region7: #{features_extractor_forward.8} parent=0 // loop_footer_branch
    %9 = sbr.rel target = $region3
  $region8: #{features_extractor_forward.8} parent=0 // loop_exit
    _

// kernel: features_extractor_forward.9
$region0: #{features_extractor_forward.9}
  #allocation0 [shape = 'u32[]', space=smem, size = 0x4, offset = 0x4, fixed_abs, tag = 'smem constant byte address 0x4 - core index']
  #allocation1 [shape = 'u32[144,128]{1,0:T(1,128)}', space=vmem, size = 0x12000, scoped, tag = 'internal scratch']
  %s0 = inlined_call_operand.vmem [shape: bf16[256,144], index: 0, kind: input, shape index: {}]
  %s1 = inlined_call_operand.vmem [shape: bf16[256,128], index: 1, kind: input, shape index: {}]
  %s2 = inlined_call_operand.vmem [shape: bf16[144,128], index: 2, kind: input, shape index: {}]
  %s3 = inlined_call_operand.vmem [shape: f32[1,128], index: 3, kind: input, shape index: {}]
  %s4 = inlined_call_operand.vmem [shape: f32[1,128], index: 4, kind: input, shape index: {}]
  %s5 = inlined_call_operand.vmem [shape: bf16[256,128], index: 5, kind: output, shape index: {}]
  %s6 = sld [smem:[#allocation0]]
  $region53: #{features_extractor_forward.9} parent=0
    _
  %s8 = ssub.s32 1, %s6
  %s9 = scalar_select 0, %s8, %s6
  loop: start=0, step=1, limit=4
  $region2: #{features_extractor_forward.9} parent=0 // loop_pre_header
    _
  $region3: #{features_extractor_forward.9} parent=0 // loop_header
    %s11 = sphi 0, %s15
    %p12 = scmp.ge.s32.totalorder %s11, 4
    %s21 = sphi 0, %s23
    %s24 = sphi 0, %s21
    %s25 = sphi 0, %s24
    %s41 = sphi 0, %s25
    %s47 = sphi 0, %s49
    %s50 = sphi 0, %s47
    %s51 = sphi 0, %s50
    %s67 = sphi 0, %s51
    %s71 = sphi 0, %s71
    %s73 = sphi 0, %s71
    %s74 = sphi 0, %s73
    %s88 = sphi 0, %s74
    %s92 = sphi 0, %s92
    %s94 = sphi 0, %s92
    %s95 = sphi 0, %s94
    %s109 = sphi 0, %s95
    %s113 = sphi 0, %s113
    %s115 = sphi 0, %s113
    %s116 = sphi 0, %s115
    %s130 = sphi 0, %s116
    %s136 = sphi 0, %s138
    %s139 = sphi 0, %s136
    %s140 = sphi 0, %s139
    %s156 = sphi 0, %s140
  $region4: #{features_extractor_forward.9} parent=0 // loop_header_branch
    %14 = sbr.rel (%p12) target = $region8
  $region5: #{features_extractor_forward.9} parent=0 // loop_body
    %s16 = ssub.s32 %s11, 1
    %s17 = ssub.s32 %s11, 2
    %s18 = sadd.s32 %s11, 1
    %s19 = ssub.s32 %s11, %s18
    %p20 = scmp.eq.s32.totalorder %s19, 0
    %s22 = sadd.s32 %s21, 1
    %s23 = scalar_select %p20, %s21, %s22
    %p26 = pneg %p20
    %p27 = scmp.eq.s32.totalorder %s11, 1
    %p28 = por %p26, %p27
    %p29 = scmp.ne.s32.totalorder %s21, %s24
    %p30 = scmp.eq.s32.totalorder %s11, 0
    %p31 = por %p29, %p30
    %p32 = scmp.ne.s32.totalorder %s21, %s24
    %p33 = scmp.eq.s32.totalorder %s16, 1
    %p34 = por %p32, %p33
    %p35 = scmp.ne.s32.totalorder %s24, %s25
    %p36 = scmp.eq.s32.totalorder %s16, 0
    %p37 = por %p35, %p36
    %p38 = scmp.ne.s32.totalorder %s24, %s25
    %p39 = scmp.eq.s32.totalorder %s17, 1
    %p40 = por %p38, %p39
    %p42 = scmp.ne.s32.totalorder %s25, %s41
    %p43 = scmp.eq.s32.totalorder %s17, 0
    %p44 = por %p42, %p43
    %s45 = ssub.s32 %s11, %s18
    %p46 = scmp.eq.s32.totalorder %s45, 0
    %s48 = sadd.s32 %s47, 1
    %s49 = scalar_select %p46, %s47, %s48
    %p52 = pneg %p46
    %p53 = scmp.eq.s32.totalorder %s11, 1
    %p54 = por %p52, %p53
    %p55 = scmp.ne.s32.totalorder %s47, %s50
    %p56 = scmp.eq.s32.totalorder %s11, 0
    %p57 = por %p55, %p56
    %p58 = scmp.ne.s32.totalorder %s47, %s50
    %p59 = scmp.eq.s32.totalorder %s16, 1
    %p60 = por %p58, %p59
    %p61 = scmp.ne.s32.totalorder %s50, %s51
    %p62 = scmp.eq.s32.totalorder %s16, 0
    %p63 = por %p61, %p62
    %p64 = scmp.ne.s32.totalorder %s50, %s51
    %p65 = scmp.eq.s32.totalorder %s17, 1
    %p66 = por %p64, %p65
    %p68 = scmp.ne.s32.totalorder %s51, %s67
    %p69 = scmp.eq.s32.totalorder %s17, 0
    %p70 = por %p68, %p69
    %s72 = sadd.s32 %s71, 1
    %p75 = scmp.eq.s32.totalorder %s11, 1
    %p76 = scmp.ne.s32.totalorder %s71, %s73
    %p77 = scmp.eq.s32.totalorder %s11, 0
    %p78 = por %p76, %p77
    %p79 = scmp.ne.s32.totalorder %s71, %s73
    %p80 = scmp.eq.s32.totalorder %s16, 1
    %p81 = por %p79, %p80
    %p82 = scmp.ne.s32.totalorder %s73, %s74
    %p83 = scmp.eq.s32.totalorder %s16, 0
    %p84 = por %p82, %p83
    %p85 = scmp.ne.s32.totalorder %s73, %s74
    %p86 = scmp.eq.s32.totalorder %s17, 1
    %p87 = por %p85, %p86
    %p89 = scmp.ne.s32.totalorder %s74, %s88
    %p90 = scmp.eq.s32.totalorder %s17, 0
    %p91 = por %p89, %p90
    %s93 = sadd.s32 %s92, 1
    %p96 = scmp.eq.s32.totalorder %s11, 1
    %p97 = scmp.ne.s32.totalorder %s92, %s94
    %p98 = scmp.eq.s32.totalorder %s11, 0
    %p99 = por %p97, %p98
    %p100 = scmp.ne.s32.totalorder %s92, %s94
    %p101 = scmp.eq.s32.totalorder %s16, 1
    %p102 = por %p100, %p101
    %p103 = scmp.ne.s32.totalorder %s94, %s95
    %p104 = scmp.eq.s32.totalorder %s16, 0
    %p105 = por %p103, %p104
    %p106 = scmp.ne.s32.totalorder %s94, %s95
    %p107 = scmp.eq.s32.totalorder %s17, 1
    %p108 = por %p106, %p107
    %p110 = scmp.ne.s32.totalorder %s95, %s109
    %p111 = scmp.eq.s32.totalorder %s17, 0
    %p112 = por %p110, %p111
    %s114 = sadd.s32 %s113, 1
    %p117 = scmp.eq.s32.totalorder %s11, 1
    %p118 = scmp.ne.s32.totalorder %s113, %s115
    %p119 = scmp.eq.s32.totalorder %s11, 0
    %p120 = por %p118, %p119
    %p121 = scmp.ne.s32.totalorder %s113, %s115
    %p122 = scmp.eq.s32.totalorder %s16, 1
    %p123 = por %p121, %p122
    %p124 = scmp.ne.s32.totalorder %s115, %s116
    %p125 = scmp.eq.s32.totalorder %s16, 0
    %p126 = por %p124, %p125
    %p127 = scmp.ne.s32.totalorder %s115, %s116
    %p128 = scmp.eq.s32.totalorder %s17, 1
    %p129 = por %p127, %p128
    %p131 = scmp.ne.s32.totalorder %s116, %s130
    %p132 = scmp.eq.s32.totalorder %s17, 0
    %p133 = por %p131, %p132
    %s134 = ssub.s32 %s11, %s18
    %p135 = scmp.eq.s32.totalorder %s134, 0
    %s137 = sadd.s32 %s136, 1
    %s138 = scalar_select %p135, %s136, %s137
    %p141 = pneg %p135
    %p142 = scmp.eq.s32.totalorder %s11, 1
    %p143 = por %p141, %p142
    %p144 = scmp.ne.s32.totalorder %s136, %s139
    %p145 = scmp.eq.s32.totalorder %s11, 0
    %p146 = por %p144, %p145
    %p147 = scmp.ne.s32.totalorder %s136, %s139
    %p148 = scmp.eq.s32.totalorder %s16, 1
    %p149 = por %p147, %p148
    %p150 = scmp.ne.s32.totalorder %s139, %s140
    %p151 = scmp.eq.s32.totalorder %s16, 0
    %p152 = por %p150, %p151
    %p153 = scmp.ne.s32.totalorder %s139, %s140
    %p154 = scmp.eq.s32.totalorder %s17, 1
    %p155 = por %p153, %p154
    %p157 = scmp.ne.s32.totalorder %s140, %s156
    %p158 = scmp.eq.s32.totalorder %s17, 0
    %p159 = por %p157, %p158
    %p160 = scmp.le.s32.totalorder 1, %s11
    %p161 = scmp.lt.s32.totalorder %s11, 3
    %p162 = pnand %p160, %p161
    %p163 = pneg %p162
    // Predicated region
    $region9: #{features_extractor_forward.9} parent=5 // pred_check
      _
    $region10: #{features_extractor_forward.9} parent=5 // pred_check_branch
      %165 = sbr.rel (%p162) target = $region12
    $region11: #{features_extractor_forward.9} parent=5 // pred_region
      %s166 = ssub.s32 %s11, 1
      // Predicated region
      $region13: #{features_extractor_forward.9} parent=11 // pred_check
        %p167 = pneg %p84
      $region14: #{features_extractor_forward.9} parent=11 // pred_check_branch
        %169 = sbr.rel (%p167) target = $region16
      $region15: #{features_extractor_forward.9} parent=11 // pred_region
        _
      $region16: #{features_extractor_forward.9} parent=11 // pred_fallthru
        _
      // Predicated region
      $region17: #{features_extractor_forward.9} parent=11 // pred_check
        %p170 = pneg %p105
      $region18: #{features_extractor_forward.9} parent=11 // pred_check_branch
        %172 = sbr.rel (%p170) target = $region20
      $region19: #{features_extractor_forward.9} parent=11 // pred_region
        _
      $region20: #{features_extractor_forward.9} parent=11 // pred_fallthru
        _
      // Predicated region
      $region21: #{features_extractor_forward.9} parent=11 // pred_check
        %p173 = pneg %p126
      $region22: #{features_extractor_forward.9} parent=11 // pred_check_branch
        %175 = sbr.rel (%p173) target = $region24
      $region23: #{features_extractor_forward.9} parent=11 // pred_region
        _
      $region24: #{features_extractor_forward.9} parent=11 // pred_fallthru
        _
    $region12: #{features_extractor_forward.9} parent=5 // pred_fallthru
      _
    %p176 = scmp.lt.s32.totalorder %s11, 2
    // Predicated region
    $region25: #{features_extractor_forward.9} parent=5 // pred_check
      %p177 = pneg %p176
    $region26: #{features_extractor_forward.9} parent=5 // pred_check_branch
      %179 = sbr.rel (%p177) target = $region28
    $region27: #{features_extractor_forward.9} parent=5 // pred_region
      // Predicated region
      $region29: #{features_extractor_forward.9} parent=27 // pred_check
        %p180 = pneg %p31
      $region30: #{features_extractor_forward.9} parent=27 // pred_check_branch
        %182 = sbr.rel (%p180) target = $region32
      $region31: #{features_extractor_forward.9} parent=27 // pred_region
        %s183 = smul.u32 16, %s11
        %p184 = scmp.lt.s32.totalorder %s183, 31
        %s185 = scalar_select %p184, %s183, 31
        %s186 = smul.addr %s185, 2
        %s187 = smul.addr %s186, 4
        %s188 = scalar_lea.vmem %s0, %s187
        %s189 = smul.u32 16, %s11
      $region32: #{features_extractor_forward.9} parent=27 // pred_fallthru
        _
      // Predicated region
      $region33: #{features_extractor_forward.9} parent=27 // pred_check
        %p190 = pneg %p57
      $region34: #{features_extractor_forward.9} parent=27 // pred_check_branch
        %192 = sbr.rel (%p190) target = $region36
      $region35: #{features_extractor_forward.9} parent=27 // pred_region
        %s193 = smul.u32 16, %s11
        %p194 = scmp.lt.s32.totalorder %s193, 31
        %s195 = scalar_select %p194, %s193, 31
        %s196 = smul.addr %s195, 4
        %s197 = scalar_lea.vmem %s1, %s196
        %s198 = smul.u32 16, %s11
      $region36: #{features_extractor_forward.9} parent=27 // pred_fallthru
        _
    $region28: #{features_extractor_forward.9} parent=5 // pred_fallthru
      _
    %p199 = scmp.le.s32.totalorder 1, %s11
    %p200 = scmp.lt.s32.totalorder %s11, 3
    %p201 = pnand %p199, %p200
    %p202 = pneg %p201
    // Predicated region
    $region37: #{features_extractor_forward.9} parent=5 // pred_check
      _
    $region38: #{features_extractor_forward.9} parent=5 // pred_check_branch
      %204 = sbr.rel (%p201) target = $region40
    $region39: #{features_extractor_forward.9} parent=5 // pred_region
      %s205 = ssub.s32 %s11, 1
      %s206 = smul.u32 16, %s16
      %p207 = scmp.lt.s32.totalorder %s206, 31
      %s208 = scalar_select %p207, %s206, 31
      %s209 = smul.addr %s208, 2
      %s210 = smul.addr %s209, 4
      %s211 = scalar_lea.vmem %s0, %s210
      %p212 = pneg %p37
      %p213 = pneg %p34
      %s214 = smul.u32 16, %s16
      %p215 = scmp.lt.s32.totalorder %s214, 31
      %s216 = scalar_select %p215, %s214, 31
      %s217 = smul.addr %s216, 4
      %s218 = scalar_lea.vmem %s1, %s217
      %p219 = pneg %p63
      %p220 = pneg %p60
      %p221 = pneg %p84
      %p222 = pneg %p81
      %p223 = pneg %p105
      %p224 = pneg %p102
      %p225 = pneg %p126
      %p226 = pneg %p123
      %p227 = pneg %p152
      %p228 = pneg %p149
      %s229 = smul.u32 16, %s16
      %p230 = scmp.lt.s32.totalorder %s229, 31
      %s231 = scalar_select %p230, %s229, 31
      %s232 = smul.addr %s231, 4
      %s233 = scalar_lea.vmem %s5, %s232
      %s234 = smul.u32 16, %s16
      %p235 = scmp.lt.s32.totalorder %s234, 31
      %s236 = scalar_select %p235, %s234, 31
      %s237 = smul.addr %s236, 2
      %s238 = smul.addr %s237, 4
      %s239 = scalar_lea.vmem %s0, %s238
      %s240 = smul.u32 16, %s16
      %s241 = smul.u32 16, %s16
      %p242 = scmp.lt.s32.totalorder %s241, 31
      %s243 = scalar_select %p242, %s241, 31
      %s244 = smul.addr %s243, 4
      %s245 = scalar_lea.vmem %s1, %s244
      %s246 = smul.u32 16, %s16
      %s247 = smul.u32 16, %s16
      %p248 = scmp.lt.s32.totalorder %s247, 31
      %s249 = scalar_select %p248, %s247, 31
      %s250 = smul.addr %s249, 4
      %s251 = scalar_lea.vmem %s5, %s250
      %s252 = smul.u32 16, %s16
      %v254 = vld [vmem:[%s239] sm:$0xff]
      %v255 = vld [vmem:[%s239 + $0x8] sm:$0xff]
      %v256 = vld [vmem:[%s239 + $0x10] sm:$0xff]
      %v257 = vld [vmem:[%s239 + $0x18] sm:$0xff]
      %v258 = vld [vmem:[%s239 + $0x20] sm:$0xff]
      %v259 = vld [vmem:[%s239 + $0x28] sm:$0xff]
      %v260 = vld [vmem:[%s239 + $0x30] sm:$0xff]
      %v261 = vld [vmem:[%s239 + $0x38] sm:$0xff]
      %v262 = vld [vmem:[%s239 + $0x40] sm:$0xff]
      %v263 = vld [vmem:[%s239 + $0x48] sm:$0xff]
      %v264 = vld [vmem:[%s239 + $0x50] sm:$0xff]
      %v265 = vld [vmem:[%s239 + $0x58] sm:$0xff]
      %v266 = vld [vmem:[%s239 + $0x60] sm:$0xff]
      %v267 = vld [vmem:[%s239 + $0x68] sm:$0xff]
      %v268 = vld [vmem:[%s239 + $0x70] sm:$0xff]
      %v269 = vld [vmem:[%s239 + $0x78] sm:$0xff]
      %v270 = vld [vmem:[%s2] sm:$0xf]
      %v271 = vld [vmem:[%s2 + $0x4] sm:$0xf]
      %v272 = vld [vmem:[%s2 + $0x8] sm:$0xf]
      %v273 = vld [vmem:[%s2 + $0xc] sm:$0xf]
      %v274 = vld [vmem:[%s2 + $0x10] sm:$0xf]
      %v275 = vld [vmem:[%s2 + $0x14] sm:$0xf]
      %v276 = vld [vmem:[%s2 + $0x18] sm:$0xf]
      %v277 = vld [vmem:[%s2 + $0x1c] sm:$0xf]
      %v278 = vld [vmem:[%s2 + $0x20] sm:$0xf]
      %v279 = vld [vmem:[%s2 + $0x24] sm:$0xf]
      %v280 = vld [vmem:[%s2 + $0x28] sm:$0xf]
      %v281 = vld [vmem:[%s2 + $0x2c] sm:$0xf]
      %v282 = vld [vmem:[%s2 + $0x30] sm:$0xf]
      %v283 = vld [vmem:[%s2 + $0x34] sm:$0xf]
      %v284 = vld [vmem:[%s2 + $0x38] sm:$0xf]
      %v285 = vld [vmem:[%s2 + $0x3c] sm:$0xf]
      %v286 = vld [vmem:[%s2 + $0x40] sm:$0xf]
      %v287 = vld [vmem:[%s2 + $0x44] sm:$0xf]
      %v304 = vunpack.c.l.b16 %v254
      %v305 = vunpack.c.h.b16 %v254
      %v306 = vunpack.c.l.b16 %v255
      %v307 = vunpack.c.h.b16 %v255
      %v308 = vunpack.c.l.b16 %v256
      %v309 = vunpack.c.h.b16 %v256
      %v310 = vunpack.c.l.b16 %v257
      %v311 = vunpack.c.h.b16 %v257
      %v312 = vunpack.c.l.b16 %v258
      %v313 = vunpack.c.h.b16 %v258
      %v314 = vunpack.c.l.b16 %v259
      %v315 = vunpack.c.h.b16 %v259
      %v316 = vunpack.c.l.b16 %v260
      %v317 = vunpack.c.h.b16 %v260
      %v318 = vunpack.c.l.b16 %v261
      %v319 = vunpack.c.h.b16 %v261
      %v320 = vunpack.c.l.b16 %v262
      %v321 = vunpack.c.h.b16 %v262
      %v322 = vunpack.c.l.b16 %v263
      %v323 = vunpack.c.h.b16 %v263
      %v324 = vunpack.c.l.b16 %v264
      %v325 = vunpack.c.h.b16 %v264
      %v326 = vunpack.c.l.b16 %v265
      %v327 = vunpack.c.h.b16 %v265
      %v328 = vunpack.c.l.b16 %v266
      %v329 = vunpack.c.h.b16 %v266
      %v330 = vunpack.c.l.b16 %v267
      %v331 = vunpack.c.h.b16 %v267
      %v332 = vunpack.c.l.b16 %v268
      %v333 = vunpack.c.h.b16 %v268
      %v334 = vunpack.c.l.b16 %v269
      %v335 = vunpack.c.h.b16 %v269
      %v336 = vpack.c.b16 %v306, %v304
      %v337 = vpack.c.b16 %v307, %v305
      %v338 = vpack.c.b16 %v310, %v308
      %v339 = vpack.c.b16 %v311, %v309
      %v340 = vpack.c.b16 %v314, %v312
      %v341 = vpack.c.b16 %v315, %v313
      %v342 = vpack.c.b16 %v318, %v316
      %v343 = vpack.c.b16 %v319, %v317
      %v344 = vpack.c.b16 %v322, %v320
      %v345 = vpack.c.b16 %v323, %v321
      %v346 = vpack.c.b16 %v326, %v324
      %v347 = vpack.c.b16 %v327, %v325
      %v348 = vpack.c.b16 %v330, %v328
      %v349 = vpack.c.b16 %v331, %v329
      %v350 = vpack.c.b16 %v334, %v332
      %v351 = vpack.c.b16 %v335, %v333
      %v378 = vunpack.c.l.b16 %v270
      %v379 = vunpack.c.l.b16 %v271
      %v380 = vunpack.c.l.b16 %v272
      %v381 = vunpack.c.l.b16 %v273
      %v382 = vunpack.c.l.b16 %v274
      %v383 = vunpack.c.l.b16 %v275
      %v384 = vunpack.c.l.b16 %v276
      %v385 = vunpack.c.l.b16 %v277
      %v386 = vunpack.c.l.b16 %v278
      %v387 = vunpack.c.l.b16 %v279
      %v388 = vunpack.c.l.b16 %v280
      %v389 = vunpack.c.l.b16 %v281
      %v390 = vunpack.c.l.b16 %v282
      %v391 = vunpack.c.l.b16 %v283
      %v392 = vunpack.c.l.b16 %v284
      %v393 = vunpack.c.l.b16 %v285
      %v394 = vunpack.c.l.b16 %v286
      %v395 = vunpack.c.l.b16 %v287
      %v396 = vpack.c.b16 %v379, %v378
      %v397 = vpack.c.b16 %v381, %v380
      %v398 = vpack.c.b16 %v383, %v382
      %v399 = vpack.c.b16 %v385, %v384
      %v400 = vpack.c.b16 %v387, %v386
      %v401 = vpack.c.b16 %v389, %v388
      %v402 = vpack.c.b16 %v391, %v390
      %v403 = vpack.c.b16 %v393, %v392
      %v404 = vpack.c.b16 %v395, %v394
      %vm414 = vcmask 130048
      %v416 = vsel %vm414, %v337, 0
      %v419 = vsel %vm414, %v339, 0
      %v422 = vsel %vm414, %v341, 0
      %v425 = vsel %vm414, %v343, 0
      %v428 = vsel %vm414, %v345, 0
      %v431 = vsel %vm414, %v347, 0
      %v434 = vsel %vm414, %v349, 0
      %v437 = vsel %vm414, %v351, 0
      %439 = vmatprep.subr.bf16.mxu0 0
      %440 = vmatpush1.bf16.msra.mxu0 %v396
      %441 = vmatprep.subr.bf16.mxu0 0
      %442 = vmatpush1.bf16.msra.mxu0 %v397
      %443 = vmatprep.subr.bf16.mxu0 0
      %444 = vmatpush1.bf16.msra.mxu0 %v398
      %445 = vmatprep.subr.bf16.mxu0 0
      %446 = vmatpush1.bf16.msra.mxu0 %v399
      %447 = vmatprep.subr.bf16.mxu0 0
      %448 = vmatpush1.bf16.msra.mxu0 %v400
      %449 = vmatprep.subr.bf16.mxu0 0
      %450 = vmatpush1.bf16.msra.mxu0 %v401
      %451 = vmatprep.subr.bf16.mxu0 0
      %452 = vmatpush1.bf16.msra.mxu0 %v402
      %453 = vmatprep.subr.bf16.mxu0 0
      %454 = vmatpush1.bf16.msra.mxu0 %v403
      %455 = vmatprep.subr.bf16.mxu0 0
      %456 = vmatpush1.bf16.msra.mxu0 %v404
      %457 = vmatprep.subr.bf16.mxu0 0
      %458 = vmatpush1.bf16.msra.mxu0 0
      %459 = vmatprep.subr.bf16.mxu0 0
      %460 = vmatpush1.bf16.msra.mxu0 0
      %461 = vmatprep.subr.bf16.mxu0 0
      %462 = vmatpush1.bf16.msra.mxu0 0
      %463 = vmatprep.subr.bf16.mxu0 0
      %464 = vmatpush1.bf16.msra.mxu0 0
      %465 = vmatprep.subr.bf16.mxu0 0
      %466 = vmatpush1.bf16.msra.mxu0 0
      %467 = vmatprep.subr.bf16.mxu0 0
      %468 = vmatpush1.bf16.msra.mxu0 0
      %469 = vmatprep.subr.bf16.mxu0 0
      %470 = vmatpush1.bf16.msra.mxu0 0
      %471 = vmatprep.mubr.bf16.mxu0 %v416
      %472 = vmatmul.mubr.bf16.gmra.mrb[0].mxu0 %v336
      %v473 = vpop.f32.mrb[0].mxu0
      %v474 = vadd.f32 0.0, %v473
      %v475 = vpop.f32.mrb[0].mxu0
      %v476 = vpop.f32.mrb[0].mxu0
      %v477 = vadd.f32 0.0, %v476
      %v478 = vpop.f32.mrb[0].mxu0
      %479 = vmatprep.mubr.bf16.mxu0 %v419
      %480 = vmatmul.mubr.bf16.gmra.mrb[0].mxu0 %v338
      %v481 = vpop.f32.mrb[0].mxu0
      %v482 = vadd.f32 0.0, %v481
      %v483 = vpop.f32.mrb[0].mxu0
      %v484 = vpop.f32.mrb[0].mxu0
      %v485 = vadd.f32 0.0, %v484
      %v486 = vpop.f32.mrb[0].mxu0
      %487 = vmatprep.mubr.bf16.mxu0 %v422
      %488 = vmatmul.mubr.bf16.gmra.mrb[0].mxu0 %v340
      %v489 = vpop.f32.mrb[0].mxu0
      %v490 = vadd.f32 0.0, %v489
      %v491 = vpop.f32.mrb[0].mxu0
      %v492 = vpop.f32.mrb[0].mxu0
      %v493 = vadd.f32 0.0, %v492
      %v494 = vpop.f32.mrb[0].mxu0
      %495 = vmatprep.mubr.bf16.mxu0 %v425
      %496 = vmatmul.mubr.bf16.gmra.mrb[0].mxu0 %v342
      %v497 = vpop.f32.mrb[0].mxu0
      %v498 = vadd.f32 0.0, %v497
      %v499 = vpop.f32.mrb[0].mxu0
      %v500 = vpop.f32.mrb[0].mxu0
      %v501 = vadd.f32 0.0, %v500
      %v502 = vpop.f32.mrb[0].mxu0
      %503 = vmatprep.mubr.bf16.mxu0 %v428
      %504 = vmatmul.mubr.bf16.gmra.mrb[0].mxu0 %v344
      %v505 = vpop.f32.mrb[0].mxu0
      %v506 = vadd.f32 0.0, %v505
      %v507 = vpop.f32.mrb[0].mxu0
      %v508 = vpop.f32.mrb[0].mxu0
      %v509 = vadd.f32 0.0, %v508
      %v510 = vpop.f32.mrb[0].mxu0
      %511 = vmatprep.mubr.bf16.mxu0 %v431
      %512 = vmatmul.mubr.bf16.gmra.mrb[0].mxu0 %v346
      %v513 = vpop.f32.mrb[0].mxu0
      %v514 = vadd.f32 0.0, %v513
      %v515 = vpop.f32.mrb[0].mxu0
      %v516 = vpop.f32.mrb[0].mxu0
      %v517 = vadd.f32 0.0, %v516
      %v518 = vpop.f32.mrb[0].mxu0
      %519 = vmatprep.mubr.bf16.mxu0 %v434
      %520 = vmatmul.mubr.bf16.gmra.mrb[0].mxu0 %v348
      %v521 = vpop.f32.mrb[0].mxu0
      %v522 = vadd.f32 0.0, %v521
      %v523 = vpop.f32.mrb[0].mxu0
      %v524 = vpop.f32.mrb[0].mxu0
      %v525 = vadd.f32 0.0, %v524
      %v526 = vpop.f32.mrb[0].mxu0
      %527 = vmatprep.mubr.bf16.mxu0 %v437
      %528 = vmatmul.mubr.bf16.gmra.mrb[0].mxu0 %v350
      %v529 = vpop.f32.mrb[0].mxu0
      %v530 = vadd.f32 0.0, %v529
      %v531 = vpop.f32.mrb[0].mxu0
      %v532 = vpop.f32.mrb[0].mxu0
      %v533 = vadd.f32 0.0, %v532
      %v534 = vpop.f32.mrb[0].mxu0
      %535 = vdwg.mxu0
      %v536 = vld [vmem:[%s3] sm:$0x1]
      %v538 = vlaneseq
      %v539 = vshrl.u32 %v538, 7
      %v540 = vsub.s32 0, %v539
      %v541 = vrot.slane %v536, %v540
      %v543 = vmul.f32 %v474, %v541
      %v544 = vmul.f32 %v477, %v541
      %v545 = vmul.f32 %v482, %v541
      %v546 = vmul.f32 %v485, %v541
      %v547 = vmul.f32 %v490, %v541
      %v548 = vmul.f32 %v493, %v541
      %v549 = vmul.f32 %v498, %v541
      %v550 = vmul.f32 %v501, %v541
      %v551 = vmul.f32 %v506, %v541
      %v552 = vmul.f32 %v509, %v541
      %v553 = vmul.f32 %v514, %v541
      %v554 = vmul.f32 %v517, %v541
      %v555 = vmul.f32 %v522, %v541
      %v556 = vmul.f32 %v525, %v541
      %v557 = vmul.f32 %v530, %v541
      %v558 = vmul.f32 %v533, %v541
      %v559 = vld [vmem:[%s4] sm:$0x1]
      %v561 = vlaneseq
      %v562 = vshrl.u32 %v561, 7
      %v563 = vsub.s32 0, %v562
      %v564 = vrot.slane %v559, %v563
      %v566 = vadd.f32 %v543, %v564
      %v567 = vadd.f32 %v544, %v564
      %v568 = vadd.f32 %v545, %v564
      %v569 = vadd.f32 %v546, %v564
      %v570 = vadd.f32 %v547, %v564
      %v571 = vadd.f32 %v548, %v564
      %v572 = vadd.f32 %v549, %v564
      %v573 = vadd.f32 %v550, %v564
      %v574 = vadd.f32 %v551, %v564
      %v575 = vadd.f32 %v552, %v564
      %v576 = vadd.f32 %v553, %v564
      %v577 = vadd.f32 %v554, %v564
      %v578 = vadd.f32 %v555, %v564
      %v579 = vadd.f32 %v556, %v564
      %v580 = vadd.f32 %v557, %v564
      %v581 = vadd.f32 %v558, %v564
      %v582 = vld [vmem:[%s245] sm:$0xf]
      %v583 = vld [vmem:[%s245 + $0x4] sm:$0xf]
      %v584 = vld [vmem:[%s245 + $0x8] sm:$0xf]
      %v585 = vld [vmem:[%s245 + $0xc] sm:$0xf]
      %v586 = vld [vmem:[%s245 + $0x10] sm:$0xf]
      %v587 = vld [vmem:[%s245 + $0x14] sm:$0xf]
      %v588 = vld [vmem:[%s245 + $0x18] sm:$0xf]
      %v589 = vld [vmem:[%s245 + $0x1c] sm:$0xf]
      %v590 = vld [vmem:[%s245 + $0x20] sm:$0xf]
      %v591 = vld [vmem:[%s245 + $0x24] sm:$0xf]
      %v592 = vld [vmem:[%s245 + $0x28] sm:$0xf]
      %v593 = vld [vmem:[%s245 + $0x2c] sm:$0xf]
      %v594 = vld [vmem:[%s245 + $0x30] sm:$0xf]
      %v595 = vld [vmem:[%s245 + $0x34] sm:$0xf]
      %v596 = vld [vmem:[%s245 + $0x38] sm:$0xf]
      %v597 = vld [vmem:[%s245 + $0x3c] sm:$0xf]
      %v598 = vunpack.c.l.bf16 %v582
      %v599 = vunpack.c.l.bf16 %v583
      %v600 = vunpack.c.l.bf16 %v584
      %v601 = vunpack.c.l.bf16 %v585
      %v602 = vunpack.c.l.bf16 %v586
      %v603 = vunpack.c.l.bf16 %v587
      %v604 = vunpack.c.l.bf16 %v588
      %v605 = vunpack.c.l.bf16 %v589
      %v606 = vunpack.c.l.bf16 %v590
      %v607 = vunpack.c.l.bf16 %v591
      %v608 = vunpack.c.l.bf16 %v592
      %v609 = vunpack.c.l.bf16 %v593
      %v610 = vunpack.c.l.bf16 %v594
      %v611 = vunpack.c.l.bf16 %v595
      %v612 = vunpack.c.l.bf16 %v596
      %v613 = vunpack.c.l.bf16 %v597
      %v614 = vadd.f32 %v566, %v598
      %v615 = vadd.f32 %v567, %v599
      %v616 = vadd.f32 %v568, %v600
      %v617 = vadd.f32 %v569, %v601
      %v618 = vadd.f32 %v570, %v602
      %v619 = vadd.f32 %v571, %v603
      %v620 = vadd.f32 %v572, %v604
      %v621 = vadd.f32 %v573, %v605
      %v622 = vadd.f32 %v574, %v606
      %v623 = vadd.f32 %v575, %v607
      %v624 = vadd.f32 %v576, %v608
      %v625 = vadd.f32 %v577, %v609
      %v626 = vadd.f32 %v578, %v610
      %v627 = vadd.f32 %v579, %v611
      %v628 = vadd.f32 %v580, %v612
      %v629 = vadd.f32 %v581, %v613
      %v630 = vmax.f32 %v614, 0.0
      %v631 = vmax.f32 %v615, 0.0
      %v632 = vmax.f32 %v616, 0.0
      %v633 = vmax.f32 %v617, 0.0
      %v634 = vmax.f32 %v618, 0.0
      %v635 = vmax.f32 %v619, 0.0
      %v636 = vmax.f32 %v620, 0.0
      %v637 = vmax.f32 %v621, 0.0
      %v638 = vmax.f32 %v622, 0.0
      %v639 = vmax.f32 %v623, 0.0
      %v640 = vmax.f32 %v624, 0.0
      %v641 = vmax.f32 %v625, 0.0
      %v642 = vmax.f32 %v626, 0.0
      %v643 = vmax.f32 %v627, 0.0
      %v644 = vmax.f32 %v628, 0.0
      %v645 = vmax.f32 %v629, 0.0
      %v646 = vpack.c.bf16 %v631, %v630
      %v647 = vpack.c.bf16 %v633, %v632
      %v648 = vpack.c.bf16 %v635, %v634
      %v649 = vpack.c.bf16 %v637, %v636
      %v650 = vpack.c.bf16 %v639, %v638
      %v651 = vpack.c.bf16 %v641, %v640
      %v652 = vpack.c.bf16 %v643, %v642
      %v653 = vpack.c.bf16 %v645, %v644
      %v662 = vunpack.c.l.b16 %v646
      %v663 = vunpack.c.h.b16 %v646
      %v664 = vunpack.c.l.b16 %v647
      %v665 = vunpack.c.h.b16 %v647
      %v666 = vunpack.c.l.b16 %v648
      %v667 = vunpack.c.h.b16 %v648
      %v668 = vunpack.c.l.b16 %v649
      %v669 = vunpack.c.h.b16 %v649
      %v670 = vunpack.c.l.b16 %v650
      %v671 = vunpack.c.h.b16 %v650
      %v672 = vunpack.c.l.b16 %v651
      %v673 = vunpack.c.h.b16 %v651
      %v674 = vunpack.c.l.b16 %v652
      %v675 = vunpack.c.h.b16 %v652
      %v676 = vunpack.c.l.b16 %v653
      %v677 = vunpack.c.h.b16 %v653
      %v678 = vpack.c.b16 %v662, %v662
      %v679 = vpack.c.b16 %v663, %v663
      %v680 = vpack.c.b16 %v664, %v664
      %v681 = vpack.c.b16 %v665, %v665
      %v682 = vpack.c.b16 %v666, %v666
      %v683 = vpack.c.b16 %v667, %v667
      %v684 = vpack.c.b16 %v668, %v668
      %v685 = vpack.c.b16 %v669, %v669
      %v686 = vpack.c.b16 %v670, %v670
      %v687 = vpack.c.b16 %v671, %v671
      %v688 = vpack.c.b16 %v672, %v672
      %v689 = vpack.c.b16 %v673, %v673
      %v690 = vpack.c.b16 %v674, %v674
      %v691 = vpack.c.b16 %v675, %v675
      %v692 = vpack.c.b16 %v676, %v676
      %v693 = vpack.c.b16 %v677, %v677
      %710 = vst [vmem:[%s251] sm:$0xf] %v678
      %711 = vst [vmem:[%s251 + $0x4] sm:$0xf] %v679
      %712 = vst [vmem:[%s251 + $0x8] sm:$0xf] %v680
      %713 = vst [vmem:[%s251 + $0xc] sm:$0xf] %v681
      %714 = vst [vmem:[%s251 + $0x10] sm:$0xf] %v682
      %715 = vst [vmem:[%s251 + $0x14] sm:$0xf] %v683
      %716 = vst [vmem:[%s251 + $0x18] sm:$0xf] %v684
      %717 = vst [vmem:[%s251 + $0x1c] sm:$0xf] %v685
      %718 = vst [vmem:[%s251 + $0x20] sm:$0xf] %v686
      %719 = vst [vmem:[%s251 + $0x24] sm:$0xf] %v687
      %720 = vst [vmem:[%s251 + $0x28] sm:$0xf] %v688
      %721 = vst [vmem:[%s251 + $0x2c] sm:$0xf] %v689
      %722 = vst [vmem:[%s251 + $0x30] sm:$0xf] %v690
      %723 = vst [vmem:[%s251 + $0x34] sm:$0xf] %v691
      %724 = vst [vmem:[%s251 + $0x38] sm:$0xf] %v692
      %725 = vst [vmem:[%s251 + $0x3c] sm:$0xf] %v693
      %s726 = smul.u32 16, %s16
      %p727 = scmp.lt.s32.totalorder %s726, 31
      %s728 = scalar_select %p727, %s726, 31
      %s729 = smul.addr %s728, 4
      %s730 = scalar_lea.vmem %s5, %s729
      // Predicated region
      $region41: #{features_extractor_forward.9} parent=39 // pred_check
        %p731 = pneg %p149
      $region42: #{features_extractor_forward.9} parent=39 // pred_check_branch
        %733 = sbr.rel (%p731) target = $region44
      $region43: #{features_extractor_forward.9} parent=39 // pred_region
        %s734 = smul.u32 16, %s16
      $region44: #{features_extractor_forward.9} parent=39 // pred_fallthru
        _
    $region40: #{features_extractor_forward.9} parent=5 // pred_fallthru
      _
    %p735 = scmp.le.s32.totalorder 2, %s11
    // Predicated region
    $region45: #{features_extractor_forward.9} parent=5 // pred_check
      %p736 = pneg %p735
    $region46: #{features_extractor_forward.9} parent=5 // pred_check_branch
      %738 = sbr.rel (%p736) target = $region48
    $region47: #{features_extractor_forward.9} parent=5 // pred_region
      %s739 = ssub.s32 %s11, 2
      // Predicated region
      $region49: #{features_extractor_forward.9} parent=47 // pred_check
        %p740 = pneg %p155
      $region50: #{features_extractor_forward.9} parent=47 // pred_check_branch
        %742 = sbr.rel (%p740) target = $region52
      $region51: #{features_extractor_forward.9} parent=47 // pred_region
        %s743 = smul.u32 16, %s17
        %p744 = scmp.lt.s32.totalorder %s743, 31
        %s745 = scalar_select %p744, %s743, 31
        %s746 = smul.addr %s745, 4
        %s747 = scalar_lea.vmem %s5, %s746
      $region52: #{features_extractor_forward.9} parent=47 // pred_fallthru
        _
    $region48: #{features_extractor_forward.9} parent=5 // pred_fallthru
      _
  $region6: #{features_extractor_forward.9} parent=0 // loop_footer
    %s15 = sadd.s32 1, %s11
  $region7: #{features_extractor_forward.9} parent=0 // loop_footer_branch
    %10 = sbr.rel target = $region3
  $region8: #{features_extractor_forward.9} parent=0 // loop_exit
    _

// kernel: features_extractor_forward.10
$region0: #{features_extractor_forward.10}
  #allocation0 [shape = 'u32[]', space=smem, size = 0x4, offset = 0x4, fixed_abs, tag = 'smem constant byte address 0x4 - core index']
  #allocation1 [shape = 'u32[144,128]{1,0:T(1,128)}', space=vmem, size = 0x12000, scoped, tag = 'internal scratch']
  %s0 = inlined_call_operand.vmem [shape: bf16[48,144], index: 0, kind: input, shape index: {}]
  %s1 = inlined_call_operand.vmem [shape: bf16[144,128], index: 1, kind: input, shape index: {}]
  %s2 = inlined_call_operand.vmem [shape: f32[1,128], index: 2, kind: input, shape index: {}]
  %s3 = inlined_call_operand.vmem [shape: bf16[48,128], index: 3, kind: output, shape index: {}]
  %s4 = sld [smem:[#allocation0]]
  $region22: #{features_extractor_forward.10} parent=0
    _
  %s6 = ssub.s32 1, %s4
  %s7 = scalar_select 0, %s6, %s4
  // Predicated region
  $region2: #{features_extractor_forward.10} parent=0 // pred_check
    _
  $region3: #{features_extractor_forward.10} parent=0 // pred_check_branch
    %9 = sbr.rel (0) target = $region5
  $region4: #{features_extractor_forward.10} parent=0 // pred_region
    _
  $region5: #{features_extractor_forward.10} parent=0 // pred_fallthru
    _
  // Predicated region
  $region6: #{features_extractor_forward.10} parent=0 // pred_check
    _
  $region7: #{features_extractor_forward.10} parent=0 // pred_check_branch
    %11 = sbr.rel (0) target = $region9
  $region8: #{features_extractor_forward.10} parent=0 // pred_region
    _
  $region9: #{features_extractor_forward.10} parent=0 // pred_fallthru
    _
  // Predicated region
  $region10: #{features_extractor_forward.10} parent=0 // pred_check
    _
  $region11: #{features_extractor_forward.10} parent=0 // pred_check_branch
    %13 = sbr.rel (0) target = $region13
  $region12: #{features_extractor_forward.10} parent=0 // pred_region
    _
  $region13: #{features_extractor_forward.10} parent=0 // pred_fallthru
    _
  %v15 = vld [vmem:[%s0] sm:$0xff]
  %v16 = vld [vmem:[%s0 + $0x8] sm:$0xff]
  %v17 = vld [vmem:[%s0 + $0x10] sm:$0xff]
  %v18 = vld [vmem:[%s0 + $0x18] sm:$0xff]
  %v19 = vld [vmem:[%s0 + $0x20] sm:$0xff]
  %v20 = vld [vmem:[%s0 + $0x28] sm:$0xff]
  %v21 = vld [vmem:[%s1] sm:$0xf]
  %v22 = vld [vmem:[%s1 + $0x4] sm:$0xf]
  %v23 = vld [vmem:[%s1 + $0x8] sm:$0xf]
  %v24 = vld [vmem:[%s1 + $0xc] sm:$0xf]
  %v25 = vld [vmem:[%s1 + $0x10] sm:$0xf]
  %v26 = vld [vmem:[%s1 + $0x14] sm:$0xf]
  %v27 = vld [vmem:[%s1 + $0x18] sm:$0xf]
  %v28 = vld [vmem:[%s1 + $0x1c] sm:$0xf]
  %v29 = vld [vmem:[%s1 + $0x20] sm:$0xf]
  %v30 = vld [vmem:[%s1 + $0x24] sm:$0xf]
  %v31 = vld [vmem:[%s1 + $0x28] sm:$0xf]
  %v32 = vld [vmem:[%s1 + $0x2c] sm:$0xf]
  %v33 = vld [vmem:[%s1 + $0x30] sm:$0xf]
  %v34 = vld [vmem:[%s1 + $0x34] sm:$0xf]
  %v35 = vld [vmem:[%s1 + $0x38] sm:$0xf]
  %v36 = vld [vmem:[%s1 + $0x3c] sm:$0xf]
  %v37 = vld [vmem:[%s1 + $0x40] sm:$0xf]
  %v38 = vld [vmem:[%s1 + $0x44] sm:$0xf]
  %v39 = vld [vmem:[%s2] sm:$0x1]
  %v41 = vlaneseq
  %v42 = vshrl.u32 %v41, 7
  %v43 = vsub.s32 0, %v42
  %v44 = vrot.slane %v39, %v43
  %v52 = vunpack.c.l.b16 %v15
  %v53 = vunpack.c.h.b16 %v15
  %v54 = vunpack.c.l.b16 %v16
  %v55 = vunpack.c.h.b16 %v16
  %v56 = vunpack.c.l.b16 %v17
  %v57 = vunpack.c.h.b16 %v17
  %v58 = vunpack.c.l.b16 %v18
  %v59 = vunpack.c.h.b16 %v18
  %v60 = vunpack.c.l.b16 %v19
  %v61 = vunpack.c.h.b16 %v19
  %v62 = vunpack.c.l.b16 %v20
  %v63 = vunpack.c.h.b16 %v20
  %v64 = vpack.c.b16 %v54, %v52
  %v65 = vpack.c.b16 %v55, %v53
  %v66 = vpack.c.b16 %v58, %v56
  %v67 = vpack.c.b16 %v59, %v57
  %v68 = vpack.c.b16 %v62, %v60
  %v69 = vpack.c.b16 %v63, %v61
  %v91 = vunpack.c.l.b16 %v21
  %v92 = vunpack.c.l.b16 %v22
  %v93 = vunpack.c.l.b16 %v23
  %v94 = vunpack.c.l.b16 %v24
  %v95 = vunpack.c.l.b16 %v25
  %v96 = vunpack.c.l.b16 %v26
  %v97 = vunpack.c.l.b16 %v27
  %v98 = vunpack.c.l.b16 %v28
  %v99 = vunpack.c.l.b16 %v29
  %v100 = vunpack.c.l.b16 %v30
  %v101 = vunpack.c.l.b16 %v31
  %v102 = vunpack.c.l.b16 %v32
  %v103 = vunpack.c.l.b16 %v33
  %v104 = vunpack.c.l.b16 %v34
  %v105 = vunpack.c.l.b16 %v35
  %v106 = vunpack.c.l.b16 %v36
  %v107 = vunpack.c.l.b16 %v37
  %v108 = vunpack.c.l.b16 %v38
  %v109 = vpack.c.b16 %v92, %v91
  %v110 = vpack.c.b16 %v94, %v93
  %v111 = vpack.c.b16 %v96, %v95
  %v112 = vpack.c.b16 %v98, %v97
  %v113 = vpack.c.b16 %v100, %v99
  %v114 = vpack.c.b16 %v102, %v101
  %v115 = vpack.c.b16 %v104, %v103
  %v116 = vpack.c.b16 %v106, %v105
  %v117 = vpack.c.b16 %v108, %v107
  %vm127 = vcmask 130048
  %v129 = vsel %vm127, %v65, 0
  %v132 = vsel %vm127, %v67, 0
  %v135 = vsel %vm127, %v69, 0
  %137 = vmatprep.subr.bf16.mxu0 0
  %138 = vmatpush1.bf16.msra.mxu0 %v109
  %139 = vmatprep.subr.bf16.mxu0 0
  %140 = vmatpush1.bf16.msra.mxu0 %v110
  %141 = vmatprep.subr.bf16.mxu0 0
  %142 = vmatpush1.bf16.msra.mxu0 %v111
  %143 = vmatprep.subr.bf16.mxu0 0
  %144 = vmatpush1.bf16.msra.mxu0 %v112
  %145 = vmatprep.subr.bf16.mxu0 0
  %146 = vmatpush1.bf16.msra.mxu0 %v113
  %147 = vmatprep.subr.bf16.mxu0 0
  %148 = vmatpush1.bf16.msra.mxu0 %v114
  %149 = vmatprep.subr.bf16.mxu0 0
  %150 = vmatpush1.bf16.msra.mxu0 %v115
  %151 = vmatprep.subr.bf16.mxu0 0
  %152 = vmatpush1.bf16.msra.mxu0 %v116
  %153 = vmatprep.subr.bf16.mxu0 0
  %154 = vmatpush1.bf16.msra.mxu0 %v117
  %155 = vmatprep.subr.bf16.mxu0 0
  %156 = vmatpush1.bf16.msra.mxu0 0
  %157 = vmatprep.subr.bf16.mxu0 0
  %158 = vmatpush1.bf16.msra.mxu0 0
  %159 = vmatprep.subr.bf16.mxu0 0
  %160 = vmatpush1.bf16.msra.mxu0 0
  %161 = vmatprep.subr.bf16.mxu0 0
  %162 = vmatpush1.bf16.msra.mxu0 0
  %163 = vmatprep.subr.bf16.mxu0 0
  %164 = vmatpush1.bf16.msra.mxu0 0
  %165 = vmatprep.subr.bf16.mxu0 0
  %166 = vmatpush1.bf16.msra.mxu0 0
  %167 = vmatprep.subr.bf16.mxu0 0
  %168 = vmatpush1.bf16.msra.mxu0 0
  %169 = vmatprep.mubr.bf16.mxu0 %v129
  %170 = vmatmul.mubr.bf16.gmra.mrb[0].mxu0 %v64
  %v171 = vpop.f32.mrb[0].mxu0
  %v172 = vadd.f32 %v44, %v171
  %v173 = vpop.f32.mrb[0].mxu0
  %v174 = vpop.f32.mrb[0].mxu0
  %v175 = vadd.f32 %v44, %v174
  %v176 = vpop.f32.mrb[0].mxu0
  %177 = vmatprep.mubr.bf16.mxu0 %v132
  %178 = vmatmul.mubr.bf16.gmra.mrb[0].mxu0 %v66
  %v179 = vpop.f32.mrb[0].mxu0
  %v180 = vadd.f32 %v44, %v179
  %v181 = vpop.f32.mrb[0].mxu0
  %v182 = vpop.f32.mrb[0].mxu0
  %v183 = vadd.f32 %v44, %v182
  %v184 = vpop.f32.mrb[0].mxu0
  %185 = vmatprep.mubr.bf16.mxu0 %v135
  %186 = vmatmul.mubr.bf16.gmra.mrb[0].mxu0 %v68
  %v187 = vpop.f32.mrb[0].mxu0
  %v188 = vadd.f32 %v44, %v187
  %v189 = vpop.f32.mrb[0].mxu0
  %v190 = vpop.f32.mrb[0].mxu0
  %v191 = vadd.f32 %v44, %v190
  %v192 = vpop.f32.mrb[0].mxu0
  %193 = vdwg.mxu0
  %v194 = vpack.c.bf16 %v175, %v172
  %v195 = vpack.c.bf16 %v183, %v180
  %v196 = vpack.c.bf16 %v191, %v188
  %v200 = vunpack.c.l.b16 %v194
  %v201 = vunpack.c.h.b16 %v194
  %v202 = vunpack.c.l.b16 %v195
  %v203 = vunpack.c.h.b16 %v195
  %v204 = vunpack.c.l.b16 %v196
  %v205 = vunpack.c.h.b16 %v196
  %v206 = vpack.c.b16 %v200, %v200
  %v207 = vpack.c.b16 %v201, %v201
  %v208 = vpack.c.b16 %v202, %v202
  %v209 = vpack.c.b16 %v203, %v203
  %v210 = vpack.c.b16 %v204, %v204
  %v211 = vpack.c.b16 %v205, %v205
  %218 = vst [vmem:[%s3] sm:$0xf] %v206
  %219 = vst [vmem:[%s3 + $0x4] sm:$0xf] %v207
  %220 = vst [vmem:[%s3 + $0x8] sm:$0xf] %v208
  %221 = vst [vmem:[%s3 + $0xc] sm:$0xf] %v209
  %222 = vst [vmem:[%s3 + $0x10] sm:$0xf] %v210
  %223 = vst [vmem:[%s3 + $0x14] sm:$0xf] %v211
  // Predicated region
  $region14: #{features_extractor_forward.10} parent=0 // pred_check
    _
  $region15: #{features_extractor_forward.10} parent=0 // pred_check_branch
    %225 = sbr.rel (0) target = $region17
  $region16: #{features_extractor_forward.10} parent=0 // pred_region
    _
  $region17: #{features_extractor_forward.10} parent=0 // pred_fallthru
    _
  // Predicated region
  $region18: #{features_extractor_forward.10} parent=0 // pred_check
    _
  $region19: #{features_extractor_forward.10} parent=0 // pred_check_branch
    %227 = sbr.rel (0) target = $region21
  $region20: #{features_extractor_forward.10} parent=0 // pred_region
    _
  $region21: #{features_extractor_forward.10} parent=0 // pred_fallthru
    _

// kernel: features_extractor_forward.11
$region0: #{features_extractor_forward.11}
  #allocation0 [shape = 'u32[]', space=smem, size = 0x4, offset = 0x4, fixed_abs, tag = 'smem constant byte address 0x4 - core index']
  #allocation1 [shape = 'u32[144,128]{1,0:T(1,128)}', space=vmem, size = 0x12000, scoped, tag = 'internal scratch']
  %s0 = inlined_call_operand.vmem [shape: bf16[16,144], index: 0, kind: input, shape index: {}]
  %s1 = inlined_call_operand.vmem [shape: bf16[144,128], index: 1, kind: input, shape index: {}]
  %s2 = inlined_call_operand.vmem [shape: f32[1,128], index: 2, kind: input, shape index: {}]
  %s3 = inlined_call_operand.vmem [shape: f32[16,128], index: 3, kind: output, shape index: {}]
  %s4 = sld [smem:[#allocation0]]
  $region22: #{features_extractor_forward.11} parent=0
    _
  %s6 = ssub.s32 1, %s4
  %s7 = scalar_select 0, %s6, %s4
  // Predicated region
  $region2: #{features_extractor_forward.11} parent=0 // pred_check
    _
  $region3: #{features_extractor_forward.11} parent=0 // pred_check_branch
    %9 = sbr.rel (0) target = $region5
  $region4: #{features_extractor_forward.11} parent=0 // pred_region
    _
  $region5: #{features_extractor_forward.11} parent=0 // pred_fallthru
    _
  // Predicated region
  $region6: #{features_extractor_forward.11} parent=0 // pred_check
    _
  $region7: #{features_extractor_forward.11} parent=0 // pred_check_branch
    %11 = sbr.rel (0) target = $region9
  $region8: #{features_extractor_forward.11} parent=0 // pred_region
    _
  $region9: #{features_extractor_forward.11} parent=0 // pred_fallthru
    _
  // Predicated region
  $region10: #{features_extractor_forward.11} parent=0 // pred_check
    _
  $region11: #{features_extractor_forward.11} parent=0 // pred_check_branch
    %13 = sbr.rel (0) target = $region13
  $region12: #{features_extractor_forward.11} parent=0 // pred_region
    _
  $region13: #{features_extractor_forward.11} parent=0 // pred_fallthru
    _
  %v15 = vld [vmem:[%s0] sm:$0xff]
  %v16 = vld [vmem:[%s0 + $0x8] sm:$0xff]
  %v17 = vld [vmem:[%s1] sm:$0xf]
  %v18 = vld [vmem:[%s1 + $0x4] sm:$0xf]
  %v19 = vld [vmem:[%s1 + $0x8] sm:$0xf]
  %v20 = vld [vmem:[%s1 + $0xc] sm:$0xf]
  %v21 = vld [vmem:[%s1 + $0x10] sm:$0xf]
  %v22 = vld [vmem:[%s1 + $0x14] sm:$0xf]
  %v23 = vld [vmem:[%s1 + $0x18] sm:$0xf]
  %v24 = vld [vmem:[%s1 + $0x1c] sm:$0xf]
  %v25 = vld [vmem:[%s1 + $0x20] sm:$0xf]
  %v26 = vld [vmem:[%s1 + $0x24] sm:$0xf]
  %v27 = vld [vmem:[%s1 + $0x28] sm:$0xf]
  %v28 = vld [vmem:[%s1 + $0x2c] sm:$0xf]
  %v29 = vld [vmem:[%s1 + $0x30] sm:$0xf]
  %v30 = vld [vmem:[%s1 + $0x34] sm:$0xf]
  %v31 = vld [vmem:[%s1 + $0x38] sm:$0xf]
  %v32 = vld [vmem:[%s1 + $0x3c] sm:$0xf]
  %v33 = vld [vmem:[%s1 + $0x40] sm:$0xf]
  %v34 = vld [vmem:[%s1 + $0x44] sm:$0xf]
  %v35 = vld [vmem:[%s2] sm:$0x1]
  %v37 = vlaneseq
  %v38 = vshrl.u32 %v37, 7
  %v39 = vsub.s32 0, %v38
  %v40 = vrot.slane %v35, %v39
  %v44 = vunpack.c.l.b16 %v15
  %v45 = vunpack.c.h.b16 %v15
  %v46 = vunpack.c.l.b16 %v16
  %v47 = vunpack.c.h.b16 %v16
  %v48 = vpack.c.b16 %v46, %v44
  %v49 = vpack.c.b16 %v47, %v45
  %v69 = vunpack.c.l.b16 %v17
  %v70 = vunpack.c.l.b16 %v18
  %v71 = vunpack.c.l.b16 %v19
  %v72 = vunpack.c.l.b16 %v20
  %v73 = vunpack.c.l.b16 %v21
  %v74 = vunpack.c.l.b16 %v22
  %v75 = vunpack.c.l.b16 %v23
  %v76 = vunpack.c.l.b16 %v24
  %v77 = vunpack.c.l.b16 %v25
  %v78 = vunpack.c.l.b16 %v26
  %v79 = vunpack.c.l.b16 %v27
  %v80 = vunpack.c.l.b16 %v28
  %v81 = vunpack.c.l.b16 %v29
  %v82 = vunpack.c.l.b16 %v30
  %v83 = vunpack.c.l.b16 %v31
  %v84 = vunpack.c.l.b16 %v32
  %v85 = vunpack.c.l.b16 %v33
  %v86 = vunpack.c.l.b16 %v34
  %v87 = vpack.c.b16 %v70, %v69
  %v88 = vpack.c.b16 %v72, %v71
  %v89 = vpack.c.b16 %v74, %v73
  %v90 = vpack.c.b16 %v76, %v75
  %v91 = vpack.c.b16 %v78, %v77
  %v92 = vpack.c.b16 %v80, %v79
  %v93 = vpack.c.b16 %v82, %v81
  %v94 = vpack.c.b16 %v84, %v83
  %v95 = vpack.c.b16 %v86, %v85
  %vm105 = vcmask 130048
  %v107 = vsel %vm105, %v49, 0
  %109 = vmatprep.subr.bf16.mxu0 0
  %110 = vmatpush1.bf16.msra.mxu0 %v87
  %111 = vmatprep.subr.bf16.mxu0 0
  %112 = vmatpush1.bf16.msra.mxu0 %v88
  %113 = vmatprep.subr.bf16.mxu0 0
  %114 = vmatpush1.bf16.msra.mxu0 %v89
  %115 = vmatprep.subr.bf16.mxu0 0
  %116 = vmatpush1.bf16.msra.mxu0 %v90
  %117 = vmatprep.subr.bf16.mxu0 0
  %118 = vmatpush1.bf16.msra.mxu0 %v91
  %119 = vmatprep.subr.bf16.mxu0 0
  %120 = vmatpush1.bf16.msra.mxu0 %v92
  %121 = vmatprep.subr.bf16.mxu0 0
  %122 = vmatpush1.bf16.msra.mxu0 %v93
  %123 = vmatprep.subr.bf16.mxu0 0
  %124 = vmatpush1.bf16.msra.mxu0 %v94
  %125 = vmatprep.subr.bf16.mxu0 0
  %126 = vmatpush1.bf16.msra.mxu0 %v95
  %127 = vmatprep.subr.bf16.mxu0 0
  %128 = vmatpush1.bf16.msra.mxu0 0
  %129 = vmatprep.subr.bf16.mxu0 0
  %130 = vmatpush1.bf16.msra.mxu0 0
  %131 = vmatprep.subr.bf16.mxu0 0
  %132 = vmatpush1.bf16.msra.mxu0 0
  %133 = vmatprep.subr.bf16.mxu0 0
  %134 = vmatpush1.bf16.msra.mxu0 0
  %135 = vmatprep.subr.bf16.mxu0 0
  %136 = vmatpush1.bf16.msra.mxu0 0
  %137 = vmatprep.subr.bf16.mxu0 0
  %138 = vmatpush1.bf16.msra.mxu0 0
  %139 = vmatprep.subr.bf16.mxu0 0
  %140 = vmatpush1.bf16.msra.mxu0 0
  %141 = vmatprep.mubr.bf16.mxu0 %v107
  %142 = vmatmul.mubr.bf16.gmra.mrb[0].mxu0 %v48
  %v143 = vpop.f32.mrb[0].mxu0
  %v144 = vadd.f32 %v40, %v143
  %v145 = vpop.f32.mrb[0].mxu0
  %v146 = vpop.f32.mrb[0].mxu0
  %v147 = vadd.f32 %v40, %v146
  %v148 = vpop.f32.mrb[0].mxu0
  %149 = vdwg.mxu0
  %150 = vst [vmem:[%s3] sm:$0xff] %v144
  %151 = vst [vmem:[%s3 + $0x8] sm:$0xff] %v147
  // Predicated region
  $region14: #{features_extractor_forward.11} parent=0 // pred_check
    _
  $region15: #{features_extractor_forward.11} parent=0 // pred_check_branch
    %153 = sbr.rel (0) target = $region17
  $region16: #{features_extractor_forward.11} parent=0 // pred_region
    _
  $region17: #{features_extractor_forward.11} parent=0 // pred_fallthru
    _
  // Predicated region
  $region18: #{features_extractor_forward.11} parent=0 // pred_check
    _
  $region19: #{features_extractor_forward.11} parent=0 // pred_check_branch
    %155 = sbr.rel (0) target = $region21
  $region20: #{features_extractor_forward.11} parent=0 // pred_region
    _
  $region21: #{features_extractor_forward.11} parent=0 // pred_fallthru
    _

</llo_original>
